<compile_context>
chip_gen: v7x
topology: tpu7x:2x2x1
jax: 0.10.0
libtpu: 0.0.40
codegen_flags: <defaults>
</compile_context>

<pallas_src>
import functools

import numpy as np
import jax
import jax.numpy as jnp
from jax.experimental import pallas as pl
from jax.experimental.pallas import tpu as pltpu


# ------------------------------ static layout -------------------------------

H = 32            # real hidden width used for the small test shapes
HP = 128          # lane-padded per-gate width (whole-vreg gate slabs)
IP = 8            # sublane-padded input width
BP = 8            # sublane-padded batch rows
OP = 128          # lane-padded fc output width

# weight-blob row offsets (all multiples of 8 sublanes)
WI0_R = 0                    # [IP,   3*HP] layer-0 input weights  (gates r,z,n)
WH0_R = WI0_R + IP           # [HP,   3*HP] layer-0 hidden weights (gates r,z,n)
W1_R = WH0_R + HP            # [2*HP, 4*HP] fused layer-1 weights, rows [h1; h2]
FC_R = W1_R + 2 * HP         # [HP,   OP  ] fc head
W_ROWS = FC_R + HP           # 520
W_COLS = 4 * HP              # 512

# bias-blob lane offsets (all multiples of 128 lanes)
B0_C = 0                     # width 3*HP : bi0 + [bh0_r, bh0_z, 0]
BH0N_C = 3 * HP              # width HP   : bh0_n (stays inside tanh with r)
BG1_C = 4 * HP               # width 4*HP : [bi1_r+bh1_r, bi1_z+bh1_z, bi1_n, bh1_n]
FCB_C = 8 * HP               # width OP   : fc bias
B_COLS = FCB_C + OP          # 1152


# ------------------------------- Pallas kernel ------------------------------

def gru_backbone_kernel(x_ref,      # [T*BP, IP]   time-major, batch/input padded
                        w_ref,      # [520, 512]   packed weight blob
                        b_ref,      # [1, 1152]    packed bias blob
                        out_ref,    # [BP, OP]     lane-dense fc output
                        gi0_scr,    # VMEM scratch [T*BP, 3*HP]
                        *, T):
    f32 = jnp.float32

    # Hoisted layer-0 input projection for ALL timesteps (no h dependence),
    # written to VMEM scratch; the loop reads sublane-aligned 8-row slices.
    gi0_scr[...] = (
        jnp.dot(x_ref[...], w_ref[WI0_R:WI0_R + IP, 0:3 * HP],
                preferred_element_type=f32)
        + b_ref[0:1, B0_C:B0_C + 3 * HP])

    # Small bias broadcasts hoisted out of the recurrence.
    bh0n = jnp.broadcast_to(b_ref[0:1, BH0N_C:BH0N_C + HP], (BP, HP))
    bg1 = jnp.broadcast_to(b_ref[0:1, BG1_C:BG1_C + 4 * HP], (BP, 4 * HP))

    # h0 = 0 (nn.GRU default); padded lanes provably stay exactly zero.
    h1 = jnp.zeros((BP, HP), f32)
    h2 = jnp.zeros((BP, HP), f32)

    for t in range(T):                                   # static, fully unrolled
        gi0 = gi0_scr[t * BP:(t + 1) * BP, :]            # aligned [BP, 3*HP]

        # Layer 0 — the only truly serial matmul (weights re-read from VMEM
        # each step to keep vreg pressure low; vld slots hide the loads).
        gh0 = jnp.dot(h1, w_ref[WH0_R:WH0_R + HP, 0:3 * HP],
                      preferred_element_type=f32)
        rz0 = jax.nn.sigmoid(gi0[:, 0:2 * HP] + gh0[:, 0:2 * HP])
        r0 = rz0[:, 0:HP]
        z0 = rz0[:, HP:2 * HP]
        n0 = jnp.tanh(gi0[:, 2 * HP:3 * HP]
                      + r0 * (gh0[:, 2 * HP:3 * HP] + bh0n))
        h1 = (1.0 - z0) * n0 + z0 * h1

        # Layer 1 — single fused matmul over K-concat [h1 | h2] producing the
        # 4 slabs [i_r+h_r | i_z+h_z | i_n | h_n] (exact GRU candidate math).
        g1 = jnp.dot(jnp.concatenate([h1, h2], axis=-1),
                     w_ref[W1_R:W1_R + 2 * HP, 0:4 * HP],
                     preferred_element_type=f32) + bg1
        rz1 = jax.nn.sigmoid(g1[:, 0:2 * HP])
        r1 = rz1[:, 0:HP]
        z1 = rz1[:, HP:2 * HP]
        n1 = jnp.tanh(g1[:, 2 * HP:3 * HP] + r1 * g1[:, 3 * HP:4 * HP])
        h2 = (1.0 - z1) * n1 + z1 * h2

    # fc head on the last-timestep top-layer state; lane-dense store.
    out_ref[...] = (
        jnp.dot(h2, w_ref[FC_R:FC_R + HP, 0:OP], preferred_element_type=f32)
        + jnp.broadcast_to(b_ref[0:1, FCB_C:FCB_C + OP], (BP, OP)))


@functools.partial(jax.jit, static_argnames=("output_dim",))
def gru_backbone(x, packed, output_dim):
    """x: [B, T, I] batch-first (PyTorch convention). Returns [B, output_dim]."""
    B, T, I = x.shape
    assert B <= BP and I <= IP and output_dim <= OP

    # time-major, batch padded to 8 rows, input padded to 8 lanes (zeros).
    x_tm = jnp.transpose(x, (1, 0, 2))                               # [T, B, I]
    x_pad = jnp.zeros((T, BP, IP), jnp.float32).at[:, :B, :I].set(x_tm)
    x_flat = x_pad.reshape(T * BP, IP)

    out_pad = pl.pallas_call(
        functools.partial(gru_backbone_kernel, T=T),
        out_shape=jax.ShapeDtypeStruct((BP, OP), jnp.float32),
        in_specs=[pl.BlockSpec(memory_space=pltpu.MemorySpace.VMEM)] * 3,
        out_specs=pl.BlockSpec(memory_space=pltpu.MemorySpace.VMEM),
        scratch_shapes=[pltpu.VMEM((T * BP, 3 * HP), jnp.float32)],
    )(x_flat, packed["w"], packed["b"])

    return out_pad[:B, :output_dim]


# ----------------------- parameter setup (deterministic) --------------------

def init_params(key, input_dim, hidden_dim, output_dim):
    """PyTorch-style raw params: uniform(-1/sqrt(H), 1/sqrt(H))."""
    Hn, In, On = hidden_dim, input_dim, output_dim
    k = 1.0 / np.sqrt(Hn)
    keys = jax.random.split(key, 10)
    u = lambda kk, shape: jax.random.uniform(kk, shape, jnp.float32, -k, k)
    return {
        "W_ih_l0": u(keys[0], (3 * Hn, In)),
        "W_hh_l0": u(keys[1], (3 * Hn, Hn)),
        "b_ih_l0": u(keys[2], (3 * Hn,)),
        "b_hh_l0": u(keys[3], (3 * Hn,)),
        "W_ih_l1": u(keys[4], (3 * Hn, Hn)),
        "W_hh_l1": u(keys[5], (3 * Hn, Hn)),
        "b_ih_l1": u(keys[6], (3 * Hn,)),
        "b_hh_l1": u(keys[7], (3 * Hn,)),
        "fc_w":    u(keys[8], (On, Hn)),
        "fc_b":    u(keys[9], (On,)),
    }


def pack_params(raw):
    """Repack raw PyTorch-layout params into the two fused/aligned blobs."""
    Hn = raw["W_hh_l0"].shape[1]
    In = raw["W_ih_l0"].shape[1]
    On = raw["fc_w"].shape[0]
    assert Hn <= HP and In <= IP and On <= OP

    Wih0, Whh0 = np.asarray(raw["W_ih_l0"]), np.asarray(raw["W_hh_l0"])
    bih0, bhh0 = np.asarray(raw["b_ih_l0"]), np.asarray(raw["b_hh_l0"])
    Wih1, Whh1 = np.asarray(raw["W_ih_l1"]), np.asarray(raw["W_hh_l1"])
    bih1, bhh1 = np.asarray(raw["b_ih_l1"]), np.asarray(raw["b_hh_l1"])
    fcw, fcb = np.asarray(raw["fc_w"]), np.asarray(raw["fc_b"])

    def gate(w, g):                      # [3H, in] -> transposed block [in, H]
        return w[g * Hn:(g + 1) * Hn, :].T

    wblob = np.zeros((W_ROWS, W_COLS), np.float32)
    for g in range(3):                   # layer-0 input / hidden weights
        wblob[WI0_R:WI0_R + In, g * HP:g * HP + Hn] = gate(Wih0, g)
        wblob[WH0_R:WH0_R + Hn, g * HP:g * HP + Hn] = gate(Whh0, g)
    # fused layer-1: rows [h1 | h2], cols [r_sum | z_sum | n_input | n_hidden]
    for g in range(2):                   # r, z: input+hidden summed by the MXU
        wblob[W1_R:W1_R + Hn, g * HP:g * HP + Hn] = gate(Wih1, g)
        wblob[W1_R + HP:W1_R + HP + Hn, g * HP:g * HP + Hn] = gate(Whh1, g)
    wblob[W1_R:W1_R + Hn, 2 * HP:2 * HP + Hn] = gate(Wih1, 2)            # i_n
    wblob[W1_R + HP:W1_R + HP + Hn, 3 * HP:3 * HP + Hn] = gate(Whh1, 2)  # h_n
    wblob[FC_R:FC_R + Hn, 0:On] = fcw.T

    bblob = np.zeros((1, B_COLS), np.float32)
    # layer-0: fold bh_r, bh_z into the hoisted input-projection bias.
    bblob[0, B0_C + 0 * HP:B0_C + 0 * HP + Hn] = bih0[0:Hn] + bhh0[0:Hn]
    bblob[0, B0_C + 1 * HP:B0_C + 1 * HP + Hn] = bih0[Hn:2 * Hn] + bhh0[Hn:2 * Hn]
    bblob[0, B0_C + 2 * HP:B0_C + 2 * HP + Hn] = bih0[2 * Hn:3 * Hn]
    bblob[0, BH0N_C:BH0N_C + Hn] = bhh0[2 * Hn:3 * Hn]
    # layer-1 fused 4-slab bias.
    bblob[0, BG1_C + 0 * HP:BG1_C + 0 * HP + Hn] = bih1[0:Hn] + bhh1[0:Hn]
    bblob[0, BG1_C + 1 * HP:BG1_C + 1 * HP + Hn] = bih1[Hn:2 * Hn] + bhh1[Hn:2 * Hn]
    bblob[0, BG1_C + 2 * HP:BG1_C + 2 * HP + Hn] = bih1[2 * Hn:3 * Hn]
    bblob[0, BG1_C + 3 * HP:BG1_C + 3 * HP + Hn] = bhh1[2 * Hn:3 * Hn]
    bblob[0, FCB_C:FCB_C + On] = fcb

    return {"w": jnp.asarray(wblob), "b": jnp.asarray(bblob)}


# ----------------------------- pure-JAX reference ----------------------------

def reference_forward(x, raw):
    B, T, _ = x.shape
    Hn = raw["W_hh_l0"].shape[1]
    hp = jax.lax.Precision.HIGHEST

    def cell(x_t, h, Wih, Whh, bih, bhh):
        gi = jnp.dot(x_t, Wih.T, precision=hp) + bih
        gh = jnp.dot(h, Whh.T, precision=hp) + bhh
        i_r, i_z, i_n = jnp.split(gi, 3, axis=-1)
        h_r, h_z, h_n = jnp.split(gh, 3, axis=-1)
        r = jax.nn.sigmoid(i_r + h_r)
        z = jax.nn.sigmoid(i_z + h_z)
        n = jnp.tanh(i_n + r * h_n)
        return (1.0 - z) * n + z * h

    h1 = jnp.zeros((B, Hn), jnp.float32)
    h2 = jnp.zeros((B, Hn), jnp.float32)
    for t in range(T):
        h1 = cell(x[:, t, :], h1, raw["W_ih_l0"], raw["W_hh_l0"],
                  raw["b_ih_l0"], raw["b_hh_l0"])
        h2 = cell(h1, h2, raw["W_ih_l1"], raw["W_hh_l1"],
                  raw["b_ih_l1"], raw["b_hh_l1"])
    return jnp.dot(h2, raw["fc_w"].T, precision=hp) + raw["fc_b"]


# ------------------------------------ main -----------------------------------

if __name__ == "__main__":
    B, T, I, O = 4, 8, 4, 64      # small shapes consistent with the module

    key = jax.random.PRNGKey(0)
    kx, kp = jax.random.split(key)
    x = jax.random.normal(kx, (B, T, I), jnp.float32)
    raw = init_params(kp, input_dim=I, hidden_dim=H, output_dim=O)
    packed = pack_params(raw)

    out = jax.block_until_ready(gru_backbone(x, packed, output_dim=O))
    ref = jax.block_until_ready(reference_forward(x, raw))

    assert out.shape == (B, O)
    np.testing.assert_allclose(np.asarray(out), np.asarray(ref),
                               rtol=1e-5, atol=1e-5)
    print("KERNEL_OK")
</pallas_src>

<mosaic_0001>
module attributes {stable_mosaic.version = 11 : i64} {
  func.func @gru_backbone_kernel(%arg0: memref<64x8xf32, #tpu.memory_space<vmem>>, %arg1: memref<520x512xf32, #tpu.memory_space<vmem>>, %arg2: memref<1x1152xf32, #tpu.memory_space<vmem>>, %arg3: memref<8x128xf32, #tpu.memory_space<vmem>>, %arg4: memref<64x384xf32, #tpu.memory_space<vmem>>) attributes {dimension_semantics = [], scalar_prefetch = 0 : i64, scratch_operands = 1 : i64, tpu.core_type = #tpu.core_type<tc>} {
    %c0 = arith.constant 0 : index
    %c0_0 = arith.constant 0 : index
    %0 = vector.load %arg0[%c0, %c0_0] : memref<64x8xf32, #tpu.memory_space<vmem>>, vector<64x8xf32>
    %c0_1 = arith.constant 0 : index
    %c0_2 = arith.constant 0 : index
    %1 = vector.load %arg1[%c0_1, %c0_2] : memref<520x512xf32, #tpu.memory_space<vmem>>, vector<8x384xf32>
    %cst = arith.constant dense<0.000000e+00> : vector<64x384xf32>
    %2 = tpu.matmul %0, %1, %cst {dimension_numbers = #tpu.dot_dimension_numbers<[1], [0], [0], [1], [0, 0, 1, 1], [], []>} : vector<64x8xf32>, vector<8x384xf32>, vector<64x384xf32> -> vector<64x384xf32>
    %c0_3 = arith.constant 0 : index
    %c0_4 = arith.constant 0 : index
    %3 = vector.load %arg2[%c0_3, %c0_4] : memref<1x1152xf32, #tpu.memory_space<vmem>>, vector<1x384xf32>
    %4 = vector.broadcast %3 : vector<1x384xf32> to vector<64x384xf32>
    %5 = arith.addf %2, %4 : vector<64x384xf32>
    %c0_5 = arith.constant 0 : index
    %c0_6 = arith.constant 0 : index
    %6 = vector.load %arg4[%c0_5, %c0_6] : memref<64x384xf32, #tpu.memory_space<vmem>>, vector<64x384xf32>
    tpu.vector_store %arg4[%c0_5, %c0_6], %5 {strides = array<i32>} : memref<64x384xf32, #tpu.memory_space<vmem>>, vector<64x384xf32>,
    %c0_7 = arith.constant 0 : index
    %c384 = arith.constant 384 : index
    %7 = vector.load %arg2[%c0_7, %c384] : memref<1x1152xf32, #tpu.memory_space<vmem>>, vector<1x128xf32>
    %8 = vector.shape_cast %7 : vector<1x128xf32> to vector<1x128xf32>
    %9 = vector.broadcast %8 : vector<1x128xf32> to vector<8x128xf32>
    %c0_8 = arith.constant 0 : index
    %c512 = arith.constant 512 : index
    %10 = vector.load %arg2[%c0_8, %c512] : memref<1x1152xf32, #tpu.memory_space<vmem>>, vector<1x512xf32>
    %11 = vector.shape_cast %10 : vector<1x512xf32> to vector<1x512xf32>
    %12 = vector.broadcast %11 : vector<1x512xf32> to vector<8x512xf32>
    %cst_9 = arith.constant 0.000000e+00 : f32
    %13 = vector.broadcast %cst_9 : f32 to vector<8x128xf32>
    %cst_10 = arith.constant 0.000000e+00 : f32
    %14 = vector.broadcast %cst_10 : f32 to vector<8x128xf32>
    %c0_11 = arith.constant 0 : index
    %c0_12 = arith.constant 0 : index
    %15 = vector.load %arg4[%c0_11, %c0_12] : memref<64x384xf32, #tpu.memory_space<vmem>>, vector<8x384xf32>
    %c8 = arith.constant 8 : index
    %c0_13 = arith.constant 0 : index
    %16 = vector.load %arg1[%c8, %c0_13] : memref<520x512xf32, #tpu.memory_space<vmem>>, vector<128x384xf32>
    %cst_14 = arith.constant dense<0.000000e+00> : vector<8x384xf32>
    %17 = tpu.matmul %13, %16, %cst_14 {dimension_numbers = #tpu.dot_dimension_numbers<[1], [0], [0], [1], [0, 0, 1, 1], [], []>} : vector<8x128xf32>, vector<128x384xf32>, vector<8x384xf32> -> vector<8x384xf32>
    %18 = vector.extract_strided_slice %15 {offsets = [0, 0], sizes = [8, 256], strides = [1, 1]} : vector<8x384xf32> to vector<8x256xf32>
    %19 = vector.extract_strided_slice %17 {offsets = [0, 0], sizes = [8, 256], strides = [1, 1]} : vector<8x384xf32> to vector<8x256xf32>
    %20 = arith.addf %18, %19 : vector<8x256xf32>
    %21 = arith.negf %20 : vector<8x256xf32>
    %22 = math.exp %21 : vector<8x256xf32>
    %cst_15 = arith.constant 1.000000e+00 : f32
    %23 = vector.broadcast %cst_15 : f32 to vector<8x256xf32>
    %24 = arith.addf %23, %22 : vector<8x256xf32>
    %25 = arith.divf %23, %24 : vector<8x256xf32>
    %26 = vector.extract_strided_slice %25 {offsets = [0, 0], sizes = [8, 128], strides = [1, 1]} : vector<8x256xf32> to vector<8x128xf32>
    %27 = vector.extract_strided_slice %25 {offsets = [0, 128], sizes = [8, 128], strides = [1, 1]} : vector<8x256xf32> to vector<8x128xf32>
    %28 = vector.extract_strided_slice %15 {offsets = [0, 256], sizes = [8, 128], strides = [1, 1]} : vector<8x384xf32> to vector<8x128xf32>
    %29 = vector.extract_strided_slice %17 {offsets = [0, 256], sizes = [8, 128], strides = [1, 1]} : vector<8x384xf32> to vector<8x128xf32>
    %30 = arith.addf %29, %9 : vector<8x128xf32>
    %31 = arith.mulf %26, %30 : vector<8x128xf32>
    %32 = arith.addf %28, %31 : vector<8x128xf32>
    %33 = math.tanh %32 : vector<8x128xf32>
    %cst_16 = arith.constant 1.000000e+00 : f32
    %34 = vector.broadcast %cst_16 : f32 to vector<8x128xf32>
    %35 = arith.subf %34, %27 : vector<8x128xf32>
    %36 = arith.mulf %35, %33 : vector<8x128xf32>
    %37 = arith.mulf %27, %13 : vector<8x128xf32>
    %38 = arith.addf %36, %37 : vector<8x128xf32>
    %39 = tpu.concatenate %38, %14 in 1 : vector<8x128xf32>, vector<8x128xf32> -> vector<8x256xf32>
    %c136 = arith.constant 136 : index
    %c0_17 = arith.constant 0 : index
    %40 = vector.load %arg1[%c136, %c0_17] : memref<520x512xf32, #tpu.memory_space<vmem>>, vector<256x512xf32>
    %cst_18 = arith.constant dense<0.000000e+00> : vector<8x512xf32>
    %41 = tpu.matmul %39, %40, %cst_18 {dimension_numbers = #tpu.dot_dimension_numbers<[1], [0], [0], [1], [0, 0, 1, 1], [], []>} : vector<8x256xf32>, vector<256x512xf32>, vector<8x512xf32> -> vector<8x512xf32>
    %42 = arith.addf %41, %12 : vector<8x512xf32>
    %43 = vector.extract_strided_slice %42 {offsets = [0, 0], sizes = [8, 256], strides = [1, 1]} : vector<8x512xf32> to vector<8x256xf32>
    %44 = arith.negf %43 : vector<8x256xf32>
    %45 = math.exp %44 : vector<8x256xf32>
    %cst_19 = arith.constant 1.000000e+00 : f32
    %46 = vector.broadcast %cst_19 : f32 to vector<8x256xf32>
    %47 = arith.addf %46, %45 : vector<8x256xf32>
    %48 = arith.divf %46, %47 : vector<8x256xf32>
    %49 = vector.extract_strided_slice %48 {offsets = [0, 0], sizes = [8, 128], strides = [1, 1]} : vector<8x256xf32> to vector<8x128xf32>
    %50 = vector.extract_strided_slice %48 {offsets = [0, 128], sizes = [8, 128], strides = [1, 1]} : vector<8x256xf32> to vector<8x128xf32>
    %51 = vector.extract_strided_slice %42 {offsets = [0, 256], sizes = [8, 128], strides = [1, 1]} : vector<8x512xf32> to vector<8x128xf32>
    %52 = vector.extract_strided_slice %42 {offsets = [0, 384], sizes = [8, 128], strides = [1, 1]} : vector<8x512xf32> to vector<8x128xf32>
    %53 = arith.mulf %49, %52 : vector<8x128xf32>
    %54 = arith.addf %51, %53 : vector<8x128xf32>
    %55 = math.tanh %54 : vector<8x128xf32>
    %cst_20 = arith.constant 1.000000e+00 : f32
    %56 = vector.broadcast %cst_20 : f32 to vector<8x128xf32>
    %57 = arith.subf %56, %50 : vector<8x128xf32>
    %58 = arith.mulf %57, %55 : vector<8x128xf32>
    %59 = arith.mulf %50, %14 : vector<8x128xf32>
    %60 = arith.addf %58, %59 : vector<8x128xf32>
    %c8_21 = arith.constant 8 : index
    %c0_22 = arith.constant 0 : index
    %61 = vector.load %arg4[%c8_21, %c0_22] : memref<64x384xf32, #tpu.memory_space<vmem>>, vector<8x384xf32>
    %c8_23 = arith.constant 8 : index
    %c0_24 = arith.constant 0 : index
    %62 = vector.load %arg1[%c8_23, %c0_24] : memref<520x512xf32, #tpu.memory_space<vmem>>, vector<128x384xf32>
    %cst_25 = arith.constant dense<0.000000e+00> : vector<8x384xf32>
    %63 = tpu.matmul %38, %62, %cst_25 {dimension_numbers = #tpu.dot_dimension_numbers<[1], [0], [0], [1], [0, 0, 1, 1], [], []>} : vector<8x128xf32>, vector<128x384xf32>, vector<8x384xf32> -> vector<8x384xf32>
    %64 = vector.extract_strided_slice %61 {offsets = [0, 0], sizes = [8, 256], strides = [1, 1]} : vector<8x384xf32> to vector<8x256xf32>
    %65 = vector.extract_strided_slice %63 {offsets = [0, 0], sizes = [8, 256], strides = [1, 1]} : vector<8x384xf32> to vector<8x256xf32>
    %66 = arith.addf %64, %65 : vector<8x256xf32>
    %67 = arith.negf %66 : vector<8x256xf32>
    %68 = math.exp %67 : vector<8x256xf32>
    %cst_26 = arith.constant 1.000000e+00 : f32
    %69 = vector.broadcast %cst_26 : f32 to vector<8x256xf32>
    %70 = arith.addf %69, %68 : vector<8x256xf32>
    %71 = arith.divf %69, %70 : vector<8x256xf32>
    %72 = vector.extract_strided_slice %71 {offsets = [0, 0], sizes = [8, 128], strides = [1, 1]} : vector<8x256xf32> to vector<8x128xf32>
    %73 = vector.extract_strided_slice %71 {offsets = [0, 128], sizes = [8, 128], strides = [1, 1]} : vector<8x256xf32> to vector<8x128xf32>
    %74 = vector.extract_strided_slice %61 {offsets = [0, 256], sizes = [8, 128], strides = [1, 1]} : vector<8x384xf32> to vector<8x128xf32>
    %75 = vector.extract_strided_slice %63 {offsets = [0, 256], sizes = [8, 128], strides = [1, 1]} : vector<8x384xf32> to vector<8x128xf32>
    %76 = arith.addf %75, %9 : vector<8x128xf32>
    %77 = arith.mulf %72, %76 : vector<8x128xf32>
    %78 = arith.addf %74, %77 : vector<8x128xf32>
    %79 = math.tanh %78 : vector<8x128xf32>
    %cst_27 = arith.constant 1.000000e+00 : f32
    %80 = vector.broadcast %cst_27 : f32 to vector<8x128xf32>
    %81 = arith.subf %80, %73 : vector<8x128xf32>
    %82 = arith.mulf %81, %79 : vector<8x128xf32>
    %83 = arith.mulf %73, %38 : vector<8x128xf32>
    %84 = arith.addf %82, %83 : vector<8x128xf32>
    %85 = tpu.concatenate %84, %60 in 1 : vector<8x128xf32>, vector<8x128xf32> -> vector<8x256xf32>
    %c136_28 = arith.constant 136 : index
    %c0_29 = arith.constant 0 : index
    %86 = vector.load %arg1[%c136_28, %c0_29] : memref<520x512xf32, #tpu.memory_space<vmem>>, vector<256x512xf32>
    %cst_30 = arith.constant dense<0.000000e+00> : vector<8x512xf32>
    %87 = tpu.matmul %85, %86, %cst_30 {dimension_numbers = #tpu.dot_dimension_numbers<[1], [0], [0], [1], [0, 0, 1, 1], [], []>} : vector<8x256xf32>, vector<256x512xf32>, vector<8x512xf32> -> vector<8x512xf32>
    %88 = arith.addf %87, %12 : vector<8x512xf32>
    %89 = vector.extract_strided_slice %88 {offsets = [0, 0], sizes = [8, 256], strides = [1, 1]} : vector<8x512xf32> to vector<8x256xf32>
    %90 = arith.negf %89 : vector<8x256xf32>
    %91 = math.exp %90 : vector<8x256xf32>
    %cst_31 = arith.constant 1.000000e+00 : f32
    %92 = vector.broadcast %cst_31 : f32 to vector<8x256xf32>
    %93 = arith.addf %92, %91 : vector<8x256xf32>
    %94 = arith.divf %92, %93 : vector<8x256xf32>
    %95 = vector.extract_strided_slice %94 {offsets = [0, 0], sizes = [8, 128], strides = [1, 1]} : vector<8x256xf32> to vector<8x128xf32>
    %96 = vector.extract_strided_slice %94 {offsets = [0, 128], sizes = [8, 128], strides = [1, 1]} : vector<8x256xf32> to vector<8x128xf32>
    %97 = vector.extract_strided_slice %88 {offsets = [0, 256], sizes = [8, 128], strides = [1, 1]} : vector<8x512xf32> to vector<8x128xf32>
    %98 = vector.extract_strided_slice %88 {offsets = [0, 384], sizes = [8, 128], strides = [1, 1]} : vector<8x512xf32> to vector<8x128xf32>
    %99 = arith.mulf %95, %98 : vector<8x128xf32>
    %100 = arith.addf %97, %99 : vector<8x128xf32>
    %101 = math.tanh %100 : vector<8x128xf32>
    %cst_32 = arith.constant 1.000000e+00 : f32
    %102 = vector.broadcast %cst_32 : f32 to vector<8x128xf32>
    %103 = arith.subf %102, %96 : vector<8x128xf32>
    %104 = arith.mulf %103, %101 : vector<8x128xf32>
    %105 = arith.mulf %96, %60 : vector<8x128xf32>
    %106 = arith.addf %104, %105 : vector<8x128xf32>
    %c16 = arith.constant 16 : index
    %c0_33 = arith.constant 0 : index
    %107 = vector.load %arg4[%c16, %c0_33] : memref<64x384xf32, #tpu.memory_space<vmem>>, vector<8x384xf32>
    %c8_34 = arith.constant 8 : index
    %c0_35 = arith.constant 0 : index
    %108 = vector.load %arg1[%c8_34, %c0_35] : memref<520x512xf32, #tpu.memory_space<vmem>>, vector<128x384xf32>
    %cst_36 = arith.constant dense<0.000000e+00> : vector<8x384xf32>
    %109 = tpu.matmul %84, %108, %cst_36 {dimension_numbers = #tpu.dot_dimension_numbers<[1], [0], [0], [1], [0, 0, 1, 1], [], []>} : vector<8x128xf32>, vector<128x384xf32>, vector<8x384xf32> -> vector<8x384xf32>
    %110 = vector.extract_strided_slice %107 {offsets = [0, 0], sizes = [8, 256], strides = [1, 1]} : vector<8x384xf32> to vector<8x256xf32>
    %111 = vector.extract_strided_slice %109 {offsets = [0, 0], sizes = [8, 256], strides = [1, 1]} : vector<8x384xf32> to vector<8x256xf32>
    %112 = arith.addf %110, %111 : vector<8x256xf32>
    %113 = arith.negf %112 : vector<8x256xf32>
    %114 = math.exp %113 : vector<8x256xf32>
    %cst_37 = arith.constant 1.000000e+00 : f32
    %115 = vector.broadcast %cst_37 : f32 to vector<8x256xf32>
    %116 = arith.addf %115, %114 : vector<8x256xf32>
    %117 = arith.divf %115, %116 : vector<8x256xf32>
    %118 = vector.extract_strided_slice %117 {offsets = [0, 0], sizes = [8, 128], strides = [1, 1]} : vector<8x256xf32> to vector<8x128xf32>
    %119 = vector.extract_strided_slice %117 {offsets = [0, 128], sizes = [8, 128], strides = [1, 1]} : vector<8x256xf32> to vector<8x128xf32>
    %120 = vector.extract_strided_slice %107 {offsets = [0, 256], sizes = [8, 128], strides = [1, 1]} : vector<8x384xf32> to vector<8x128xf32>
    %121 = vector.extract_strided_slice %109 {offsets = [0, 256], sizes = [8, 128], strides = [1, 1]} : vector<8x384xf32> to vector<8x128xf32>
    %122 = arith.addf %121, %9 : vector<8x128xf32>
    %123 = arith.mulf %118, %122 : vector<8x128xf32>
    %124 = arith.addf %120, %123 : vector<8x128xf32>
    %125 = math.tanh %124 : vector<8x128xf32>
    %cst_38 = arith.constant 1.000000e+00 : f32
    %126 = vector.broadcast %cst_38 : f32 to vector<8x128xf32>
    %127 = arith.subf %126, %119 : vector<8x128xf32>
    %128 = arith.mulf %127, %125 : vector<8x128xf32>
    %129 = arith.mulf %119, %84 : vector<8x128xf32>
    %130 = arith.addf %128, %129 : vector<8x128xf32>
    %131 = tpu.concatenate %130, %106 in 1 : vector<8x128xf32>, vector<8x128xf32> -> vector<8x256xf32>
    %c136_39 = arith.constant 136 : index
    %c0_40 = arith.constant 0 : index
    %132 = vector.load %arg1[%c136_39, %c0_40] : memref<520x512xf32, #tpu.memory_space<vmem>>, vector<256x512xf32>
    %cst_41 = arith.constant dense<0.000000e+00> : vector<8x512xf32>
    %133 = tpu.matmul %131, %132, %cst_41 {dimension_numbers = #tpu.dot_dimension_numbers<[1], [0], [0], [1], [0, 0, 1, 1], [], []>} : vector<8x256xf32>, vector<256x512xf32>, vector<8x512xf32> -> vector<8x512xf32>
    %134 = arith.addf %133, %12 : vector<8x512xf32>
    %135 = vector.extract_strided_slice %134 {offsets = [0, 0], sizes = [8, 256], strides = [1, 1]} : vector<8x512xf32> to vector<8x256xf32>
    %136 = arith.negf %135 : vector<8x256xf32>
    %137 = math.exp %136 : vector<8x256xf32>
    %cst_42 = arith.constant 1.000000e+00 : f32
    %138 = vector.broadcast %cst_42 : f32 to vector<8x256xf32>
    %139 = arith.addf %138, %137 : vector<8x256xf32>
    %140 = arith.divf %138, %139 : vector<8x256xf32>
    %141 = vector.extract_strided_slice %140 {offsets = [0, 0], sizes = [8, 128], strides = [1, 1]} : vector<8x256xf32> to vector<8x128xf32>
    %142 = vector.extract_strided_slice %140 {offsets = [0, 128], sizes = [8, 128], strides = [1, 1]} : vector<8x256xf32> to vector<8x128xf32>
    %143 = vector.extract_strided_slice %134 {offsets = [0, 256], sizes = [8, 128], strides = [1, 1]} : vector<8x512xf32> to vector<8x128xf32>
    %144 = vector.extract_strided_slice %134 {offsets = [0, 384], sizes = [8, 128], strides = [1, 1]} : vector<8x512xf32> to vector<8x128xf32>
    %145 = arith.mulf %141, %144 : vector<8x128xf32>
    %146 = arith.addf %143, %145 : vector<8x128xf32>
    %147 = math.tanh %146 : vector<8x128xf32>
    %cst_43 = arith.constant 1.000000e+00 : f32
    %148 = vector.broadcast %cst_43 : f32 to vector<8x128xf32>
    %149 = arith.subf %148, %142 : vector<8x128xf32>
    %150 = arith.mulf %149, %147 : vector<8x128xf32>
    %151 = arith.mulf %142, %106 : vector<8x128xf32>
    %152 = arith.addf %150, %151 : vector<8x128xf32>
    %c24 = arith.constant 24 : index
    %c0_44 = arith.constant 0 : index
    %153 = vector.load %arg4[%c24, %c0_44] : memref<64x384xf32, #tpu.memory_space<vmem>>, vector<8x384xf32>
    %c8_45 = arith.constant 8 : index
    %c0_46 = arith.constant 0 : index
    %154 = vector.load %arg1[%c8_45, %c0_46] : memref<520x512xf32, #tpu.memory_space<vmem>>, vector<128x384xf32>
    %cst_47 = arith.constant dense<0.000000e+00> : vector<8x384xf32>
    %155 = tpu.matmul %130, %154, %cst_47 {dimension_numbers = #tpu.dot_dimension_numbers<[1], [0], [0], [1], [0, 0, 1, 1], [], []>} : vector<8x128xf32>, vector<128x384xf32>, vector<8x384xf32> -> vector<8x384xf32>
    %156 = vector.extract_strided_slice %153 {offsets = [0, 0], sizes = [8, 256], strides = [1, 1]} : vector<8x384xf32> to vector<8x256xf32>
    %157 = vector.extract_strided_slice %155 {offsets = [0, 0], sizes = [8, 256], strides = [1, 1]} : vector<8x384xf32> to vector<8x256xf32>
    %158 = arith.addf %156, %157 : vector<8x256xf32>
    %159 = arith.negf %158 : vector<8x256xf32>
    %160 = math.exp %159 : vector<8x256xf32>
    %cst_48 = arith.constant 1.000000e+00 : f32
    %161 = vector.broadcast %cst_48 : f32 to vector<8x256xf32>
    %162 = arith.addf %161, %160 : vector<8x256xf32>
    %163 = arith.divf %161, %162 : vector<8x256xf32>
    %164 = vector.extract_strided_slice %163 {offsets = [0, 0], sizes = [8, 128], strides = [1, 1]} : vector<8x256xf32> to vector<8x128xf32>
    %165 = vector.extract_strided_slice %163 {offsets = [0, 128], sizes = [8, 128], strides = [1, 1]} : vector<8x256xf32> to vector<8x128xf32>
    %166 = vector.extract_strided_slice %153 {offsets = [0, 256], sizes = [8, 128], strides = [1, 1]} : vector<8x384xf32> to vector<8x128xf32>
    %167 = vector.extract_strided_slice %155 {offsets = [0, 256], sizes = [8, 128], strides = [1, 1]} : vector<8x384xf32> to vector<8x128xf32>
    %168 = arith.addf %167, %9 : vector<8x128xf32>
    %169 = arith.mulf %164, %168 : vector<8x128xf32>
    %170 = arith.addf %166, %169 : vector<8x128xf32>
    %171 = math.tanh %170 : vector<8x128xf32>
    %cst_49 = arith.constant 1.000000e+00 : f32
    %172 = vector.broadcast %cst_49 : f32 to vector<8x128xf32>
    %173 = arith.subf %172, %165 : vector<8x128xf32>
    %174 = arith.mulf %173, %171 : vector<8x128xf32>
    %175 = arith.mulf %165, %130 : vector<8x128xf32>
    %176 = arith.addf %174, %175 : vector<8x128xf32>
    %177 = tpu.concatenate %176, %152 in 1 : vector<8x128xf32>, vector<8x128xf32> -> vector<8x256xf32>
    %c136_50 = arith.constant 136 : index
    %c0_51 = arith.constant 0 : index
    %178 = vector.load %arg1[%c136_50, %c0_51] : memref<520x512xf32, #tpu.memory_space<vmem>>, vector<256x512xf32>
    %cst_52 = arith.constant dense<0.000000e+00> : vector<8x512xf32>
    %179 = tpu.matmul %177, %178, %cst_52 {dimension_numbers = #tpu.dot_dimension_numbers<[1], [0], [0], [1], [0, 0, 1, 1], [], []>} : vector<8x256xf32>, vector<256x512xf32>, vector<8x512xf32> -> vector<8x512xf32>
    %180 = arith.addf %179, %12 : vector<8x512xf32>
    %181 = vector.extract_strided_slice %180 {offsets = [0, 0], sizes = [8, 256], strides = [1, 1]} : vector<8x512xf32> to vector<8x256xf32>
    %182 = arith.negf %181 : vector<8x256xf32>
    %183 = math.exp %182 : vector<8x256xf32>
    %cst_53 = arith.constant 1.000000e+00 : f32
    %184 = vector.broadcast %cst_53 : f32 to vector<8x256xf32>
    %185 = arith.addf %184, %183 : vector<8x256xf32>
    %186 = arith.divf %184, %185 : vector<8x256xf32>
    %187 = vector.extract_strided_slice %186 {offsets = [0, 0], sizes = [8, 128], strides = [1, 1]} : vector<8x256xf32> to vector<8x128xf32>
    %188 = vector.extract_strided_slice %186 {offsets = [0, 128], sizes = [8, 128], strides = [1, 1]} : vector<8x256xf32> to vector<8x128xf32>
    %189 = vector.extract_strided_slice %180 {offsets = [0, 256], sizes = [8, 128], strides = [1, 1]} : vector<8x512xf32> to vector<8x128xf32>
    %190 = vector.extract_strided_slice %180 {offsets = [0, 384], sizes = [8, 128], strides = [1, 1]} : vector<8x512xf32> to vector<8x128xf32>
    %191 = arith.mulf %187, %190 : vector<8x128xf32>
    %192 = arith.addf %189, %191 : vector<8x128xf32>
    %193 = math.tanh %192 : vector<8x128xf32>
    %cst_54 = arith.constant 1.000000e+00 : f32
    %194 = vector.broadcast %cst_54 : f32 to vector<8x128xf32>
    %195 = arith.subf %194, %188 : vector<8x128xf32>
    %196 = arith.mulf %195, %193 : vector<8x128xf32>
    %197 = arith.mulf %188, %152 : vector<8x128xf32>
    %198 = arith.addf %196, %197 : vector<8x128xf32>
    %c32 = arith.constant 32 : index
    %c0_55 = arith.constant 0 : index
    %199 = vector.load %arg4[%c32, %c0_55] : memref<64x384xf32, #tpu.memory_space<vmem>>, vector<8x384xf32>
    %c8_56 = arith.constant 8 : index
    %c0_57 = arith.constant 0 : index
    %200 = vector.load %arg1[%c8_56, %c0_57] : memref<520x512xf32, #tpu.memory_space<vmem>>, vector<128x384xf32>
    %cst_58 = arith.constant dense<0.000000e+00> : vector<8x384xf32>
    %201 = tpu.matmul %176, %200, %cst_58 {dimension_numbers = #tpu.dot_dimension_numbers<[1], [0], [0], [1], [0, 0, 1, 1], [], []>} : vector<8x128xf32>, vector<128x384xf32>, vector<8x384xf32> -> vector<8x384xf32>
    %202 = vector.extract_strided_slice %199 {offsets = [0, 0], sizes = [8, 256], strides = [1, 1]} : vector<8x384xf32> to vector<8x256xf32>
    %203 = vector.extract_strided_slice %201 {offsets = [0, 0], sizes = [8, 256], strides = [1, 1]} : vector<8x384xf32> to vector<8x256xf32>
    %204 = arith.addf %202, %203 : vector<8x256xf32>
    %205 = arith.negf %204 : vector<8x256xf32>
    %206 = math.exp %205 : vector<8x256xf32>
    %cst_59 = arith.constant 1.000000e+00 : f32
    %207 = vector.broadcast %cst_59 : f32 to vector<8x256xf32>
    %208 = arith.addf %207, %206 : vector<8x256xf32>
    %209 = arith.divf %207, %208 : vector<8x256xf32>
    %210 = vector.extract_strided_slice %209 {offsets = [0, 0], sizes = [8, 128], strides = [1, 1]} : vector<8x256xf32> to vector<8x128xf32>
    %211 = vector.extract_strided_slice %209 {offsets = [0, 128], sizes = [8, 128], strides = [1, 1]} : vector<8x256xf32> to vector<8x128xf32>
    %212 = vector.extract_strided_slice %199 {offsets = [0, 256], sizes = [8, 128], strides = [1, 1]} : vector<8x384xf32> to vector<8x128xf32>
    %213 = vector.extract_strided_slice %201 {offsets = [0, 256], sizes = [8, 128], strides = [1, 1]} : vector<8x384xf32> to vector<8x128xf32>
    %214 = arith.addf %213, %9 : vector<8x128xf32>
    %215 = arith.mulf %210, %214 : vector<8x128xf32>
    %216 = arith.addf %212, %215 : vector<8x128xf32>
    %217 = math.tanh %216 : vector<8x128xf32>
    %cst_60 = arith.constant 1.000000e+00 : f32
    %218 = vector.broadcast %cst_60 : f32 to vector<8x128xf32>
    %219 = arith.subf %218, %211 : vector<8x128xf32>
    %220 = arith.mulf %219, %217 : vector<8x128xf32>
    %221 = arith.mulf %211, %176 : vector<8x128xf32>
    %222 = arith.addf %220, %221 : vector<8x128xf32>
    %223 = tpu.concatenate %222, %198 in 1 : vector<8x128xf32>, vector<8x128xf32> -> vector<8x256xf32>
    %c136_61 = arith.constant 136 : index
    %c0_62 = arith.constant 0 : index
    %224 = vector.load %arg1[%c136_61, %c0_62] : memref<520x512xf32, #tpu.memory_space<vmem>>, vector<256x512xf32>
    %cst_63 = arith.constant dense<0.000000e+00> : vector<8x512xf32>
    %225 = tpu.matmul %223, %224, %cst_63 {dimension_numbers = #tpu.dot_dimension_numbers<[1], [0], [0], [1], [0, 0, 1, 1], [], []>} : vector<8x256xf32>, vector<256x512xf32>, vector<8x512xf32> -> vector<8x512xf32>
    %226 = arith.addf %225, %12 : vector<8x512xf32>
    %227 = vector.extract_strided_slice %226 {offsets = [0, 0], sizes = [8, 256], strides = [1, 1]} : vector<8x512xf32> to vector<8x256xf32>
    %228 = arith.negf %227 : vector<8x256xf32>
    %229 = math.exp %228 : vector<8x256xf32>
    %cst_64 = arith.constant 1.000000e+00 : f32
    %230 = vector.broadcast %cst_64 : f32 to vector<8x256xf32>
    %231 = arith.addf %230, %229 : vector<8x256xf32>
    %232 = arith.divf %230, %231 : vector<8x256xf32>
    %233 = vector.extract_strided_slice %232 {offsets = [0, 0], sizes = [8, 128], strides = [1, 1]} : vector<8x256xf32> to vector<8x128xf32>
    %234 = vector.extract_strided_slice %232 {offsets = [0, 128], sizes = [8, 128], strides = [1, 1]} : vector<8x256xf32> to vector<8x128xf32>
    %235 = vector.extract_strided_slice %226 {offsets = [0, 256], sizes = [8, 128], strides = [1, 1]} : vector<8x512xf32> to vector<8x128xf32>
    %236 = vector.extract_strided_slice %226 {offsets = [0, 384], sizes = [8, 128], strides = [1, 1]} : vector<8x512xf32> to vector<8x128xf32>
    %237 = arith.mulf %233, %236 : vector<8x128xf32>
    %238 = arith.addf %235, %237 : vector<8x128xf32>
    %239 = math.tanh %238 : vector<8x128xf32>
    %cst_65 = arith.constant 1.000000e+00 : f32
    %240 = vector.broadcast %cst_65 : f32 to vector<8x128xf32>
    %241 = arith.subf %240, %234 : vector<8x128xf32>
    %242 = arith.mulf %241, %239 : vector<8x128xf32>
    %243 = arith.mulf %234, %198 : vector<8x128xf32>
    %244 = arith.addf %242, %243 : vector<8x128xf32>
    %c40 = arith.constant 40 : index
    %c0_66 = arith.constant 0 : index
    %245 = vector.load %arg4[%c40, %c0_66] : memref<64x384xf32, #tpu.memory_space<vmem>>, vector<8x384xf32>
    %c8_67 = arith.constant 8 : index
    %c0_68 = arith.constant 0 : index
    %246 = vector.load %arg1[%c8_67, %c0_68] : memref<520x512xf32, #tpu.memory_space<vmem>>, vector<128x384xf32>
    %cst_69 = arith.constant dense<0.000000e+00> : vector<8x384xf32>
    %247 = tpu.matmul %222, %246, %cst_69 {dimension_numbers = #tpu.dot_dimension_numbers<[1], [0], [0], [1], [0, 0, 1, 1], [], []>} : vector<8x128xf32>, vector<128x384xf32>, vector<8x384xf32> -> vector<8x384xf32>
    %248 = vector.extract_strided_slice %245 {offsets = [0, 0], sizes = [8, 256], strides = [1, 1]} : vector<8x384xf32> to vector<8x256xf32>
    %249 = vector.extract_strided_slice %247 {offsets = [0, 0], sizes = [8, 256], strides = [1, 1]} : vector<8x384xf32> to vector<8x256xf32>
    %250 = arith.addf %248, %249 : vector<8x256xf32>
    %251 = arith.negf %250 : vector<8x256xf32>
    %252 = math.exp %251 : vector<8x256xf32>
    %cst_70 = arith.constant 1.000000e+00 : f32
    %253 = vector.broadcast %cst_70 : f32 to vector<8x256xf32>
    %254 = arith.addf %253, %252 : vector<8x256xf32>
    %255 = arith.divf %253, %254 : vector<8x256xf32>
    %256 = vector.extract_strided_slice %255 {offsets = [0, 0], sizes = [8, 128], strides = [1, 1]} : vector<8x256xf32> to vector<8x128xf32>
    %257 = vector.extract_strided_slice %255 {offsets = [0, 128], sizes = [8, 128], strides = [1, 1]} : vector<8x256xf32> to vector<8x128xf32>
    %258 = vector.extract_strided_slice %245 {offsets = [0, 256], sizes = [8, 128], strides = [1, 1]} : vector<8x384xf32> to vector<8x128xf32>
    %259 = vector.extract_strided_slice %247 {offsets = [0, 256], sizes = [8, 128], strides = [1, 1]} : vector<8x384xf32> to vector<8x128xf32>
    %260 = arith.addf %259, %9 : vector<8x128xf32>
    %261 = arith.mulf %256, %260 : vector<8x128xf32>
    %262 = arith.addf %258, %261 : vector<8x128xf32>
    %263 = math.tanh %262 : vector<8x128xf32>
    %cst_71 = arith.constant 1.000000e+00 : f32
    %264 = vector.broadcast %cst_71 : f32 to vector<8x128xf32>
    %265 = arith.subf %264, %257 : vector<8x128xf32>
    %266 = arith.mulf %265, %263 : vector<8x128xf32>
    %267 = arith.mulf %257, %222 : vector<8x128xf32>
    %268 = arith.addf %266, %267 : vector<8x128xf32>
    %269 = tpu.concatenate %268, %244 in 1 : vector<8x128xf32>, vector<8x128xf32> -> vector<8x256xf32>
    %c136_72 = arith.constant 136 : index
    %c0_73 = arith.constant 0 : index
    %270 = vector.load %arg1[%c136_72, %c0_73] : memref<520x512xf32, #tpu.memory_space<vmem>>, vector<256x512xf32>
    %cst_74 = arith.constant dense<0.000000e+00> : vector<8x512xf32>
    %271 = tpu.matmul %269, %270, %cst_74 {dimension_numbers = #tpu.dot_dimension_numbers<[1], [0], [0], [1], [0, 0, 1, 1], [], []>} : vector<8x256xf32>, vector<256x512xf32>, vector<8x512xf32> -> vector<8x512xf32>
    %272 = arith.addf %271, %12 : vector<8x512xf32>
    %273 = vector.extract_strided_slice %272 {offsets = [0, 0], sizes = [8, 256], strides = [1, 1]} : vector<8x512xf32> to vector<8x256xf32>
    %274 = arith.negf %273 : vector<8x256xf32>
    %275 = math.exp %274 : vector<8x256xf32>
    %cst_75 = arith.constant 1.000000e+00 : f32
    %276 = vector.broadcast %cst_75 : f32 to vector<8x256xf32>
    %277 = arith.addf %276, %275 : vector<8x256xf32>
    %278 = arith.divf %276, %277 : vector<8x256xf32>
    %279 = vector.extract_strided_slice %278 {offsets = [0, 0], sizes = [8, 128], strides = [1, 1]} : vector<8x256xf32> to vector<8x128xf32>
    %280 = vector.extract_strided_slice %278 {offsets = [0, 128], sizes = [8, 128], strides = [1, 1]} : vector<8x256xf32> to vector<8x128xf32>
    %281 = vector.extract_strided_slice %272 {offsets = [0, 256], sizes = [8, 128], strides = [1, 1]} : vector<8x512xf32> to vector<8x128xf32>
    %282 = vector.extract_strided_slice %272 {offsets = [0, 384], sizes = [8, 128], strides = [1, 1]} : vector<8x512xf32> to vector<8x128xf32>
    %283 = arith.mulf %279, %282 : vector<8x128xf32>
    %284 = arith.addf %281, %283 : vector<8x128xf32>
    %285 = math.tanh %284 : vector<8x128xf32>
    %cst_76 = arith.constant 1.000000e+00 : f32
    %286 = vector.broadcast %cst_76 : f32 to vector<8x128xf32>
    %287 = arith.subf %286, %280 : vector<8x128xf32>
    %288 = arith.mulf %287, %285 : vector<8x128xf32>
    %289 = arith.mulf %280, %244 : vector<8x128xf32>
    %290 = arith.addf %288, %289 : vector<8x128xf32>
    %c48 = arith.constant 48 : index
    %c0_77 = arith.constant 0 : index
    %291 = vector.load %arg4[%c48, %c0_77] : memref<64x384xf32, #tpu.memory_space<vmem>>, vector<8x384xf32>
    %c8_78 = arith.constant 8 : index
    %c0_79 = arith.constant 0 : index
    %292 = vector.load %arg1[%c8_78, %c0_79] : memref<520x512xf32, #tpu.memory_space<vmem>>, vector<128x384xf32>
    %cst_80 = arith.constant dense<0.000000e+00> : vector<8x384xf32>
    %293 = tpu.matmul %268, %292, %cst_80 {dimension_numbers = #tpu.dot_dimension_numbers<[1], [0], [0], [1], [0, 0, 1, 1], [], []>} : vector<8x128xf32>, vector<128x384xf32>, vector<8x384xf32> -> vector<8x384xf32>
    %294 = vector.extract_strided_slice %291 {offsets = [0, 0], sizes = [8, 256], strides = [1, 1]} : vector<8x384xf32> to vector<8x256xf32>
    %295 = vector.extract_strided_slice %293 {offsets = [0, 0], sizes = [8, 256], strides = [1, 1]} : vector<8x384xf32> to vector<8x256xf32>
    %296 = arith.addf %294, %295 : vector<8x256xf32>
    %297 = arith.negf %296 : vector<8x256xf32>
    %298 = math.exp %297 : vector<8x256xf32>
    %cst_81 = arith.constant 1.000000e+00 : f32
    %299 = vector.broadcast %cst_81 : f32 to vector<8x256xf32>
    %300 = arith.addf %299, %298 : vector<8x256xf32>
    %301 = arith.divf %299, %300 : vector<8x256xf32>
    %302 = vector.extract_strided_slice %301 {offsets = [0, 0], sizes = [8, 128], strides = [1, 1]} : vector<8x256xf32> to vector<8x128xf32>
    %303 = vector.extract_strided_slice %301 {offsets = [0, 128], sizes = [8, 128], strides = [1, 1]} : vector<8x256xf32> to vector<8x128xf32>
    %304 = vector.extract_strided_slice %291 {offsets = [0, 256], sizes = [8, 128], strides = [1, 1]} : vector<8x384xf32> to vector<8x128xf32>
    %305 = vector.extract_strided_slice %293 {offsets = [0, 256], sizes = [8, 128], strides = [1, 1]} : vector<8x384xf32> to vector<8x128xf32>
    %306 = arith.addf %305, %9 : vector<8x128xf32>
    %307 = arith.mulf %302, %306 : vector<8x128xf32>
    %308 = arith.addf %304, %307 : vector<8x128xf32>
    %309 = math.tanh %308 : vector<8x128xf32>
    %cst_82 = arith.constant 1.000000e+00 : f32
    %310 = vector.broadcast %cst_82 : f32 to vector<8x128xf32>
    %311 = arith.subf %310, %303 : vector<8x128xf32>
    %312 = arith.mulf %311, %309 : vector<8x128xf32>
    %313 = arith.mulf %303, %268 : vector<8x128xf32>
    %314 = arith.addf %312, %313 : vector<8x128xf32>
    %315 = tpu.concatenate %314, %290 in 1 : vector<8x128xf32>, vector<8x128xf32> -> vector<8x256xf32>
    %c136_83 = arith.constant 136 : index
    %c0_84 = arith.constant 0 : index
    %316 = vector.load %arg1[%c136_83, %c0_84] : memref<520x512xf32, #tpu.memory_space<vmem>>, vector<256x512xf32>
    %cst_85 = arith.constant dense<0.000000e+00> : vector<8x512xf32>
    %317 = tpu.matmul %315, %316, %cst_85 {dimension_numbers = #tpu.dot_dimension_numbers<[1], [0], [0], [1], [0, 0, 1, 1], [], []>} : vector<8x256xf32>, vector<256x512xf32>, vector<8x512xf32> -> vector<8x512xf32>
    %318 = arith.addf %317, %12 : vector<8x512xf32>
    %319 = vector.extract_strided_slice %318 {offsets = [0, 0], sizes = [8, 256], strides = [1, 1]} : vector<8x512xf32> to vector<8x256xf32>
    %320 = arith.negf %319 : vector<8x256xf32>
    %321 = math.exp %320 : vector<8x256xf32>
    %cst_86 = arith.constant 1.000000e+00 : f32
    %322 = vector.broadcast %cst_86 : f32 to vector<8x256xf32>
    %323 = arith.addf %322, %321 : vector<8x256xf32>
    %324 = arith.divf %322, %323 : vector<8x256xf32>
    %325 = vector.extract_strided_slice %324 {offsets = [0, 0], sizes = [8, 128], strides = [1, 1]} : vector<8x256xf32> to vector<8x128xf32>
    %326 = vector.extract_strided_slice %324 {offsets = [0, 128], sizes = [8, 128], strides = [1, 1]} : vector<8x256xf32> to vector<8x128xf32>
    %327 = vector.extract_strided_slice %318 {offsets = [0, 256], sizes = [8, 128], strides = [1, 1]} : vector<8x512xf32> to vector<8x128xf32>
    %328 = vector.extract_strided_slice %318 {offsets = [0, 384], sizes = [8, 128], strides = [1, 1]} : vector<8x512xf32> to vector<8x128xf32>
    %329 = arith.mulf %325, %328 : vector<8x128xf32>
    %330 = arith.addf %327, %329 : vector<8x128xf32>
    %331 = math.tanh %330 : vector<8x128xf32>
    %cst_87 = arith.constant 1.000000e+00 : f32
    %332 = vector.broadcast %cst_87 : f32 to vector<8x128xf32>
    %333 = arith.subf %332, %326 : vector<8x128xf32>
    %334 = arith.mulf %333, %331 : vector<8x128xf32>
    %335 = arith.mulf %326, %290 : vector<8x128xf32>
    %336 = arith.addf %334, %335 : vector<8x128xf32>
    %c56 = arith.constant 56 : index
    %c0_88 = arith.constant 0 : index
    %337 = vector.load %arg4[%c56, %c0_88] : memref<64x384xf32, #tpu.memory_space<vmem>>, vector<8x384xf32>
    %c8_89 = arith.constant 8 : index
    %c0_90 = arith.constant 0 : index
    %338 = vector.load %arg1[%c8_89, %c0_90] : memref<520x512xf32, #tpu.memory_space<vmem>>, vector<128x384xf32>
    %cst_91 = arith.constant dense<0.000000e+00> : vector<8x384xf32>
    %339 = tpu.matmul %314, %338, %cst_91 {dimension_numbers = #tpu.dot_dimension_numbers<[1], [0], [0], [1], [0, 0, 1, 1], [], []>} : vector<8x128xf32>, vector<128x384xf32>, vector<8x384xf32> -> vector<8x384xf32>
    %340 = vector.extract_strided_slice %337 {offsets = [0, 0], sizes = [8, 256], strides = [1, 1]} : vector<8x384xf32> to vector<8x256xf32>
    %341 = vector.extract_strided_slice %339 {offsets = [0, 0], sizes = [8, 256], strides = [1, 1]} : vector<8x384xf32> to vector<8x256xf32>
    %342 = arith.addf %340, %341 : vector<8x256xf32>
    %343 = arith.negf %342 : vector<8x256xf32>
    %344 = math.exp %343 : vector<8x256xf32>
    %cst_92 = arith.constant 1.000000e+00 : f32
    %345 = vector.broadcast %cst_92 : f32 to vector<8x256xf32>
    %346 = arith.addf %345, %344 : vector<8x256xf32>
    %347 = arith.divf %345, %346 : vector<8x256xf32>
    %348 = vector.extract_strided_slice %347 {offsets = [0, 0], sizes = [8, 128], strides = [1, 1]} : vector<8x256xf32> to vector<8x128xf32>
    %349 = vector.extract_strided_slice %347 {offsets = [0, 128], sizes = [8, 128], strides = [1, 1]} : vector<8x256xf32> to vector<8x128xf32>
    %350 = vector.extract_strided_slice %337 {offsets = [0, 256], sizes = [8, 128], strides = [1, 1]} : vector<8x384xf32> to vector<8x128xf32>
    %351 = vector.extract_strided_slice %339 {offsets = [0, 256], sizes = [8, 128], strides = [1, 1]} : vector<8x384xf32> to vector<8x128xf32>
    %352 = arith.addf %351, %9 : vector<8x128xf32>
    %353 = arith.mulf %348, %352 : vector<8x128xf32>
    %354 = arith.addf %350, %353 : vector<8x128xf32>
    %355 = math.tanh %354 : vector<8x128xf32>
    %cst_93 = arith.constant 1.000000e+00 : f32
    %356 = vector.broadcast %cst_93 : f32 to vector<8x128xf32>
    %357 = arith.subf %356, %349 : vector<8x128xf32>
    %358 = arith.mulf %357, %355 : vector<8x128xf32>
    %359 = arith.mulf %349, %314 : vector<8x128xf32>
    %360 = arith.addf %358, %359 : vector<8x128xf32>
    %361 = tpu.concatenate %360, %336 in 1 : vector<8x128xf32>, vector<8x128xf32> -> vector<8x256xf32>
    %c136_94 = arith.constant 136 : index
    %c0_95 = arith.constant 0 : index
    %362 = vector.load %arg1[%c136_94, %c0_95] : memref<520x512xf32, #tpu.memory_space<vmem>>, vector<256x512xf32>
    %cst_96 = arith.constant dense<0.000000e+00> : vector<8x512xf32>
    %363 = tpu.matmul %361, %362, %cst_96 {dimension_numbers = #tpu.dot_dimension_numbers<[1], [0], [0], [1], [0, 0, 1, 1], [], []>} : vector<8x256xf32>, vector<256x512xf32>, vector<8x512xf32> -> vector<8x512xf32>
    %364 = arith.addf %363, %12 : vector<8x512xf32>
    %365 = vector.extract_strided_slice %364 {offsets = [0, 0], sizes = [8, 256], strides = [1, 1]} : vector<8x512xf32> to vector<8x256xf32>
    %366 = arith.negf %365 : vector<8x256xf32>
    %367 = math.exp %366 : vector<8x256xf32>
    %cst_97 = arith.constant 1.000000e+00 : f32
    %368 = vector.broadcast %cst_97 : f32 to vector<8x256xf32>
    %369 = arith.addf %368, %367 : vector<8x256xf32>
    %370 = arith.divf %368, %369 : vector<8x256xf32>
    %371 = vector.extract_strided_slice %370 {offsets = [0, 0], sizes = [8, 128], strides = [1, 1]} : vector<8x256xf32> to vector<8x128xf32>
    %372 = vector.extract_strided_slice %370 {offsets = [0, 128], sizes = [8, 128], strides = [1, 1]} : vector<8x256xf32> to vector<8x128xf32>
    %373 = vector.extract_strided_slice %364 {offsets = [0, 256], sizes = [8, 128], strides = [1, 1]} : vector<8x512xf32> to vector<8x128xf32>
    %374 = vector.extract_strided_slice %364 {offsets = [0, 384], sizes = [8, 128], strides = [1, 1]} : vector<8x512xf32> to vector<8x128xf32>
    %375 = arith.mulf %371, %374 : vector<8x128xf32>
    %376 = arith.addf %373, %375 : vector<8x128xf32>
    %377 = math.tanh %376 : vector<8x128xf32>
    %cst_98 = arith.constant 1.000000e+00 : f32
    %378 = vector.broadcast %cst_98 : f32 to vector<8x128xf32>
    %379 = arith.subf %378, %372 : vector<8x128xf32>
    %380 = arith.mulf %379, %377 : vector<8x128xf32>
    %381 = arith.mulf %372, %336 : vector<8x128xf32>
    %382 = arith.addf %380, %381 : vector<8x128xf32>
    %c392 = arith.constant 392 : index
    %c0_99 = arith.constant 0 : index
    %383 = vector.load %arg1[%c392, %c0_99] : memref<520x512xf32, #tpu.memory_space<vmem>>, vector<128x128xf32>
    %cst_100 = arith.constant dense<0.000000e+00> : vector<8x128xf32>
    %384 = tpu.matmul %382, %383, %cst_100 {dimension_numbers = #tpu.dot_dimension_numbers<[1], [0], [0], [1], [0, 0, 1, 1], [], []>} : vector<8x128xf32>, vector<128x128xf32>, vector<8x128xf32> -> vector<8x128xf32>
    %c0_101 = arith.constant 0 : index
    %c1024 = arith.constant 1024 : index
    %385 = vector.load %arg2[%c0_101, %c1024] : memref<1x1152xf32, #tpu.memory_space<vmem>>, vector<1x128xf32>
    %386 = vector.shape_cast %385 : vector<1x128xf32> to vector<1x128xf32>
    %387 = vector.broadcast %386 : vector<1x128xf32> to vector<8x128xf32>
    %388 = arith.addf %384, %387 : vector<8x128xf32>
    %c0_102 = arith.constant 0 : index
    %c0_103 = arith.constant 0 : index
    %389 = vector.load %arg3[%c0_102, %c0_103] : memref<8x128xf32, #tpu.memory_space<vmem>>, vector<8x128xf32>
    tpu.vector_store %arg3[%c0_102, %c0_103], %388 {strides = array<i32>} : memref<8x128xf32, #tpu.memory_space<vmem>>, vector<8x128xf32>,
    return
  }
}

</mosaic_0001>

<llo_original>
// kernel: gru_backbone.1
$region0: #{gru_backbone.1}
  #allocation0 [shape = 'u32[]', space=smem, size = 0x4, offset = 0x4, fixed_abs, tag = 'smem constant byte address 0x4 - core index']
  #allocation1 [shape = 'u32[144,128]{1,0:T(1,128)}', space=vmem, size = 0x12000, scoped, tag = 'internal scratch']
  #allocation2 [shape = 'f32[64,384]{1,0:T(8,128)}', space=vmem, size = 0x18000, scoped, tag = 'scratch operand']
  %s0 = inlined_call_operand.vmem [shape: f32[64,8], index: 0, kind: input, shape index: {}]
  %s1 = inlined_call_operand.hbm [shape: f32[520,512], index: 1, kind: input, shape index: {}]
  %s2 = inlined_call_operand.hbm [shape: f32[1,1152], index: 2, kind: input, shape index: {}]
  %s3 = inlined_call_operand.vmem [shape: f32[8,128], index: 3, kind: output, shape index: {}]
  %s4 = sld [smem:[#allocation0]]
  $region30: #{gru_backbone.1} parent=0
    _
  %s6 = ssub.s32 1, %s4
  %s7 = scalar_select 0, %s6, %s4
  $region1: #{gru_backbone.1} parent=0
    #allocation3 [shape = 'u8[1064960]{0}', space=vmem, size = 0x104000, scoped, tag = 'input window, operand 1, single buffered']
    #allocation4 [shape = 's32[1]{0}', space=sflag, size = 0x4, scoped, tag = 'scoped memory for gru_backbone.1']
    #allocation5 [shape = 'u8[4608]{0}', space=vmem, size = 0x1400, scoped, tag = 'input window, operand 2, single buffered']
    #allocation6 [shape = 's32[1]{0}', space=sflag, size = 0x4, scoped, tag = 'scoped memory for gru_backbone.1']
    %8 = vsyncpa [#allocation4], 0
    %9 = vsyncpa [#allocation6], 0
    // Predicated region
    $region2: #{gru_backbone.1} parent=1 // pred_check
      _
    $region3: #{gru_backbone.1} parent=1 // pred_check_branch
      %11 = sbr.rel (0) target = $region5
    $region4: #{gru_backbone.1} parent=1 // pred_region
      _
    $region5: #{gru_backbone.1} parent=1 // pred_fallthru
      _
    // Predicated region
    $region6: #{gru_backbone.1} parent=1 // pred_check
      _
    $region7: #{gru_backbone.1} parent=1 // pred_check_branch
      %13 = sbr.rel (0) target = $region9
    $region8: #{gru_backbone.1} parent=1 // pred_region
      %s15 = ssub.s32 33280, 33280
      %16 = vsyncadd [#allocation4], %s15
      %s17 = sshll.u32 [#allocation3], 4
      %s18 = int_to_ptr.vmem [resolvable:$true] %s17
      %23 = dma.hbm_to_vmem [thread:$0]  %s1, 33280, %s18, [#allocation4], 512, 512, 32
    $region9: #{gru_backbone.1} parent=1 // pred_fallthru
      _
    // Predicated region
    $region10: #{gru_backbone.1} parent=1 // pred_check
      _
    $region11: #{gru_backbone.1} parent=1 // pred_check_branch
      %25 = sbr.rel (0) target = $region13
    $region12: #{gru_backbone.1} parent=1 // pred_region
      %s27 = ssub.s32 144, 144
      %28 = vsyncadd [#allocation6], %s27
      %s30 = sshll.u32 [#allocation5], 4
      %s31 = int_to_ptr.vmem [resolvable:$true] %s30
      %33 = dma.hbm_to_vmem [thread:$0]  %s2, 144, %s31, [#allocation6]
    $region13: #{gru_backbone.1} parent=1 // pred_fallthru
      _
    // Predicated region
    $region14: #{gru_backbone.1} parent=1 // pred_check
      _
    $region15: #{gru_backbone.1} parent=1 // pred_check_branch
      %35 = sbr.rel (0) target = $region17
    $region16: #{gru_backbone.1} parent=1 // pred_region
      %36 = dma.done [#allocation4], 33280
    $region17: #{gru_backbone.1} parent=1 // pred_fallthru
      _
    // Predicated region
    $region18: #{gru_backbone.1} parent=1 // pred_check
      _
    $region19: #{gru_backbone.1} parent=1 // pred_check_branch
      %38 = sbr.rel (0) target = $region21
    $region20: #{gru_backbone.1} parent=1 // pred_region
      %39 = dma.done [#allocation6], 144
    $region21: #{gru_backbone.1} parent=1 // pred_fallthru
      _
    %v40 = vld [vmem:[%s0] sm:$0xff]
    %v41 = vld [vmem:[%s0 + $0x8] sm:$0xff]
    %v42 = vld [vmem:[%s0 + $0x10] sm:$0xff]
    %v43 = vld [vmem:[%s0 + $0x18] sm:$0xff]
    %v44 = vld [vmem:[%s0 + $0x20] sm:$0xff]
    %v45 = vld [vmem:[%s0 + $0x28] sm:$0xff]
    %v46 = vld [vmem:[%s0 + $0x30] sm:$0xff]
    %v47 = vld [vmem:[%s0 + $0x38] sm:$0xff]
    %v48 = vld [vmem:[#allocation3] sm:$0xff]
    %v49 = vld [vmem:[#allocation3 + $0x8] sm:$0xff]
    %v50 = vld [vmem:[#allocation3 + $0x10] sm:$0xff]
    %v51 = vld [vmem:[#allocation5] sm:$0x7]
    %v53 = vlaneseq
    %v54 = vshrl.u32 %v53, 7
    %v55 = vsub.s32 0, %v54
    %v56 = vrot.slane %v51, %v55
    %v57 = vlaneseq
    %v58 = vshrl.u32 %v57, 7
    %v59 = vsub.s32 1, %v58
    %v60 = vrot.slane %v51, %v59
    %v61 = vlaneseq
    %v62 = vshrl.u32 %v61, 7
    %v63 = vsub.s32 2, %v62
    %v64 = vrot.slane %v51, %v63
    %vm68 = vcmask 64512
    %v70 = vsel %vm68, %v40, 0
    %v73 = vsel %vm68, %v41, 0
    %v76 = vsel %vm68, %v42, 0
    %v79 = vsel %vm68, %v43, 0
    %v82 = vsel %vm68, %v44, 0
    %v85 = vsel %vm68, %v45, 0
    %v88 = vsel %vm68, %v46, 0
    %v91 = vsel %vm68, %v47, 0
    %93 = vmatprep.subr.mxu0 %v49
    %94 = vmatpush1.msra.mxu0 %v48
    %95 = vmatprep.subr.mxu0 0.0
    %96 = vmatpush1.msra.mxu0 0.0
    %97 = vmatprep.subr.mxu0 0.0
    %98 = vmatpush1.msra.mxu0 0.0
    %99 = vmatprep.subr.mxu0 0.0
    %100 = vmatpush1.msra.mxu0 0.0
    %101 = vmatprep.subr.mxu0 0.0
    %102 = vmatpush1.msra.mxu0 0.0
    %103 = vmatprep.subr.mxu0 0.0
    %104 = vmatpush1.msra.mxu0 0.0
    %105 = vmatprep.subr.mxu0 0.0
    %106 = vmatpush1.msra.mxu0 0.0
    %107 = vmatprep.subr.mxu0 0.0
    %108 = vmatpush1.msra.mxu0 0.0
    %109 = vmatprep.subr.mxu0 0.0
    %110 = vmatpush1.msra.mxu0 0.0
    %111 = vmatprep.subr.mxu0 0.0
    %112 = vmatpush1.msra.mxu0 0.0
    %113 = vmatprep.subr.mxu0 0.0
    %114 = vmatpush1.msra.mxu0 0.0
    %115 = vmatprep.subr.mxu0 0.0
    %116 = vmatpush1.msra.mxu0 0.0
    %117 = vmatprep.subr.mxu0 0.0
    %118 = vmatpush1.msra.mxu0 0.0
    %119 = vmatprep.subr.mxu0 0.0
    %120 = vmatpush1.msra.mxu0 0.0
    %121 = vmatprep.subr.mxu0 0.0
    %122 = vmatpush1.msra.mxu0 0.0
    %123 = vmatprep.subr.mxu0 0.0
    %124 = vmatpush1.msra.mxu0 0.0
    %125 = vmatprep.subr.mxu0 0.0
    %126 = vmatpush1.msra.mxu0 0.0
    %127 = vmatprep.subr.mxu0 0.0
    %128 = vmatpush1.msra.mxu0 0.0
    %129 = vmatprep.subr.mxu0 0.0
    %130 = vmatpush1.msra.mxu0 0.0
    %131 = vmatprep.subr.mxu0 0.0
    %132 = vmatpush1.msra.mxu0 0.0
    %133 = vmatprep.subr.mxu0 0.0
    %134 = vmatpush1.msra.mxu0 0.0
    %135 = vmatprep.subr.mxu0 0.0
    %136 = vmatpush1.msra.mxu0 0.0
    %137 = vmatprep.subr.mxu0 0.0
    %138 = vmatpush1.msra.mxu0 0.0
    %139 = vmatprep.subr.mxu0 0.0
    %140 = vmatpush1.msra.mxu0 0.0
    %141 = vmatprep.subr.mxu0 0.0
    %142 = vmatpush1.msra.mxu0 0.0
    %143 = vmatprep.subr.mxu0 0.0
    %144 = vmatpush1.msra.mxu0 0.0
    %145 = vmatprep.subr.mxu0 0.0
    %146 = vmatpush1.msra.mxu0 0.0
    %147 = vmatprep.subr.mxu0 0.0
    %148 = vmatpush1.msra.mxu0 0.0
    %149 = vmatprep.subr.mxu0 0.0
    %150 = vmatpush1.msra.mxu0 0.0
    %151 = vmatprep.subr.mxu0 0.0
    %152 = vmatpush1.msra.mxu0 0.0
    %153 = vmatprep.subr.mxu0 0.0
    %154 = vmatpush1.msra.mxu0 0.0
    %155 = vmatprep.subr.mxu0 0.0
    %156 = vmatpush1.msra.mxu0 0.0
    %157 = vmatprep.mubr.f32.mxu0 0.0
    %158 = vmatmul.mubr.f32.gmra.mrb[0].mxu0 %v70
    %v159 = vpop.f32.mrb[0].mxu0
    %v160 = vadd.f32 %v56, %v159
    %v161 = vpop.f32.mrb[0].mxu0
    %v162 = vadd.f32 %v60, %v161
    %163 = vmatprep.mubr.f32.mxu0 0.0
    %164 = vmatmul.mubr.f32.gmra.mrb[0].mxu0 %v73
    %v165 = vpop.f32.mrb[0].mxu0
    %v166 = vadd.f32 %v56, %v165
    %v167 = vpop.f32.mrb[0].mxu0
    %v168 = vadd.f32 %v60, %v167
    %169 = vmatprep.mubr.f32.mxu0 0.0
    %170 = vmatmul.mubr.f32.gmra.mrb[0].mxu0 %v76
    %v171 = vpop.f32.mrb[0].mxu0
    %v172 = vadd.f32 %v56, %v171
    %v173 = vpop.f32.mrb[0].mxu0
    %v174 = vadd.f32 %v60, %v173
    %175 = vmatprep.mubr.f32.mxu0 0.0
    %176 = vmatmul.mubr.f32.gmra.mrb[0].mxu0 %v79
    %v177 = vpop.f32.mrb[0].mxu0
    %v178 = vadd.f32 %v56, %v177
    %v179 = vpop.f32.mrb[0].mxu0
    %v180 = vadd.f32 %v60, %v179
    %181 = vmatprep.mubr.f32.mxu0 0.0
    %182 = vmatmul.mubr.f32.gmra.mrb[0].mxu0 %v82
    %v183 = vpop.f32.mrb[0].mxu0
    %v184 = vadd.f32 %v56, %v183
    %v185 = vpop.f32.mrb[0].mxu0
    %v186 = vadd.f32 %v60, %v185
    %187 = vmatprep.mubr.f32.mxu0 0.0
    %188 = vmatmul.mubr.f32.gmra.mrb[0].mxu0 %v85
    %v189 = vpop.f32.mrb[0].mxu0
    %v190 = vadd.f32 %v56, %v189
    %v191 = vpop.f32.mrb[0].mxu0
    %v192 = vadd.f32 %v60, %v191
    %193 = vmatprep.mubr.f32.mxu0 0.0
    %194 = vmatmul.mubr.f32.gmra.mrb[0].mxu0 %v88
    %v195 = vpop.f32.mrb[0].mxu0
    %v196 = vadd.f32 %v56, %v195
    %v197 = vpop.f32.mrb[0].mxu0
    %v198 = vadd.f32 %v60, %v197
    %199 = vmatprep.mubr.f32.mxu0 0.0
    %200 = vmatmul.mubr.f32.gmra.mrb[0].mxu0 %v91
    %v201 = vpop.f32.mrb[0].mxu0
    %v202 = vadd.f32 %v56, %v201
    %v203 = vpop.f32.mrb[0].mxu0
    %v204 = vadd.f32 %v60, %v203
    %205 = vdwg.mxu0
    %206 = vmatprep.subr.mxu0 0.0
    %207 = vmatpush1.msra.mxu0 %v50
    %208 = vmatprep.subr.mxu0 0.0
    %209 = vmatpush1.msra.mxu0 0.0
    %210 = vmatprep.subr.mxu0 0.0
    %211 = vmatpush1.msra.mxu0 0.0
    %212 = vmatprep.subr.mxu0 0.0
    %213 = vmatpush1.msra.mxu0 0.0
    %214 = vmatprep.subr.mxu0 0.0
    %215 = vmatpush1.msra.mxu0 0.0
    %216 = vmatprep.subr.mxu0 0.0
    %217 = vmatpush1.msra.mxu0 0.0
    %218 = vmatprep.subr.mxu0 0.0
    %219 = vmatpush1.msra.mxu0 0.0
    %220 = vmatprep.subr.mxu0 0.0
    %221 = vmatpush1.msra.mxu0 0.0
    %222 = vmatprep.subr.mxu0 0.0
    %223 = vmatpush1.msra.mxu0 0.0
    %224 = vmatprep.subr.mxu0 0.0
    %225 = vmatpush1.msra.mxu0 0.0
    %226 = vmatprep.subr.mxu0 0.0
    %227 = vmatpush1.msra.mxu0 0.0
    %228 = vmatprep.subr.mxu0 0.0
    %229 = vmatpush1.msra.mxu0 0.0
    %230 = vmatprep.subr.mxu0 0.0
    %231 = vmatpush1.msra.mxu0 0.0
    %232 = vmatprep.subr.mxu0 0.0
    %233 = vmatpush1.msra.mxu0 0.0
    %234 = vmatprep.subr.mxu0 0.0
    %235 = vmatpush1.msra.mxu0 0.0
    %236 = vmatprep.subr.mxu0 0.0
    %237 = vmatpush1.msra.mxu0 0.0
    %238 = vmatprep.subr.mxu0 0.0
    %239 = vmatpush1.msra.mxu0 0.0
    %240 = vmatprep.subr.mxu0 0.0
    %241 = vmatpush1.msra.mxu0 0.0
    %242 = vmatprep.subr.mxu0 0.0
    %243 = vmatpush1.msra.mxu0 0.0
    %244 = vmatprep.subr.mxu0 0.0
    %245 = vmatpush1.msra.mxu0 0.0
    %246 = vmatprep.subr.mxu0 0.0
    %247 = vmatpush1.msra.mxu0 0.0
    %248 = vmatprep.subr.mxu0 0.0
    %249 = vmatpush1.msra.mxu0 0.0
    %250 = vmatprep.subr.mxu0 0.0
    %251 = vmatpush1.msra.mxu0 0.0
    %252 = vmatprep.subr.mxu0 0.0
    %253 = vmatpush1.msra.mxu0 0.0
    %254 = vmatprep.subr.mxu0 0.0
    %255 = vmatpush1.msra.mxu0 0.0
    %256 = vmatprep.subr.mxu0 0.0
    %257 = vmatpush1.msra.mxu0 0.0
    %258 = vmatprep.subr.mxu0 0.0
    %259 = vmatpush1.msra.mxu0 0.0
    %260 = vmatprep.subr.mxu0 0.0
    %261 = vmatpush1.msra.mxu0 0.0
    %262 = vmatprep.subr.mxu0 0.0
    %263 = vmatpush1.msra.mxu0 0.0
    %264 = vmatprep.subr.mxu0 0.0
    %265 = vmatpush1.msra.mxu0 0.0
    %266 = vmatprep.subr.mxu0 0.0
    %267 = vmatpush1.msra.mxu0 0.0
    %268 = vmatprep.subr.mxu0 0.0
    %269 = vmatpush1.msra.mxu0 0.0
    %270 = vmatprep.mubr.f32.mxu0 0.0
    %271 = vmatmul.mubr.f32.gmra.mrb[0].mxu0 %v70
    %v272 = vpop.f32.mrb[0].mxu0
    %v273 = vadd.f32 %v64, %v272
    %v274 = vpop.f32.mrb[0].mxu0
    %275 = vmatprep.mubr.f32.mxu0 0.0
    %276 = vmatmul.mubr.f32.gmra.mrb[0].mxu0 %v73
    %v277 = vpop.f32.mrb[0].mxu0
    %v278 = vadd.f32 %v64, %v277
    %v279 = vpop.f32.mrb[0].mxu0
    %280 = vmatprep.mubr.f32.mxu0 0.0
    %281 = vmatmul.mubr.f32.gmra.mrb[0].mxu0 %v76
    %v282 = vpop.f32.mrb[0].mxu0
    %v283 = vadd.f32 %v64, %v282
    %v284 = vpop.f32.mrb[0].mxu0
    %285 = vmatprep.mubr.f32.mxu0 0.0
    %286 = vmatmul.mubr.f32.gmra.mrb[0].mxu0 %v79
    %v287 = vpop.f32.mrb[0].mxu0
    %v288 = vadd.f32 %v64, %v287
    %v289 = vpop.f32.mrb[0].mxu0
    %290 = vmatprep.mubr.f32.mxu0 0.0
    %291 = vmatmul.mubr.f32.gmra.mrb[0].mxu0 %v82
    %v292 = vpop.f32.mrb[0].mxu0
    %v293 = vadd.f32 %v64, %v292
    %v294 = vpop.f32.mrb[0].mxu0
    %295 = vmatprep.mubr.f32.mxu0 0.0
    %296 = vmatmul.mubr.f32.gmra.mrb[0].mxu0 %v85
    %v297 = vpop.f32.mrb[0].mxu0
    %v298 = vadd.f32 %v64, %v297
    %v299 = vpop.f32.mrb[0].mxu0
    %300 = vmatprep.mubr.f32.mxu0 0.0
    %301 = vmatmul.mubr.f32.gmra.mrb[0].mxu0 %v88
    %v302 = vpop.f32.mrb[0].mxu0
    %v303 = vadd.f32 %v64, %v302
    %v304 = vpop.f32.mrb[0].mxu0
    %305 = vmatprep.mubr.f32.mxu0 0.0
    %306 = vmatmul.mubr.f32.gmra.mrb[0].mxu0 %v91
    %v307 = vpop.f32.mrb[0].mxu0
    %v308 = vadd.f32 %v64, %v307
    %v309 = vpop.f32.mrb[0].mxu0
    %310 = vdwg.mxu0
    %311 = vst [vmem:[#allocation2] sm:$0xff] %v160
    %312 = vst [vmem:[#allocation2 + $0x8] sm:$0xff] %v162
    %313 = vst [vmem:[#allocation2 + $0x10] sm:$0xff] %v273
    %314 = vst [vmem:[#allocation2 + $0x18] sm:$0xff] %v166
    %315 = vst [vmem:[#allocation2 + $0x20] sm:$0xff] %v168
    %316 = vst [vmem:[#allocation2 + $0x28] sm:$0xff] %v278
    %317 = vst [vmem:[#allocation2 + $0x30] sm:$0xff] %v172
    %318 = vst [vmem:[#allocation2 + $0x38] sm:$0xff] %v174
    %319 = vst [vmem:[#allocation2 + $0x40] sm:$0xff] %v283
    %320 = vst [vmem:[#allocation2 + $0x48] sm:$0xff] %v178
    %321 = vst [vmem:[#allocation2 + $0x50] sm:$0xff] %v180
    %322 = vst [vmem:[#allocation2 + $0x58] sm:$0xff] %v288
    %323 = vst [vmem:[#allocation2 + $0x60] sm:$0xff] %v184
    %324 = vst [vmem:[#allocation2 + $0x68] sm:$0xff] %v186
    %325 = vst [vmem:[#allocation2 + $0x70] sm:$0xff] %v293
    %326 = vst [vmem:[#allocation2 + $0x78] sm:$0xff] %v190
    %327 = vst [vmem:[#allocation2 + $0x80] sm:$0xff] %v192
    %328 = vst [vmem:[#allocation2 + $0x88] sm:$0xff] %v298
    %329 = vst [vmem:[#allocation2 + $0x90] sm:$0xff] %v196
    %330 = vst [vmem:[#allocation2 + $0x98] sm:$0xff] %v198
    %331 = vst [vmem:[#allocation2 + $0xa0] sm:$0xff] %v303
    %332 = vst [vmem:[#allocation2 + $0xa8] sm:$0xff] %v202
    %333 = vst [vmem:[#allocation2 + $0xb0] sm:$0xff] %v204
    %334 = vst [vmem:[#allocation2 + $0xb8] sm:$0xff] %v308
    %v335 = vld [vmem:[#allocation5 + $0x3] sm:$0x1]
    %v337 = vlaneseq
    %v338 = vshrl.u32 %v337, 7
    %v339 = vsub.s32 0, %v338
    %v340 = vrot.slane %v335, %v339
    %v342 = vld [vmem:[#allocation5 + $0x4] sm:$0xf]
    %v344 = vlaneseq
    %v345 = vshrl.u32 %v344, 7
    %v346 = vsub.s32 0, %v345
    %v347 = vrot.slane %v342, %v346
    %v348 = vlaneseq
    %v349 = vshrl.u32 %v348, 7
    %v350 = vsub.s32 1, %v349
    %v351 = vrot.slane %v342, %v350
    %v352 = vlaneseq
    %v353 = vshrl.u32 %v352, 7
    %v354 = vsub.s32 2, %v353
    %v355 = vrot.slane %v342, %v354
    %v356 = vlaneseq
    %v357 = vshrl.u32 %v356, 7
    %v358 = vsub.s32 3, %v357
    %v359 = vrot.slane %v342, %v358
    %v364 = vld [vmem:[#allocation2] sm:$0xff]
    %v365 = vld [vmem:[#allocation2 + $0x8] sm:$0xff]
    %v366 = vld [vmem:[#allocation2 + $0x10] sm:$0xff]
    %v367 = vld [vmem:[#allocation3 + $0x20] sm:$0xff]
    %v368 = vld [vmem:[#allocation3 + $0x28] sm:$0xff]
    %v369 = vld [vmem:[#allocation3 + $0x30] sm:$0xff]
    %v370 = vld [vmem:[#allocation3 + $0x40] sm:$0xff]
    %v371 = vld [vmem:[#allocation3 + $0x48] sm:$0xff]
    %v372 = vld [vmem:[#allocation3 + $0x50] sm:$0xff]
    %v373 = vld [vmem:[#allocation3 + $0x60] sm:$0xff]
    %v374 = vld [vmem:[#allocation3 + $0x68] sm:$0xff]
    %v375 = vld [vmem:[#allocation3 + $0x70] sm:$0xff]
    %v376 = vld [vmem:[#allocation3 + $0x80] sm:$0xff]
    %v377 = vld [vmem:[#allocation3 + $0x88] sm:$0xff]
    %v378 = vld [vmem:[#allocation3 + $0x90] sm:$0xff]
    %v379 = vld [vmem:[#allocation3 + $0xa0] sm:$0xff]
    %v380 = vld [vmem:[#allocation3 + $0xa8] sm:$0xff]
    %v381 = vld [vmem:[#allocation3 + $0xb0] sm:$0xff]
    %v382 = vld [vmem:[#allocation3 + $0xc0] sm:$0xff]
    %v383 = vld [vmem:[#allocation3 + $0xc8] sm:$0xff]
    %v384 = vld [vmem:[#allocation3 + $0xd0] sm:$0xff]
    %v385 = vld [vmem:[#allocation3 + $0xe0] sm:$0xff]
    %v386 = vld [vmem:[#allocation3 + $0xe8] sm:$0xff]
    %v387 = vld [vmem:[#allocation3 + $0xf0] sm:$0xff]
    %v388 = vld [vmem:[#allocation3 + $0x100] sm:$0xff]
    %v389 = vld [vmem:[#allocation3 + $0x108] sm:$0xff]
    %v390 = vld [vmem:[#allocation3 + $0x110] sm:$0xff]
    %v391 = vld [vmem:[#allocation3 + $0x120] sm:$0xff]
    %v392 = vld [vmem:[#allocation3 + $0x128] sm:$0xff]
    %v393 = vld [vmem:[#allocation3 + $0x130] sm:$0xff]
    %v394 = vld [vmem:[#allocation3 + $0x140] sm:$0xff]
    %v395 = vld [vmem:[#allocation3 + $0x148] sm:$0xff]
    %v396 = vld [vmem:[#allocation3 + $0x150] sm:$0xff]
    %v397 = vld [vmem:[#allocation3 + $0x160] sm:$0xff]
    %v398 = vld [vmem:[#allocation3 + $0x168] sm:$0xff]
    %v399 = vld [vmem:[#allocation3 + $0x170] sm:$0xff]
    %v400 = vld [vmem:[#allocation3 + $0x180] sm:$0xff]
    %v401 = vld [vmem:[#allocation3 + $0x188] sm:$0xff]
    %v402 = vld [vmem:[#allocation3 + $0x190] sm:$0xff]
    %v403 = vld [vmem:[#allocation3 + $0x1a0] sm:$0xff]
    %v404 = vld [vmem:[#allocation3 + $0x1a8] sm:$0xff]
    %v405 = vld [vmem:[#allocation3 + $0x1b0] sm:$0xff]
    %v406 = vld [vmem:[#allocation3 + $0x1c0] sm:$0xff]
    %v407 = vld [vmem:[#allocation3 + $0x1c8] sm:$0xff]
    %v408 = vld [vmem:[#allocation3 + $0x1d0] sm:$0xff]
    %v409 = vld [vmem:[#allocation3 + $0x1e0] sm:$0xff]
    %v410 = vld [vmem:[#allocation3 + $0x1e8] sm:$0xff]
    %v411 = vld [vmem:[#allocation3 + $0x1f0] sm:$0xff]
    %v412 = vld [vmem:[#allocation3 + $0x200] sm:$0xff]
    %v413 = vld [vmem:[#allocation3 + $0x208] sm:$0xff]
    %v414 = vld [vmem:[#allocation3 + $0x210] sm:$0xff]
    %415 = vmatprep.subr.mxu0 %v368
    %416 = vmatpush1.msra.mxu0 %v367
    %417 = vmatprep.subr.mxu0 %v371
    %418 = vmatpush1.msra.mxu0 %v370
    %419 = vmatprep.subr.mxu0 %v374
    %420 = vmatpush1.msra.mxu0 %v373
    %421 = vmatprep.subr.mxu0 %v377
    %422 = vmatpush1.msra.mxu0 %v376
    %423 = vmatprep.subr.mxu0 %v380
    %424 = vmatpush1.msra.mxu0 %v379
    %425 = vmatprep.subr.mxu0 %v383
    %426 = vmatpush1.msra.mxu0 %v382
    %427 = vmatprep.subr.mxu0 %v386
    %428 = vmatpush1.msra.mxu0 %v385
    %429 = vmatprep.subr.mxu0 %v389
    %430 = vmatpush1.msra.mxu0 %v388
    %431 = vmatprep.subr.mxu0 %v392
    %432 = vmatpush1.msra.mxu0 %v391
    %433 = vmatprep.subr.mxu0 %v395
    %434 = vmatpush1.msra.mxu0 %v394
    %435 = vmatprep.subr.mxu0 %v398
    %436 = vmatpush1.msra.mxu0 %v397
    %437 = vmatprep.subr.mxu0 %v401
    %438 = vmatpush1.msra.mxu0 %v400
    %439 = vmatprep.subr.mxu0 %v404
    %440 = vmatpush1.msra.mxu0 %v403
    %441 = vmatprep.subr.mxu0 %v407
    %442 = vmatpush1.msra.mxu0 %v406
    %443 = vmatprep.subr.mxu0 %v410
    %444 = vmatpush1.msra.mxu0 %v409
    %445 = vmatprep.subr.mxu0 %v413
    %446 = vmatpush1.msra.mxu0 %v412
    %447 = vmatprep.subr.mxu0 0.0
    %448 = vmatpush1.msra.mxu0 0.0
    %449 = vmatprep.subr.mxu0 0.0
    %450 = vmatpush1.msra.mxu0 0.0
    %451 = vmatprep.subr.mxu0 0.0
    %452 = vmatpush1.msra.mxu0 0.0
    %453 = vmatprep.subr.mxu0 0.0
    %454 = vmatpush1.msra.mxu0 0.0
    %455 = vmatprep.subr.mxu0 0.0
    %456 = vmatpush1.msra.mxu0 0.0
    %457 = vmatprep.subr.mxu0 0.0
    %458 = vmatpush1.msra.mxu0 0.0
    %459 = vmatprep.subr.mxu0 0.0
    %460 = vmatpush1.msra.mxu0 0.0
    %461 = vmatprep.subr.mxu0 0.0
    %462 = vmatpush1.msra.mxu0 0.0
    %463 = vmatprep.subr.mxu0 0.0
    %464 = vmatpush1.msra.mxu0 0.0
    %465 = vmatprep.subr.mxu0 0.0
    %466 = vmatpush1.msra.mxu0 0.0
    %467 = vmatprep.subr.mxu0 0.0
    %468 = vmatpush1.msra.mxu0 0.0
    %469 = vmatprep.subr.mxu0 0.0
    %470 = vmatpush1.msra.mxu0 0.0
    %471 = vmatprep.subr.mxu0 0.0
    %472 = vmatpush1.msra.mxu0 0.0
    %473 = vmatprep.subr.mxu0 0.0
    %474 = vmatpush1.msra.mxu0 0.0
    %475 = vmatprep.subr.mxu0 0.0
    %476 = vmatpush1.msra.mxu0 0.0
    %477 = vmatprep.subr.mxu0 0.0
    %478 = vmatpush1.msra.mxu0 0.0
    %479 = vmatprep.mubr.f32.mxu0 0.0
    %480 = vmatmul.mubr.f32.gmra.mrb[0].mxu0 0.0
    %v481 = vpop.f32.mrb[0].mxu0
    %v482 = vadd.f32 0.0, %v481
    %v483 = vpop.f32.mrb[0].mxu0
    %v484 = vadd.f32 0.0, %v483
    %485 = vdwg.mxu0
    %486 = vmatprep.subr.mxu0 0.0
    %487 = vmatpush1.msra.mxu0 %v369
    %488 = vmatprep.subr.mxu0 0.0
    %489 = vmatpush1.msra.mxu0 %v372
    %490 = vmatprep.subr.mxu0 0.0
    %491 = vmatpush1.msra.mxu0 %v375
    %492 = vmatprep.subr.mxu0 0.0
    %493 = vmatpush1.msra.mxu0 %v378
    %494 = vmatprep.subr.mxu0 0.0
    %495 = vmatpush1.msra.mxu0 %v381
    %496 = vmatprep.subr.mxu0 0.0
    %497 = vmatpush1.msra.mxu0 %v384
    %498 = vmatprep.subr.mxu0 0.0
    %499 = vmatpush1.msra.mxu0 %v387
    %500 = vmatprep.subr.mxu0 0.0
    %501 = vmatpush1.msra.mxu0 %v390
    %502 = vmatprep.subr.mxu0 0.0
    %503 = vmatpush1.msra.mxu0 %v393
    %504 = vmatprep.subr.mxu0 0.0
    %505 = vmatpush1.msra.mxu0 %v396
    %506 = vmatprep.subr.mxu0 0.0
    %507 = vmatpush1.msra.mxu0 %v399
    %508 = vmatprep.subr.mxu0 0.0
    %509 = vmatpush1.msra.mxu0 %v402
    %510 = vmatprep.subr.mxu0 0.0
    %511 = vmatpush1.msra.mxu0 %v405
    %512 = vmatprep.subr.mxu0 0.0
    %513 = vmatpush1.msra.mxu0 %v408
    %514 = vmatprep.subr.mxu0 0.0
    %515 = vmatpush1.msra.mxu0 %v411
    %516 = vmatprep.subr.mxu0 0.0
    %517 = vmatpush1.msra.mxu0 %v414
    %518 = vmatprep.subr.mxu0 0.0
    %519 = vmatpush1.msra.mxu0 0.0
    %520 = vmatprep.subr.mxu0 0.0
    %521 = vmatpush1.msra.mxu0 0.0
    %522 = vmatprep.subr.mxu0 0.0
    %523 = vmatpush1.msra.mxu0 0.0
    %524 = vmatprep.subr.mxu0 0.0
    %525 = vmatpush1.msra.mxu0 0.0
    %526 = vmatprep.subr.mxu0 0.0
    %527 = vmatpush1.msra.mxu0 0.0
    %528 = vmatprep.subr.mxu0 0.0
    %529 = vmatpush1.msra.mxu0 0.0
    %530 = vmatprep.subr.mxu0 0.0
    %531 = vmatpush1.msra.mxu0 0.0
    %532 = vmatprep.subr.mxu0 0.0
    %533 = vmatpush1.msra.mxu0 0.0
    %534 = vmatprep.subr.mxu0 0.0
    %535 = vmatpush1.msra.mxu0 0.0
    %536 = vmatprep.subr.mxu0 0.0
    %537 = vmatpush1.msra.mxu0 0.0
    %538 = vmatprep.subr.mxu0 0.0
    %539 = vmatpush1.msra.mxu0 0.0
    %540 = vmatprep.subr.mxu0 0.0
    %541 = vmatpush1.msra.mxu0 0.0
    %542 = vmatprep.subr.mxu0 0.0
    %543 = vmatpush1.msra.mxu0 0.0
    %544 = vmatprep.subr.mxu0 0.0
    %545 = vmatpush1.msra.mxu0 0.0
    %546 = vmatprep.subr.mxu0 0.0
    %547 = vmatpush1.msra.mxu0 0.0
    %548 = vmatprep.subr.mxu0 0.0
    %549 = vmatpush1.msra.mxu0 0.0
    %550 = vmatprep.mubr.f32.mxu0 0.0
    %551 = vmatmul.mubr.f32.gmra.mrb[0].mxu0 0.0
    %v552 = vpop.f32.mrb[0].mxu0
    %v553 = vadd.f32 0.0, %v552
    %v554 = vpop.f32.mrb[0].mxu0
    %555 = vdwg.mxu0
    %v556 = vadd.f32 %v364, %v482
    %v557 = vadd.f32 %v365, %v484
    %v558 = vxor.u32 %v556, 2147483648
    %v559 = vxor.u32 %v557, 2147483648
    %v560 = vmul.f32 %v558, 1.442695
    %v561 = vpow.pop %v560
    %v562 = vmul.f32 %v559, 1.442695
    %v563 = vpow.pop %v562
    %v564 = vadd.f32 %v561, 1.0
    %v565 = vadd.f32 %v563, 1.0
    %v566 = vrcp.pop %v564
    %v567 = vmul.f32 1.0, %v566
    %v568 = vrcp.pop %v565
    %v569 = vmul.f32 1.0, %v568
    %v570 = vadd.f32 %v553, %v340
    %v571 = vmul.f32 %v567, %v570
    %v572 = vadd.f32 %v366, %v571
    %v573 = vtanh.pop %v572
    %v574 = vsub.f32 1.0, %v569
    %v575 = vmul.f32 %v574, %v573
    %v576 = vmul.f32 %v569, 0.0
    %v577 = vadd.f32 %v575, %v576
    %v578 = vld [vmem:[#allocation3 + $0x220] sm:$0xff]
    %v579 = vld [vmem:[#allocation3 + $0x228] sm:$0xff]
    %v580 = vld [vmem:[#allocation3 + $0x230] sm:$0xff]
    %v581 = vld [vmem:[#allocation3 + $0x238] sm:$0xff]
    %v582 = vld [vmem:[#allocation3 + $0x240] sm:$0xff]
    %v583 = vld [vmem:[#allocation3 + $0x248] sm:$0xff]
    %v584 = vld [vmem:[#allocation3 + $0x250] sm:$0xff]
    %v585 = vld [vmem:[#allocation3 + $0x258] sm:$0xff]
    %v586 = vld [vmem:[#allocation3 + $0x260] sm:$0xff]
    %v587 = vld [vmem:[#allocation3 + $0x268] sm:$0xff]
    %v588 = vld [vmem:[#allocation3 + $0x270] sm:$0xff]
    %v589 = vld [vmem:[#allocation3 + $0x278] sm:$0xff]
    %v590 = vld [vmem:[#allocation3 + $0x280] sm:$0xff]
    %v591 = vld [vmem:[#allocation3 + $0x288] sm:$0xff]
    %v592 = vld [vmem:[#allocation3 + $0x290] sm:$0xff]
    %v593 = vld [vmem:[#allocation3 + $0x298] sm:$0xff]
    %v594 = vld [vmem:[#allocation3 + $0x2a0] sm:$0xff]
    %v595 = vld [vmem:[#allocation3 + $0x2a8] sm:$0xff]
    %v596 = vld [vmem:[#allocation3 + $0x2b0] sm:$0xff]
    %v597 = vld [vmem:[#allocation3 + $0x2b8] sm:$0xff]
    %v598 = vld [vmem:[#allocation3 + $0x2c0] sm:$0xff]
    %v599 = vld [vmem:[#allocation3 + $0x2c8] sm:$0xff]
    %v600 = vld [vmem:[#allocation3 + $0x2d0] sm:$0xff]
    %v601 = vld [vmem:[#allocation3 + $0x2d8] sm:$0xff]
    %v602 = vld [vmem:[#allocation3 + $0x2e0] sm:$0xff]
    %v603 = vld [vmem:[#allocation3 + $0x2e8] sm:$0xff]
    %v604 = vld [vmem:[#allocation3 + $0x2f0] sm:$0xff]
    %v605 = vld [vmem:[#allocation3 + $0x2f8] sm:$0xff]
    %v606 = vld [vmem:[#allocation3 + $0x300] sm:$0xff]
    %v607 = vld [vmem:[#allocation3 + $0x308] sm:$0xff]
    %v608 = vld [vmem:[#allocation3 + $0x310] sm:$0xff]
    %v609 = vld [vmem:[#allocation3 + $0x318] sm:$0xff]
    %v610 = vld [vmem:[#allocation3 + $0x320] sm:$0xff]
    %v611 = vld [vmem:[#allocation3 + $0x328] sm:$0xff]
    %v612 = vld [vmem:[#allocation3 + $0x330] sm:$0xff]
    %v613 = vld [vmem:[#allocation3 + $0x338] sm:$0xff]
    %v614 = vld [vmem:[#allocation3 + $0x340] sm:$0xff]
    %v615 = vld [vmem:[#allocation3 + $0x348] sm:$0xff]
    %v616 = vld [vmem:[#allocation3 + $0x350] sm:$0xff]
    %v617 = vld [vmem:[#allocation3 + $0x358] sm:$0xff]
    %v618 = vld [vmem:[#allocation3 + $0x360] sm:$0xff]
    %v619 = vld [vmem:[#allocation3 + $0x368] sm:$0xff]
    %v620 = vld [vmem:[#allocation3 + $0x370] sm:$0xff]
    %v621 = vld [vmem:[#allocation3 + $0x378] sm:$0xff]
    %v622 = vld [vmem:[#allocation3 + $0x380] sm:$0xff]
    %v623 = vld [vmem:[#allocation3 + $0x388] sm:$0xff]
    %v624 = vld [vmem:[#allocation3 + $0x390] sm:$0xff]
    %v625 = vld [vmem:[#allocation3 + $0x398] sm:$0xff]
    %v626 = vld [vmem:[#allocation3 + $0x3a0] sm:$0xff]
    %v627 = vld [vmem:[#allocation3 + $0x3a8] sm:$0xff]
    %v628 = vld [vmem:[#allocation3 + $0x3b0] sm:$0xff]
    %v629 = vld [vmem:[#allocation3 + $0x3b8] sm:$0xff]
    %v630 = vld [vmem:[#allocation3 + $0x3c0] sm:$0xff]
    %v631 = vld [vmem:[#allocation3 + $0x3c8] sm:$0xff]
    %v632 = vld [vmem:[#allocation3 + $0x3d0] sm:$0xff]
    %v633 = vld [vmem:[#allocation3 + $0x3d8] sm:$0xff]
    %v634 = vld [vmem:[#allocation3 + $0x3e0] sm:$0xff]
    %v635 = vld [vmem:[#allocation3 + $0x3e8] sm:$0xff]
    %v636 = vld [vmem:[#allocation3 + $0x3f0] sm:$0xff]
    %v637 = vld [vmem:[#allocation3 + $0x3f8] sm:$0xff]
    %v638 = vld [vmem:[#allocation3 + $0x400] sm:$0xff]
    %v639 = vld [vmem:[#allocation3 + $0x408] sm:$0xff]
    %v640 = vld [vmem:[#allocation3 + $0x410] sm:$0xff]
    %v641 = vld [vmem:[#allocation3 + $0x418] sm:$0xff]
    %v642 = vld [vmem:[#allocation3 + $0x420] sm:$0xff]
    %v643 = vld [vmem:[#allocation3 + $0x428] sm:$0xff]
    %v644 = vld [vmem:[#allocation3 + $0x430] sm:$0xff]
    %v645 = vld [vmem:[#allocation3 + $0x438] sm:$0xff]
    %v646 = vld [vmem:[#allocation3 + $0x440] sm:$0xff]
    %v647 = vld [vmem:[#allocation3 + $0x448] sm:$0xff]
    %v648 = vld [vmem:[#allocation3 + $0x450] sm:$0xff]
    %v649 = vld [vmem:[#allocation3 + $0x458] sm:$0xff]
    %v650 = vld [vmem:[#allocation3 + $0x460] sm:$0xff]
    %v651 = vld [vmem:[#allocation3 + $0x468] sm:$0xff]
    %v652 = vld [vmem:[#allocation3 + $0x470] sm:$0xff]
    %v653 = vld [vmem:[#allocation3 + $0x478] sm:$0xff]
    %v654 = vld [vmem:[#allocation3 + $0x480] sm:$0xff]
    %v655 = vld [vmem:[#allocation3 + $0x488] sm:$0xff]
    %v656 = vld [vmem:[#allocation3 + $0x490] sm:$0xff]
    %v657 = vld [vmem:[#allocation3 + $0x498] sm:$0xff]
    %v658 = vld [vmem:[#allocation3 + $0x4a0] sm:$0xff]
    %v659 = vld [vmem:[#allocation3 + $0x4a8] sm:$0xff]
    %v660 = vld [vmem:[#allocation3 + $0x4b0] sm:$0xff]
    %v661 = vld [vmem:[#allocation3 + $0x4b8] sm:$0xff]
    %v662 = vld [vmem:[#allocation3 + $0x4c0] sm:$0xff]
    %v663 = vld [vmem:[#allocation3 + $0x4c8] sm:$0xff]
    %v664 = vld [vmem:[#allocation3 + $0x4d0] sm:$0xff]
    %v665 = vld [vmem:[#allocation3 + $0x4d8] sm:$0xff]
    %v666 = vld [vmem:[#allocation3 + $0x4e0] sm:$0xff]
    %v667 = vld [vmem:[#allocation3 + $0x4e8] sm:$0xff]
    %v668 = vld [vmem:[#allocation3 + $0x4f0] sm:$0xff]
    %v669 = vld [vmem:[#allocation3 + $0x4f8] sm:$0xff]
    %v670 = vld [vmem:[#allocation3 + $0x500] sm:$0xff]
    %v671 = vld [vmem:[#allocation3 + $0x508] sm:$0xff]
    %v672 = vld [vmem:[#allocation3 + $0x510] sm:$0xff]
    %v673 = vld [vmem:[#allocation3 + $0x518] sm:$0xff]
    %v674 = vld [vmem:[#allocation3 + $0x520] sm:$0xff]
    %v675 = vld [vmem:[#allocation3 + $0x528] sm:$0xff]
    %v676 = vld [vmem:[#allocation3 + $0x530] sm:$0xff]
    %v677 = vld [vmem:[#allocation3 + $0x538] sm:$0xff]
    %v678 = vld [vmem:[#allocation3 + $0x540] sm:$0xff]
    %v679 = vld [vmem:[#allocation3 + $0x548] sm:$0xff]
    %v680 = vld [vmem:[#allocation3 + $0x550] sm:$0xff]
    %v681 = vld [vmem:[#allocation3 + $0x558] sm:$0xff]
    %v682 = vld [vmem:[#allocation3 + $0x560] sm:$0xff]
    %v683 = vld [vmem:[#allocation3 + $0x568] sm:$0xff]
    %v684 = vld [vmem:[#allocation3 + $0x570] sm:$0xff]
    %v685 = vld [vmem:[#allocation3 + $0x578] sm:$0xff]
    %v686 = vld [vmem:[#allocation3 + $0x580] sm:$0xff]
    %v687 = vld [vmem:[#allocation3 + $0x588] sm:$0xff]
    %v688 = vld [vmem:[#allocation3 + $0x590] sm:$0xff]
    %v689 = vld [vmem:[#allocation3 + $0x598] sm:$0xff]
    %v690 = vld [vmem:[#allocation3 + $0x5a0] sm:$0xff]
    %v691 = vld [vmem:[#allocation3 + $0x5a8] sm:$0xff]
    %v692 = vld [vmem:[#allocation3 + $0x5b0] sm:$0xff]
    %v693 = vld [vmem:[#allocation3 + $0x5b8] sm:$0xff]
    %v694 = vld [vmem:[#allocation3 + $0x5c0] sm:$0xff]
    %v695 = vld [vmem:[#allocation3 + $0x5c8] sm:$0xff]
    %v696 = vld [vmem:[#allocation3 + $0x5d0] sm:$0xff]
    %v697 = vld [vmem:[#allocation3 + $0x5d8] sm:$0xff]
    %v698 = vld [vmem:[#allocation3 + $0x5e0] sm:$0xff]
    %v699 = vld [vmem:[#allocation3 + $0x5e8] sm:$0xff]
    %v700 = vld [vmem:[#allocation3 + $0x5f0] sm:$0xff]
    %v701 = vld [vmem:[#allocation3 + $0x5f8] sm:$0xff]
    %v702 = vld [vmem:[#allocation3 + $0x600] sm:$0xff]
    %v703 = vld [vmem:[#allocation3 + $0x608] sm:$0xff]
    %v704 = vld [vmem:[#allocation3 + $0x610] sm:$0xff]
    %v705 = vld [vmem:[#allocation3 + $0x618] sm:$0xff]
    %706 = vmatprep.subr.mxu0 %v579
    %707 = vmatpush1.msra.mxu0 %v578
    %708 = vmatprep.subr.mxu0 %v583
    %709 = vmatpush1.msra.mxu0 %v582
    %710 = vmatprep.subr.mxu0 %v587
    %711 = vmatpush1.msra.mxu0 %v586
    %712 = vmatprep.subr.mxu0 %v591
    %713 = vmatpush1.msra.mxu0 %v590
    %714 = vmatprep.subr.mxu0 %v595
    %715 = vmatpush1.msra.mxu0 %v594
    %716 = vmatprep.subr.mxu0 %v599
    %717 = vmatpush1.msra.mxu0 %v598
    %718 = vmatprep.subr.mxu0 %v603
    %719 = vmatpush1.msra.mxu0 %v602
    %720 = vmatprep.subr.mxu0 %v607
    %721 = vmatpush1.msra.mxu0 %v606
    %722 = vmatprep.subr.mxu0 %v611
    %723 = vmatpush1.msra.mxu0 %v610
    %724 = vmatprep.subr.mxu0 %v615
    %725 = vmatpush1.msra.mxu0 %v614
    %726 = vmatprep.subr.mxu0 %v619
    %727 = vmatpush1.msra.mxu0 %v618
    %728 = vmatprep.subr.mxu0 %v623
    %729 = vmatpush1.msra.mxu0 %v622
    %730 = vmatprep.subr.mxu0 %v627
    %731 = vmatpush1.msra.mxu0 %v626
    %732 = vmatprep.subr.mxu0 %v631
    %733 = vmatpush1.msra.mxu0 %v630
    %734 = vmatprep.subr.mxu0 %v635
    %735 = vmatpush1.msra.mxu0 %v634
    %736 = vmatprep.subr.mxu0 %v639
    %737 = vmatpush1.msra.mxu0 %v638
    %738 = vmatprep.subr.mxu0 %v643
    %739 = vmatpush1.msra.mxu0 %v642
    %740 = vmatprep.subr.mxu0 %v647
    %741 = vmatpush1.msra.mxu0 %v646
    %742 = vmatprep.subr.mxu0 %v651
    %743 = vmatpush1.msra.mxu0 %v650
    %744 = vmatprep.subr.mxu0 %v655
    %745 = vmatpush1.msra.mxu0 %v654
    %746 = vmatprep.subr.mxu0 %v659
    %747 = vmatpush1.msra.mxu0 %v658
    %748 = vmatprep.subr.mxu0 %v663
    %749 = vmatpush1.msra.mxu0 %v662
    %750 = vmatprep.subr.mxu0 %v667
    %751 = vmatpush1.msra.mxu0 %v666
    %752 = vmatprep.subr.mxu0 %v671
    %753 = vmatpush1.msra.mxu0 %v670
    %754 = vmatprep.subr.mxu0 %v675
    %755 = vmatpush1.msra.mxu0 %v674
    %756 = vmatprep.subr.mxu0 %v679
    %757 = vmatpush1.msra.mxu0 %v678
    %758 = vmatprep.subr.mxu0 %v683
    %759 = vmatpush1.msra.mxu0 %v682
    %760 = vmatprep.subr.mxu0 %v687
    %761 = vmatpush1.msra.mxu0 %v686
    %762 = vmatprep.subr.mxu0 %v691
    %763 = vmatpush1.msra.mxu0 %v690
    %764 = vmatprep.subr.mxu0 %v695
    %765 = vmatpush1.msra.mxu0 %v694
    %766 = vmatprep.subr.mxu0 %v699
    %767 = vmatpush1.msra.mxu0 %v698
    %768 = vmatprep.subr.mxu0 %v703
    %769 = vmatpush1.msra.mxu0 %v702
    %770 = vmatprep.mubr.f32.mxu0 0.0
    %771 = vmatmul.mubr.f32.gmra.mrb[0].mxu0 %v577
    %v772 = vpop.f32.mrb[0].mxu0
    %v773 = vadd.f32 %v347, %v772
    %v774 = vpop.f32.mrb[0].mxu0
    %v775 = vadd.f32 %v351, %v774
    %776 = vdwg.mxu0
    %777 = vmatprep.subr.mxu0 %v581
    %778 = vmatpush1.msra.mxu0 %v580
    %779 = vmatprep.subr.mxu0 %v585
    %780 = vmatpush1.msra.mxu0 %v584
    %781 = vmatprep.subr.mxu0 %v589
    %782 = vmatpush1.msra.mxu0 %v588
    %783 = vmatprep.subr.mxu0 %v593
    %784 = vmatpush1.msra.mxu0 %v592
    %785 = vmatprep.subr.mxu0 %v597
    %786 = vmatpush1.msra.mxu0 %v596
    %787 = vmatprep.subr.mxu0 %v601
    %788 = vmatpush1.msra.mxu0 %v600
    %789 = vmatprep.subr.mxu0 %v605
    %790 = vmatpush1.msra.mxu0 %v604
    %791 = vmatprep.subr.mxu0 %v609
    %792 = vmatpush1.msra.mxu0 %v608
    %793 = vmatprep.subr.mxu0 %v613
    %794 = vmatpush1.msra.mxu0 %v612
    %795 = vmatprep.subr.mxu0 %v617
    %796 = vmatpush1.msra.mxu0 %v616
    %797 = vmatprep.subr.mxu0 %v621
    %798 = vmatpush1.msra.mxu0 %v620
    %799 = vmatprep.subr.mxu0 %v625
    %800 = vmatpush1.msra.mxu0 %v624
    %801 = vmatprep.subr.mxu0 %v629
    %802 = vmatpush1.msra.mxu0 %v628
    %803 = vmatprep.subr.mxu0 %v633
    %804 = vmatpush1.msra.mxu0 %v632
    %805 = vmatprep.subr.mxu0 %v637
    %806 = vmatpush1.msra.mxu0 %v636
    %807 = vmatprep.subr.mxu0 %v641
    %808 = vmatpush1.msra.mxu0 %v640
    %809 = vmatprep.subr.mxu0 %v645
    %810 = vmatpush1.msra.mxu0 %v644
    %811 = vmatprep.subr.mxu0 %v649
    %812 = vmatpush1.msra.mxu0 %v648
    %813 = vmatprep.subr.mxu0 %v653
    %814 = vmatpush1.msra.mxu0 %v652
    %815 = vmatprep.subr.mxu0 %v657
    %816 = vmatpush1.msra.mxu0 %v656
    %817 = vmatprep.subr.mxu0 %v661
    %818 = vmatpush1.msra.mxu0 %v660
    %819 = vmatprep.subr.mxu0 %v665
    %820 = vmatpush1.msra.mxu0 %v664
    %821 = vmatprep.subr.mxu0 %v669
    %822 = vmatpush1.msra.mxu0 %v668
    %823 = vmatprep.subr.mxu0 %v673
    %824 = vmatpush1.msra.mxu0 %v672
    %825 = vmatprep.subr.mxu0 %v677
    %826 = vmatpush1.msra.mxu0 %v676
    %827 = vmatprep.subr.mxu0 %v681
    %828 = vmatpush1.msra.mxu0 %v680
    %829 = vmatprep.subr.mxu0 %v685
    %830 = vmatpush1.msra.mxu0 %v684
    %831 = vmatprep.subr.mxu0 %v689
    %832 = vmatpush1.msra.mxu0 %v688
    %833 = vmatprep.subr.mxu0 %v693
    %834 = vmatpush1.msra.mxu0 %v692
    %835 = vmatprep.subr.mxu0 %v697
    %836 = vmatpush1.msra.mxu0 %v696
    %837 = vmatprep.subr.mxu0 %v701
    %838 = vmatpush1.msra.mxu0 %v700
    %839 = vmatprep.subr.mxu0 %v705
    %840 = vmatpush1.msra.mxu0 %v704
    %841 = vmatprep.mubr.f32.mxu0 0.0
    %842 = vmatmul.mubr.f32.gmra.mrb[0].mxu0 %v577
    %v843 = vpop.f32.mrb[0].mxu0
    %v844 = vadd.f32 %v355, %v843
    %v845 = vpop.f32.mrb[0].mxu0
    %v846 = vadd.f32 %v359, %v845
    %847 = vdwg.mxu0
    %v848 = vxor.u32 %v773, 2147483648
    %v849 = vxor.u32 %v775, 2147483648
    %v850 = vmul.f32 %v848, 1.442695
    %v851 = vpow.pop %v850
    %v852 = vmul.f32 %v849, 1.442695
    %v853 = vpow.pop %v852
    %v854 = vadd.f32 %v851, 1.0
    %v855 = vadd.f32 %v853, 1.0
    %v856 = vrcp.pop %v854
    %v857 = vmul.f32 1.0, %v856
    %v858 = vrcp.pop %v855
    %v859 = vmul.f32 1.0, %v858
    %v860 = vmul.f32 %v857, %v846
    %v861 = vadd.f32 %v844, %v860
    %v862 = vtanh.pop %v861
    %v863 = vsub.f32 1.0, %v859
    %v864 = vmul.f32 %v863, %v862
    %v865 = vmul.f32 %v859, 0.0
    %v866 = vadd.f32 %v864, %v865
    %v867 = vld [vmem:[#allocation2 + $0x18] sm:$0xff]
    %v868 = vld [vmem:[#allocation2 + $0x20] sm:$0xff]
    %v869 = vld [vmem:[#allocation2 + $0x28] sm:$0xff]
    %870 = vmatprep.subr.mxu0 %v368
    %871 = vmatpush1.msra.mxu0 %v367
    %872 = vmatprep.subr.mxu0 %v371
    %873 = vmatpush1.msra.mxu0 %v370
    %874 = vmatprep.subr.mxu0 %v374
    %875 = vmatpush1.msra.mxu0 %v373
    %876 = vmatprep.subr.mxu0 %v377
    %877 = vmatpush1.msra.mxu0 %v376
    %878 = vmatprep.subr.mxu0 %v380
    %879 = vmatpush1.msra.mxu0 %v379
    %880 = vmatprep.subr.mxu0 %v383
    %881 = vmatpush1.msra.mxu0 %v382
    %882 = vmatprep.subr.mxu0 %v386
    %883 = vmatpush1.msra.mxu0 %v385
    %884 = vmatprep.subr.mxu0 %v389
    %885 = vmatpush1.msra.mxu0 %v388
    %886 = vmatprep.subr.mxu0 %v392
    %887 = vmatpush1.msra.mxu0 %v391
    %888 = vmatprep.subr.mxu0 %v395
    %889 = vmatpush1.msra.mxu0 %v394
    %890 = vmatprep.subr.mxu0 %v398
    %891 = vmatpush1.msra.mxu0 %v397
    %892 = vmatprep.subr.mxu0 %v401
    %893 = vmatpush1.msra.mxu0 %v400
    %894 = vmatprep.subr.mxu0 %v404
    %895 = vmatpush1.msra.mxu0 %v403
    %896 = vmatprep.subr.mxu0 %v407
    %897 = vmatpush1.msra.mxu0 %v406
    %898 = vmatprep.subr.mxu0 %v410
    %899 = vmatpush1.msra.mxu0 %v409
    %900 = vmatprep.subr.mxu0 %v413
    %901 = vmatpush1.msra.mxu0 %v412
    %902 = vmatprep.subr.mxu0 0.0
    %903 = vmatpush1.msra.mxu0 0.0
    %904 = vmatprep.subr.mxu0 0.0
    %905 = vmatpush1.msra.mxu0 0.0
    %906 = vmatprep.subr.mxu0 0.0
    %907 = vmatpush1.msra.mxu0 0.0
    %908 = vmatprep.subr.mxu0 0.0
    %909 = vmatpush1.msra.mxu0 0.0
    %910 = vmatprep.subr.mxu0 0.0
    %911 = vmatpush1.msra.mxu0 0.0
    %912 = vmatprep.subr.mxu0 0.0
    %913 = vmatpush1.msra.mxu0 0.0
    %914 = vmatprep.subr.mxu0 0.0
    %915 = vmatpush1.msra.mxu0 0.0
    %916 = vmatprep.subr.mxu0 0.0
    %917 = vmatpush1.msra.mxu0 0.0
    %918 = vmatprep.subr.mxu0 0.0
    %919 = vmatpush1.msra.mxu0 0.0
    %920 = vmatprep.subr.mxu0 0.0
    %921 = vmatpush1.msra.mxu0 0.0
    %922 = vmatprep.subr.mxu0 0.0
    %923 = vmatpush1.msra.mxu0 0.0
    %924 = vmatprep.subr.mxu0 0.0
    %925 = vmatpush1.msra.mxu0 0.0
    %926 = vmatprep.subr.mxu0 0.0
    %927 = vmatpush1.msra.mxu0 0.0
    %928 = vmatprep.subr.mxu0 0.0
    %929 = vmatpush1.msra.mxu0 0.0
    %930 = vmatprep.subr.mxu0 0.0
    %931 = vmatpush1.msra.mxu0 0.0
    %932 = vmatprep.subr.mxu0 0.0
    %933 = vmatpush1.msra.mxu0 0.0
    %934 = vmatprep.mubr.f32.mxu0 0.0
    %935 = vmatmul.mubr.f32.gmra.mrb[0].mxu0 %v577
    %v936 = vpop.f32.mrb[0].mxu0
    %v937 = vadd.f32 0.0, %v936
    %v938 = vpop.f32.mrb[0].mxu0
    %v939 = vadd.f32 0.0, %v938
    %940 = vdwg.mxu0
    %941 = vmatprep.subr.mxu0 0.0
    %942 = vmatpush1.msra.mxu0 %v369
    %943 = vmatprep.subr.mxu0 0.0
    %944 = vmatpush1.msra.mxu0 %v372
    %945 = vmatprep.subr.mxu0 0.0
    %946 = vmatpush1.msra.mxu0 %v375
    %947 = vmatprep.subr.mxu0 0.0
    %948 = vmatpush1.msra.mxu0 %v378
    %949 = vmatprep.subr.mxu0 0.0
    %950 = vmatpush1.msra.mxu0 %v381
    %951 = vmatprep.subr.mxu0 0.0
    %952 = vmatpush1.msra.mxu0 %v384
    %953 = vmatprep.subr.mxu0 0.0
    %954 = vmatpush1.msra.mxu0 %v387
    %955 = vmatprep.subr.mxu0 0.0
    %956 = vmatpush1.msra.mxu0 %v390
    %957 = vmatprep.subr.mxu0 0.0
    %958 = vmatpush1.msra.mxu0 %v393
    %959 = vmatprep.subr.mxu0 0.0
    %960 = vmatpush1.msra.mxu0 %v396
    %961 = vmatprep.subr.mxu0 0.0
    %962 = vmatpush1.msra.mxu0 %v399
    %963 = vmatprep.subr.mxu0 0.0
    %964 = vmatpush1.msra.mxu0 %v402
    %965 = vmatprep.subr.mxu0 0.0
    %966 = vmatpush1.msra.mxu0 %v405
    %967 = vmatprep.subr.mxu0 0.0
    %968 = vmatpush1.msra.mxu0 %v408
    %969 = vmatprep.subr.mxu0 0.0
    %970 = vmatpush1.msra.mxu0 %v411
    %971 = vmatprep.subr.mxu0 0.0
    %972 = vmatpush1.msra.mxu0 %v414
    %973 = vmatprep.subr.mxu0 0.0
    %974 = vmatpush1.msra.mxu0 0.0
    %975 = vmatprep.subr.mxu0 0.0
    %976 = vmatpush1.msra.mxu0 0.0
    %977 = vmatprep.subr.mxu0 0.0
    %978 = vmatpush1.msra.mxu0 0.0
    %979 = vmatprep.subr.mxu0 0.0
    %980 = vmatpush1.msra.mxu0 0.0
    %981 = vmatprep.subr.mxu0 0.0
    %982 = vmatpush1.msra.mxu0 0.0
    %983 = vmatprep.subr.mxu0 0.0
    %984 = vmatpush1.msra.mxu0 0.0
    %985 = vmatprep.subr.mxu0 0.0
    %986 = vmatpush1.msra.mxu0 0.0
    %987 = vmatprep.subr.mxu0 0.0
    %988 = vmatpush1.msra.mxu0 0.0
    %989 = vmatprep.subr.mxu0 0.0
    %990 = vmatpush1.msra.mxu0 0.0
    %991 = vmatprep.subr.mxu0 0.0
    %992 = vmatpush1.msra.mxu0 0.0
    %993 = vmatprep.subr.mxu0 0.0
    %994 = vmatpush1.msra.mxu0 0.0
    %995 = vmatprep.subr.mxu0 0.0
    %996 = vmatpush1.msra.mxu0 0.0
    %997 = vmatprep.subr.mxu0 0.0
    %998 = vmatpush1.msra.mxu0 0.0
    %999 = vmatprep.subr.mxu0 0.0
    %1000 = vmatpush1.msra.mxu0 0.0
    %1001 = vmatprep.subr.mxu0 0.0
    %1002 = vmatpush1.msra.mxu0 0.0
    %1003 = vmatprep.subr.mxu0 0.0
    %1004 = vmatpush1.msra.mxu0 0.0
    %1005 = vmatprep.mubr.f32.mxu0 0.0
    %1006 = vmatmul.mubr.f32.gmra.mrb[0].mxu0 %v577
    %v1007 = vpop.f32.mrb[0].mxu0
    %v1008 = vadd.f32 0.0, %v1007
    %v1009 = vpop.f32.mrb[0].mxu0
    %1010 = vdwg.mxu0
    %v1011 = vadd.f32 %v867, %v937
    %v1012 = vadd.f32 %v868, %v939
    %v1013 = vxor.u32 %v1011, 2147483648
    %v1014 = vxor.u32 %v1012, 2147483648
    %v1015 = vmul.f32 %v1013, 1.442695
    %v1016 = vpow.pop %v1015
    %v1017 = vmul.f32 %v1014, 1.442695
    %v1018 = vpow.pop %v1017
    %v1019 = vadd.f32 %v1016, 1.0
    %v1020 = vadd.f32 %v1018, 1.0
    %v1021 = vrcp.pop %v1019
    %v1022 = vmul.f32 1.0, %v1021
    %v1023 = vrcp.pop %v1020
    %v1024 = vmul.f32 1.0, %v1023
    %v1025 = vadd.f32 %v1008, %v340
    %v1026 = vmul.f32 %v1022, %v1025
    %v1027 = vadd.f32 %v869, %v1026
    %v1028 = vtanh.pop %v1027
    %v1029 = vsub.f32 1.0, %v1024
    %v1030 = vmul.f32 %v1029, %v1028
    %v1031 = vmul.f32 %v1024, %v577
    %v1032 = vadd.f32 %v1030, %v1031
    %1033 = vmatprep.subr.mxu0 %v579
    %1034 = vmatpush1.msra.mxu0 %v578
    %1035 = vmatprep.subr.mxu0 %v583
    %1036 = vmatpush1.msra.mxu0 %v582
    %1037 = vmatprep.subr.mxu0 %v587
    %1038 = vmatpush1.msra.mxu0 %v586
    %1039 = vmatprep.subr.mxu0 %v591
    %1040 = vmatpush1.msra.mxu0 %v590
    %1041 = vmatprep.subr.mxu0 %v595
    %1042 = vmatpush1.msra.mxu0 %v594
    %1043 = vmatprep.subr.mxu0 %v599
    %1044 = vmatpush1.msra.mxu0 %v598
    %1045 = vmatprep.subr.mxu0 %v603
    %1046 = vmatpush1.msra.mxu0 %v602
    %1047 = vmatprep.subr.mxu0 %v607
    %1048 = vmatpush1.msra.mxu0 %v606
    %1049 = vmatprep.subr.mxu0 %v611
    %1050 = vmatpush1.msra.mxu0 %v610
    %1051 = vmatprep.subr.mxu0 %v615
    %1052 = vmatpush1.msra.mxu0 %v614
    %1053 = vmatprep.subr.mxu0 %v619
    %1054 = vmatpush1.msra.mxu0 %v618
    %1055 = vmatprep.subr.mxu0 %v623
    %1056 = vmatpush1.msra.mxu0 %v622
    %1057 = vmatprep.subr.mxu0 %v627
    %1058 = vmatpush1.msra.mxu0 %v626
    %1059 = vmatprep.subr.mxu0 %v631
    %1060 = vmatpush1.msra.mxu0 %v630
    %1061 = vmatprep.subr.mxu0 %v635
    %1062 = vmatpush1.msra.mxu0 %v634
    %1063 = vmatprep.subr.mxu0 %v639
    %1064 = vmatpush1.msra.mxu0 %v638
    %1065 = vmatprep.subr.mxu0 %v643
    %1066 = vmatpush1.msra.mxu0 %v642
    %1067 = vmatprep.subr.mxu0 %v647
    %1068 = vmatpush1.msra.mxu0 %v646
    %1069 = vmatprep.subr.mxu0 %v651
    %1070 = vmatpush1.msra.mxu0 %v650
    %1071 = vmatprep.subr.mxu0 %v655
    %1072 = vmatpush1.msra.mxu0 %v654
    %1073 = vmatprep.subr.mxu0 %v659
    %1074 = vmatpush1.msra.mxu0 %v658
    %1075 = vmatprep.subr.mxu0 %v663
    %1076 = vmatpush1.msra.mxu0 %v662
    %1077 = vmatprep.subr.mxu0 %v667
    %1078 = vmatpush1.msra.mxu0 %v666
    %1079 = vmatprep.subr.mxu0 %v671
    %1080 = vmatpush1.msra.mxu0 %v670
    %1081 = vmatprep.subr.mxu0 %v675
    %1082 = vmatpush1.msra.mxu0 %v674
    %1083 = vmatprep.subr.mxu0 %v679
    %1084 = vmatpush1.msra.mxu0 %v678
    %1085 = vmatprep.subr.mxu0 %v683
    %1086 = vmatpush1.msra.mxu0 %v682
    %1087 = vmatprep.subr.mxu0 %v687
    %1088 = vmatpush1.msra.mxu0 %v686
    %1089 = vmatprep.subr.mxu0 %v691
    %1090 = vmatpush1.msra.mxu0 %v690
    %1091 = vmatprep.subr.mxu0 %v695
    %1092 = vmatpush1.msra.mxu0 %v694
    %1093 = vmatprep.subr.mxu0 %v699
    %1094 = vmatpush1.msra.mxu0 %v698
    %1095 = vmatprep.subr.mxu0 %v703
    %1096 = vmatpush1.msra.mxu0 %v702
    %1097 = vmatprep.mubr.f32.mxu0 %v866
    %1098 = vmatmul.mubr.f32.gmra.mrb[0].mxu0 %v1032
    %v1099 = vpop.f32.mrb[0].mxu0
    %v1100 = vadd.f32 %v347, %v1099
    %v1101 = vpop.f32.mrb[0].mxu0
    %v1102 = vadd.f32 %v351, %v1101
    %1103 = vdwg.mxu0
    %1104 = vmatprep.subr.mxu0 %v581
    %1105 = vmatpush1.msra.mxu0 %v580
    %1106 = vmatprep.subr.mxu0 %v585
    %1107 = vmatpush1.msra.mxu0 %v584
    %1108 = vmatprep.subr.mxu0 %v589
    %1109 = vmatpush1.msra.mxu0 %v588
    %1110 = vmatprep.subr.mxu0 %v593
    %1111 = vmatpush1.msra.mxu0 %v592
    %1112 = vmatprep.subr.mxu0 %v597
    %1113 = vmatpush1.msra.mxu0 %v596
    %1114 = vmatprep.subr.mxu0 %v601
    %1115 = vmatpush1.msra.mxu0 %v600
    %1116 = vmatprep.subr.mxu0 %v605
    %1117 = vmatpush1.msra.mxu0 %v604
    %1118 = vmatprep.subr.mxu0 %v609
    %1119 = vmatpush1.msra.mxu0 %v608
    %1120 = vmatprep.subr.mxu0 %v613
    %1121 = vmatpush1.msra.mxu0 %v612
    %1122 = vmatprep.subr.mxu0 %v617
    %1123 = vmatpush1.msra.mxu0 %v616
    %1124 = vmatprep.subr.mxu0 %v621
    %1125 = vmatpush1.msra.mxu0 %v620
    %1126 = vmatprep.subr.mxu0 %v625
    %1127 = vmatpush1.msra.mxu0 %v624
    %1128 = vmatprep.subr.mxu0 %v629
    %1129 = vmatpush1.msra.mxu0 %v628
    %1130 = vmatprep.subr.mxu0 %v633
    %1131 = vmatpush1.msra.mxu0 %v632
    %1132 = vmatprep.subr.mxu0 %v637
    %1133 = vmatpush1.msra.mxu0 %v636
    %1134 = vmatprep.subr.mxu0 %v641
    %1135 = vmatpush1.msra.mxu0 %v640
    %1136 = vmatprep.subr.mxu0 %v645
    %1137 = vmatpush1.msra.mxu0 %v644
    %1138 = vmatprep.subr.mxu0 %v649
    %1139 = vmatpush1.msra.mxu0 %v648
    %1140 = vmatprep.subr.mxu0 %v653
    %1141 = vmatpush1.msra.mxu0 %v652
    %1142 = vmatprep.subr.mxu0 %v657
    %1143 = vmatpush1.msra.mxu0 %v656
    %1144 = vmatprep.subr.mxu0 %v661
    %1145 = vmatpush1.msra.mxu0 %v660
    %1146 = vmatprep.subr.mxu0 %v665
    %1147 = vmatpush1.msra.mxu0 %v664
    %1148 = vmatprep.subr.mxu0 %v669
    %1149 = vmatpush1.msra.mxu0 %v668
    %1150 = vmatprep.subr.mxu0 %v673
    %1151 = vmatpush1.msra.mxu0 %v672
    %1152 = vmatprep.subr.mxu0 %v677
    %1153 = vmatpush1.msra.mxu0 %v676
    %1154 = vmatprep.subr.mxu0 %v681
    %1155 = vmatpush1.msra.mxu0 %v680
    %1156 = vmatprep.subr.mxu0 %v685
    %1157 = vmatpush1.msra.mxu0 %v684
    %1158 = vmatprep.subr.mxu0 %v689
    %1159 = vmatpush1.msra.mxu0 %v688
    %1160 = vmatprep.subr.mxu0 %v693
    %1161 = vmatpush1.msra.mxu0 %v692
    %1162 = vmatprep.subr.mxu0 %v697
    %1163 = vmatpush1.msra.mxu0 %v696
    %1164 = vmatprep.subr.mxu0 %v701
    %1165 = vmatpush1.msra.mxu0 %v700
    %1166 = vmatprep.subr.mxu0 %v705
    %1167 = vmatpush1.msra.mxu0 %v704
    %1168 = vmatprep.mubr.f32.mxu0 %v866
    %1169 = vmatmul.mubr.f32.gmra.mrb[0].mxu0 %v1032
    %v1170 = vpop.f32.mrb[0].mxu0
    %v1171 = vadd.f32 %v355, %v1170
    %v1172 = vpop.f32.mrb[0].mxu0
    %v1173 = vadd.f32 %v359, %v1172
    %1174 = vdwg.mxu0
    %v1175 = vxor.u32 %v1100, 2147483648
    %v1176 = vxor.u32 %v1102, 2147483648
    %v1177 = vmul.f32 %v1175, 1.442695
    %v1178 = vpow.pop %v1177
    %v1179 = vmul.f32 %v1176, 1.442695
    %v1180 = vpow.pop %v1179
    %v1181 = vadd.f32 %v1178, 1.0
    %v1182 = vadd.f32 %v1180, 1.0
    %v1183 = vrcp.pop %v1181
    %v1184 = vmul.f32 1.0, %v1183
    %v1185 = vrcp.pop %v1182
    %v1186 = vmul.f32 1.0, %v1185
    %v1187 = vmul.f32 %v1184, %v1173
    %v1188 = vadd.f32 %v1171, %v1187
    %v1189 = vtanh.pop %v1188
    %v1190 = vsub.f32 1.0, %v1186
    %v1191 = vmul.f32 %v1190, %v1189
    %v1192 = vmul.f32 %v1186, %v866
    %v1193 = vadd.f32 %v1191, %v1192
    %v1194 = vld [vmem:[#allocation2 + $0x30] sm:$0xff]
    %v1195 = vld [vmem:[#allocation2 + $0x38] sm:$0xff]
    %v1196 = vld [vmem:[#allocation2 + $0x40] sm:$0xff]
    %1197 = vmatprep.subr.mxu0 %v368
    %1198 = vmatpush1.msra.mxu0 %v367
    %1199 = vmatprep.subr.mxu0 %v371
    %1200 = vmatpush1.msra.mxu0 %v370
    %1201 = vmatprep.subr.mxu0 %v374
    %1202 = vmatpush1.msra.mxu0 %v373
    %1203 = vmatprep.subr.mxu0 %v377
    %1204 = vmatpush1.msra.mxu0 %v376
    %1205 = vmatprep.subr.mxu0 %v380
    %1206 = vmatpush1.msra.mxu0 %v379
    %1207 = vmatprep.subr.mxu0 %v383
    %1208 = vmatpush1.msra.mxu0 %v382
    %1209 = vmatprep.subr.mxu0 %v386
    %1210 = vmatpush1.msra.mxu0 %v385
    %1211 = vmatprep.subr.mxu0 %v389
    %1212 = vmatpush1.msra.mxu0 %v388
    %1213 = vmatprep.subr.mxu0 %v392
    %1214 = vmatpush1.msra.mxu0 %v391
    %1215 = vmatprep.subr.mxu0 %v395
    %1216 = vmatpush1.msra.mxu0 %v394
    %1217 = vmatprep.subr.mxu0 %v398
    %1218 = vmatpush1.msra.mxu0 %v397
    %1219 = vmatprep.subr.mxu0 %v401
    %1220 = vmatpush1.msra.mxu0 %v400
    %1221 = vmatprep.subr.mxu0 %v404
    %1222 = vmatpush1.msra.mxu0 %v403
    %1223 = vmatprep.subr.mxu0 %v407
    %1224 = vmatpush1.msra.mxu0 %v406
    %1225 = vmatprep.subr.mxu0 %v410
    %1226 = vmatpush1.msra.mxu0 %v409
    %1227 = vmatprep.subr.mxu0 %v413
    %1228 = vmatpush1.msra.mxu0 %v412
    %1229 = vmatprep.subr.mxu0 0.0
    %1230 = vmatpush1.msra.mxu0 0.0
    %1231 = vmatprep.subr.mxu0 0.0
    %1232 = vmatpush1.msra.mxu0 0.0
    %1233 = vmatprep.subr.mxu0 0.0
    %1234 = vmatpush1.msra.mxu0 0.0
    %1235 = vmatprep.subr.mxu0 0.0
    %1236 = vmatpush1.msra.mxu0 0.0
    %1237 = vmatprep.subr.mxu0 0.0
    %1238 = vmatpush1.msra.mxu0 0.0
    %1239 = vmatprep.subr.mxu0 0.0
    %1240 = vmatpush1.msra.mxu0 0.0
    %1241 = vmatprep.subr.mxu0 0.0
    %1242 = vmatpush1.msra.mxu0 0.0
    %1243 = vmatprep.subr.mxu0 0.0
    %1244 = vmatpush1.msra.mxu0 0.0
    %1245 = vmatprep.subr.mxu0 0.0
    %1246 = vmatpush1.msra.mxu0 0.0
    %1247 = vmatprep.subr.mxu0 0.0
    %1248 = vmatpush1.msra.mxu0 0.0
    %1249 = vmatprep.subr.mxu0 0.0
    %1250 = vmatpush1.msra.mxu0 0.0
    %1251 = vmatprep.subr.mxu0 0.0
    %1252 = vmatpush1.msra.mxu0 0.0
    %1253 = vmatprep.subr.mxu0 0.0
    %1254 = vmatpush1.msra.mxu0 0.0
    %1255 = vmatprep.subr.mxu0 0.0
    %1256 = vmatpush1.msra.mxu0 0.0
    %1257 = vmatprep.subr.mxu0 0.0
    %1258 = vmatpush1.msra.mxu0 0.0
    %1259 = vmatprep.subr.mxu0 0.0
    %1260 = vmatpush1.msra.mxu0 0.0
    %1261 = vmatprep.mubr.f32.mxu0 0.0
    %1262 = vmatmul.mubr.f32.gmra.mrb[0].mxu0 %v1032
    %v1263 = vpop.f32.mrb[0].mxu0
    %v1264 = vadd.f32 0.0, %v1263
    %v1265 = vpop.f32.mrb[0].mxu0
    %v1266 = vadd.f32 0.0, %v1265
    %1267 = vdwg.mxu0
    %1268 = vmatprep.subr.mxu0 0.0
    %1269 = vmatpush1.msra.mxu0 %v369
    %1270 = vmatprep.subr.mxu0 0.0
    %1271 = vmatpush1.msra.mxu0 %v372
    %1272 = vmatprep.subr.mxu0 0.0
    %1273 = vmatpush1.msra.mxu0 %v375
    %1274 = vmatprep.subr.mxu0 0.0
    %1275 = vmatpush1.msra.mxu0 %v378
    %1276 = vmatprep.subr.mxu0 0.0
    %1277 = vmatpush1.msra.mxu0 %v381
    %1278 = vmatprep.subr.mxu0 0.0
    %1279 = vmatpush1.msra.mxu0 %v384
    %1280 = vmatprep.subr.mxu0 0.0
    %1281 = vmatpush1.msra.mxu0 %v387
    %1282 = vmatprep.subr.mxu0 0.0
    %1283 = vmatpush1.msra.mxu0 %v390
    %1284 = vmatprep.subr.mxu0 0.0
    %1285 = vmatpush1.msra.mxu0 %v393
    %1286 = vmatprep.subr.mxu0 0.0
    %1287 = vmatpush1.msra.mxu0 %v396
    %1288 = vmatprep.subr.mxu0 0.0
    %1289 = vmatpush1.msra.mxu0 %v399
    %1290 = vmatprep.subr.mxu0 0.0
    %1291 = vmatpush1.msra.mxu0 %v402
    %1292 = vmatprep.subr.mxu0 0.0
    %1293 = vmatpush1.msra.mxu0 %v405
    %1294 = vmatprep.subr.mxu0 0.0
    %1295 = vmatpush1.msra.mxu0 %v408
    %1296 = vmatprep.subr.mxu0 0.0
    %1297 = vmatpush1.msra.mxu0 %v411
    %1298 = vmatprep.subr.mxu0 0.0
    %1299 = vmatpush1.msra.mxu0 %v414
    %1300 = vmatprep.subr.mxu0 0.0
    %1301 = vmatpush1.msra.mxu0 0.0
    %1302 = vmatprep.subr.mxu0 0.0
    %1303 = vmatpush1.msra.mxu0 0.0
    %1304 = vmatprep.subr.mxu0 0.0
    %1305 = vmatpush1.msra.mxu0 0.0
    %1306 = vmatprep.subr.mxu0 0.0
    %1307 = vmatpush1.msra.mxu0 0.0
    %1308 = vmatprep.subr.mxu0 0.0
    %1309 = vmatpush1.msra.mxu0 0.0
    %1310 = vmatprep.subr.mxu0 0.0
    %1311 = vmatpush1.msra.mxu0 0.0
    %1312 = vmatprep.subr.mxu0 0.0
    %1313 = vmatpush1.msra.mxu0 0.0
    %1314 = vmatprep.subr.mxu0 0.0
    %1315 = vmatpush1.msra.mxu0 0.0
    %1316 = vmatprep.subr.mxu0 0.0
    %1317 = vmatpush1.msra.mxu0 0.0
    %1318 = vmatprep.subr.mxu0 0.0
    %1319 = vmatpush1.msra.mxu0 0.0
    %1320 = vmatprep.subr.mxu0 0.0
    %1321 = vmatpush1.msra.mxu0 0.0
    %1322 = vmatprep.subr.mxu0 0.0
    %1323 = vmatpush1.msra.mxu0 0.0
    %1324 = vmatprep.subr.mxu0 0.0
    %1325 = vmatpush1.msra.mxu0 0.0
    %1326 = vmatprep.subr.mxu0 0.0
    %1327 = vmatpush1.msra.mxu0 0.0
    %1328 = vmatprep.subr.mxu0 0.0
    %1329 = vmatpush1.msra.mxu0 0.0
    %1330 = vmatprep.subr.mxu0 0.0
    %1331 = vmatpush1.msra.mxu0 0.0
    %1332 = vmatprep.mubr.f32.mxu0 0.0
    %1333 = vmatmul.mubr.f32.gmra.mrb[0].mxu0 %v1032
    %v1334 = vpop.f32.mrb[0].mxu0
    %v1335 = vadd.f32 0.0, %v1334
    %v1336 = vpop.f32.mrb[0].mxu0
    %1337 = vdwg.mxu0
    %v1338 = vadd.f32 %v1194, %v1264
    %v1339 = vadd.f32 %v1195, %v1266
    %v1340 = vxor.u32 %v1338, 2147483648
    %v1341 = vxor.u32 %v1339, 2147483648
    %v1342 = vmul.f32 %v1340, 1.442695
    %v1343 = vpow.pop %v1342
    %v1344 = vmul.f32 %v1341, 1.442695
    %v1345 = vpow.pop %v1344
    %v1346 = vadd.f32 %v1343, 1.0
    %v1347 = vadd.f32 %v1345, 1.0
    %v1348 = vrcp.pop %v1346
    %v1349 = vmul.f32 1.0, %v1348
    %v1350 = vrcp.pop %v1347
    %v1351 = vmul.f32 1.0, %v1350
    %v1352 = vadd.f32 %v1335, %v340
    %v1353 = vmul.f32 %v1349, %v1352
    %v1354 = vadd.f32 %v1196, %v1353
    %v1355 = vtanh.pop %v1354
    %v1356 = vsub.f32 1.0, %v1351
    %v1357 = vmul.f32 %v1356, %v1355
    %v1358 = vmul.f32 %v1351, %v1032
    %v1359 = vadd.f32 %v1357, %v1358
    %1360 = vmatprep.subr.mxu0 %v579
    %1361 = vmatpush1.msra.mxu0 %v578
    %1362 = vmatprep.subr.mxu0 %v583
    %1363 = vmatpush1.msra.mxu0 %v582
    %1364 = vmatprep.subr.mxu0 %v587
    %1365 = vmatpush1.msra.mxu0 %v586
    %1366 = vmatprep.subr.mxu0 %v591
    %1367 = vmatpush1.msra.mxu0 %v590
    %1368 = vmatprep.subr.mxu0 %v595
    %1369 = vmatpush1.msra.mxu0 %v594
    %1370 = vmatprep.subr.mxu0 %v599
    %1371 = vmatpush1.msra.mxu0 %v598
    %1372 = vmatprep.subr.mxu0 %v603
    %1373 = vmatpush1.msra.mxu0 %v602
    %1374 = vmatprep.subr.mxu0 %v607
    %1375 = vmatpush1.msra.mxu0 %v606
    %1376 = vmatprep.subr.mxu0 %v611
    %1377 = vmatpush1.msra.mxu0 %v610
    %1378 = vmatprep.subr.mxu0 %v615
    %1379 = vmatpush1.msra.mxu0 %v614
    %1380 = vmatprep.subr.mxu0 %v619
    %1381 = vmatpush1.msra.mxu0 %v618
    %1382 = vmatprep.subr.mxu0 %v623
    %1383 = vmatpush1.msra.mxu0 %v622
    %1384 = vmatprep.subr.mxu0 %v627
    %1385 = vmatpush1.msra.mxu0 %v626
    %1386 = vmatprep.subr.mxu0 %v631
    %1387 = vmatpush1.msra.mxu0 %v630
    %1388 = vmatprep.subr.mxu0 %v635
    %1389 = vmatpush1.msra.mxu0 %v634
    %1390 = vmatprep.subr.mxu0 %v639
    %1391 = vmatpush1.msra.mxu0 %v638
    %1392 = vmatprep.subr.mxu0 %v643
    %1393 = vmatpush1.msra.mxu0 %v642
    %1394 = vmatprep.subr.mxu0 %v647
    %1395 = vmatpush1.msra.mxu0 %v646
    %1396 = vmatprep.subr.mxu0 %v651
    %1397 = vmatpush1.msra.mxu0 %v650
    %1398 = vmatprep.subr.mxu0 %v655
    %1399 = vmatpush1.msra.mxu0 %v654
    %1400 = vmatprep.subr.mxu0 %v659
    %1401 = vmatpush1.msra.mxu0 %v658
    %1402 = vmatprep.subr.mxu0 %v663
    %1403 = vmatpush1.msra.mxu0 %v662
    %1404 = vmatprep.subr.mxu0 %v667
    %1405 = vmatpush1.msra.mxu0 %v666
    %1406 = vmatprep.subr.mxu0 %v671
    %1407 = vmatpush1.msra.mxu0 %v670
    %1408 = vmatprep.subr.mxu0 %v675
    %1409 = vmatpush1.msra.mxu0 %v674
    %1410 = vmatprep.subr.mxu0 %v679
    %1411 = vmatpush1.msra.mxu0 %v678
    %1412 = vmatprep.subr.mxu0 %v683
    %1413 = vmatpush1.msra.mxu0 %v682
    %1414 = vmatprep.subr.mxu0 %v687
    %1415 = vmatpush1.msra.mxu0 %v686
    %1416 = vmatprep.subr.mxu0 %v691
    %1417 = vmatpush1.msra.mxu0 %v690
    %1418 = vmatprep.subr.mxu0 %v695
    %1419 = vmatpush1.msra.mxu0 %v694
    %1420 = vmatprep.subr.mxu0 %v699
    %1421 = vmatpush1.msra.mxu0 %v698
    %1422 = vmatprep.subr.mxu0 %v703
    %1423 = vmatpush1.msra.mxu0 %v702
    %1424 = vmatprep.mubr.f32.mxu0 %v1193
    %1425 = vmatmul.mubr.f32.gmra.mrb[0].mxu0 %v1359
    %v1426 = vpop.f32.mrb[0].mxu0
    %v1427 = vadd.f32 %v347, %v1426
    %v1428 = vpop.f32.mrb[0].mxu0
    %v1429 = vadd.f32 %v351, %v1428
    %1430 = vdwg.mxu0
    %1431 = vmatprep.subr.mxu0 %v581
    %1432 = vmatpush1.msra.mxu0 %v580
    %1433 = vmatprep.subr.mxu0 %v585
    %1434 = vmatpush1.msra.mxu0 %v584
    %1435 = vmatprep.subr.mxu0 %v589
    %1436 = vmatpush1.msra.mxu0 %v588
    %1437 = vmatprep.subr.mxu0 %v593
    %1438 = vmatpush1.msra.mxu0 %v592
    %1439 = vmatprep.subr.mxu0 %v597
    %1440 = vmatpush1.msra.mxu0 %v596
    %1441 = vmatprep.subr.mxu0 %v601
    %1442 = vmatpush1.msra.mxu0 %v600
    %1443 = vmatprep.subr.mxu0 %v605
    %1444 = vmatpush1.msra.mxu0 %v604
    %1445 = vmatprep.subr.mxu0 %v609
    %1446 = vmatpush1.msra.mxu0 %v608
    %1447 = vmatprep.subr.mxu0 %v613
    %1448 = vmatpush1.msra.mxu0 %v612
    %1449 = vmatprep.subr.mxu0 %v617
    %1450 = vmatpush1.msra.mxu0 %v616
    %1451 = vmatprep.subr.mxu0 %v621
    %1452 = vmatpush1.msra.mxu0 %v620
    %1453 = vmatprep.subr.mxu0 %v625
    %1454 = vmatpush1.msra.mxu0 %v624
    %1455 = vmatprep.subr.mxu0 %v629
    %1456 = vmatpush1.msra.mxu0 %v628
    %1457 = vmatprep.subr.mxu0 %v633
    %1458 = vmatpush1.msra.mxu0 %v632
    %1459 = vmatprep.subr.mxu0 %v637
    %1460 = vmatpush1.msra.mxu0 %v636
    %1461 = vmatprep.subr.mxu0 %v641
    %1462 = vmatpush1.msra.mxu0 %v640
    %1463 = vmatprep.subr.mxu0 %v645
    %1464 = vmatpush1.msra.mxu0 %v644
    %1465 = vmatprep.subr.mxu0 %v649
    %1466 = vmatpush1.msra.mxu0 %v648
    %1467 = vmatprep.subr.mxu0 %v653
    %1468 = vmatpush1.msra.mxu0 %v652
    %1469 = vmatprep.subr.mxu0 %v657
    %1470 = vmatpush1.msra.mxu0 %v656
    %1471 = vmatprep.subr.mxu0 %v661
    %1472 = vmatpush1.msra.mxu0 %v660
    %1473 = vmatprep.subr.mxu0 %v665
    %1474 = vmatpush1.msra.mxu0 %v664
    %1475 = vmatprep.subr.mxu0 %v669
    %1476 = vmatpush1.msra.mxu0 %v668
    %1477 = vmatprep.subr.mxu0 %v673
    %1478 = vmatpush1.msra.mxu0 %v672
    %1479 = vmatprep.subr.mxu0 %v677
    %1480 = vmatpush1.msra.mxu0 %v676
    %1481 = vmatprep.subr.mxu0 %v681
    %1482 = vmatpush1.msra.mxu0 %v680
    %1483 = vmatprep.subr.mxu0 %v685
    %1484 = vmatpush1.msra.mxu0 %v684
    %1485 = vmatprep.subr.mxu0 %v689
    %1486 = vmatpush1.msra.mxu0 %v688
    %1487 = vmatprep.subr.mxu0 %v693
    %1488 = vmatpush1.msra.mxu0 %v692
    %1489 = vmatprep.subr.mxu0 %v697
    %1490 = vmatpush1.msra.mxu0 %v696
    %1491 = vmatprep.subr.mxu0 %v701
    %1492 = vmatpush1.msra.mxu0 %v700
    %1493 = vmatprep.subr.mxu0 %v705
    %1494 = vmatpush1.msra.mxu0 %v704
    %1495 = vmatprep.mubr.f32.mxu0 %v1193
    %1496 = vmatmul.mubr.f32.gmra.mrb[0].mxu0 %v1359
    %v1497 = vpop.f32.mrb[0].mxu0
    %v1498 = vadd.f32 %v355, %v1497
    %v1499 = vpop.f32.mrb[0].mxu0
    %v1500 = vadd.f32 %v359, %v1499
    %1501 = vdwg.mxu0
    %v1502 = vxor.u32 %v1427, 2147483648
    %v1503 = vxor.u32 %v1429, 2147483648
    %v1504 = vmul.f32 %v1502, 1.442695
    %v1505 = vpow.pop %v1504
    %v1506 = vmul.f32 %v1503, 1.442695
    %v1507 = vpow.pop %v1506
    %v1508 = vadd.f32 %v1505, 1.0
    %v1509 = vadd.f32 %v1507, 1.0
    %v1510 = vrcp.pop %v1508
    %v1511 = vmul.f32 1.0, %v1510
    %v1512 = vrcp.pop %v1509
    %v1513 = vmul.f32 1.0, %v1512
    %v1514 = vmul.f32 %v1511, %v1500
    %v1515 = vadd.f32 %v1498, %v1514
    %v1516 = vtanh.pop %v1515
    %v1517 = vsub.f32 1.0, %v1513
    %v1518 = vmul.f32 %v1517, %v1516
    %v1519 = vmul.f32 %v1513, %v1193
    %v1520 = vadd.f32 %v1518, %v1519
    %v1521 = vld [vmem:[#allocation2 + $0x48] sm:$0xff]
    %v1522 = vld [vmem:[#allocation2 + $0x50] sm:$0xff]
    %v1523 = vld [vmem:[#allocation2 + $0x58] sm:$0xff]
    %1524 = vmatprep.subr.mxu0 %v368
    %1525 = vmatpush1.msra.mxu0 %v367
    %1526 = vmatprep.subr.mxu0 %v371
    %1527 = vmatpush1.msra.mxu0 %v370
    %1528 = vmatprep.subr.mxu0 %v374
    %1529 = vmatpush1.msra.mxu0 %v373
    %1530 = vmatprep.subr.mxu0 %v377
    %1531 = vmatpush1.msra.mxu0 %v376
    %1532 = vmatprep.subr.mxu0 %v380
    %1533 = vmatpush1.msra.mxu0 %v379
    %1534 = vmatprep.subr.mxu0 %v383
    %1535 = vmatpush1.msra.mxu0 %v382
    %1536 = vmatprep.subr.mxu0 %v386
    %1537 = vmatpush1.msra.mxu0 %v385
    %1538 = vmatprep.subr.mxu0 %v389
    %1539 = vmatpush1.msra.mxu0 %v388
    %1540 = vmatprep.subr.mxu0 %v392
    %1541 = vmatpush1.msra.mxu0 %v391
    %1542 = vmatprep.subr.mxu0 %v395
    %1543 = vmatpush1.msra.mxu0 %v394
    %1544 = vmatprep.subr.mxu0 %v398
    %1545 = vmatpush1.msra.mxu0 %v397
    %1546 = vmatprep.subr.mxu0 %v401
    %1547 = vmatpush1.msra.mxu0 %v400
    %1548 = vmatprep.subr.mxu0 %v404
    %1549 = vmatpush1.msra.mxu0 %v403
    %1550 = vmatprep.subr.mxu0 %v407
    %1551 = vmatpush1.msra.mxu0 %v406
    %1552 = vmatprep.subr.mxu0 %v410
    %1553 = vmatpush1.msra.mxu0 %v409
    %1554 = vmatprep.subr.mxu0 %v413
    %1555 = vmatpush1.msra.mxu0 %v412
    %1556 = vmatprep.subr.mxu0 0.0
    %1557 = vmatpush1.msra.mxu0 0.0
    %1558 = vmatprep.subr.mxu0 0.0
    %1559 = vmatpush1.msra.mxu0 0.0
    %1560 = vmatprep.subr.mxu0 0.0
    %1561 = vmatpush1.msra.mxu0 0.0
    %1562 = vmatprep.subr.mxu0 0.0
    %1563 = vmatpush1.msra.mxu0 0.0
    %1564 = vmatprep.subr.mxu0 0.0
    %1565 = vmatpush1.msra.mxu0 0.0
    %1566 = vmatprep.subr.mxu0 0.0
    %1567 = vmatpush1.msra.mxu0 0.0
    %1568 = vmatprep.subr.mxu0 0.0
    %1569 = vmatpush1.msra.mxu0 0.0
    %1570 = vmatprep.subr.mxu0 0.0
    %1571 = vmatpush1.msra.mxu0 0.0
    %1572 = vmatprep.subr.mxu0 0.0
    %1573 = vmatpush1.msra.mxu0 0.0
    %1574 = vmatprep.subr.mxu0 0.0
    %1575 = vmatpush1.msra.mxu0 0.0
    %1576 = vmatprep.subr.mxu0 0.0
    %1577 = vmatpush1.msra.mxu0 0.0
    %1578 = vmatprep.subr.mxu0 0.0
    %1579 = vmatpush1.msra.mxu0 0.0
    %1580 = vmatprep.subr.mxu0 0.0
    %1581 = vmatpush1.msra.mxu0 0.0
    %1582 = vmatprep.subr.mxu0 0.0
    %1583 = vmatpush1.msra.mxu0 0.0
    %1584 = vmatprep.subr.mxu0 0.0
    %1585 = vmatpush1.msra.mxu0 0.0
    %1586 = vmatprep.subr.mxu0 0.0
    %1587 = vmatpush1.msra.mxu0 0.0
    %1588 = vmatprep.mubr.f32.mxu0 0.0
    %1589 = vmatmul.mubr.f32.gmra.mrb[0].mxu0 %v1359
    %v1590 = vpop.f32.mrb[0].mxu0
    %v1591 = vadd.f32 0.0, %v1590
    %v1592 = vpop.f32.mrb[0].mxu0
    %v1593 = vadd.f32 0.0, %v1592
    %1594 = vdwg.mxu0
    %1595 = vmatprep.subr.mxu0 0.0
    %1596 = vmatpush1.msra.mxu0 %v369
    %1597 = vmatprep.subr.mxu0 0.0
    %1598 = vmatpush1.msra.mxu0 %v372
    %1599 = vmatprep.subr.mxu0 0.0
    %1600 = vmatpush1.msra.mxu0 %v375
    %1601 = vmatprep.subr.mxu0 0.0
    %1602 = vmatpush1.msra.mxu0 %v378
    %1603 = vmatprep.subr.mxu0 0.0
    %1604 = vmatpush1.msra.mxu0 %v381
    %1605 = vmatprep.subr.mxu0 0.0
    %1606 = vmatpush1.msra.mxu0 %v384
    %1607 = vmatprep.subr.mxu0 0.0
    %1608 = vmatpush1.msra.mxu0 %v387
    %1609 = vmatprep.subr.mxu0 0.0
    %1610 = vmatpush1.msra.mxu0 %v390
    %1611 = vmatprep.subr.mxu0 0.0
    %1612 = vmatpush1.msra.mxu0 %v393
    %1613 = vmatprep.subr.mxu0 0.0
    %1614 = vmatpush1.msra.mxu0 %v396
    %1615 = vmatprep.subr.mxu0 0.0
    %1616 = vmatpush1.msra.mxu0 %v399
    %1617 = vmatprep.subr.mxu0 0.0
    %1618 = vmatpush1.msra.mxu0 %v402
    %1619 = vmatprep.subr.mxu0 0.0
    %1620 = vmatpush1.msra.mxu0 %v405
    %1621 = vmatprep.subr.mxu0 0.0
    %1622 = vmatpush1.msra.mxu0 %v408
    %1623 = vmatprep.subr.mxu0 0.0
    %1624 = vmatpush1.msra.mxu0 %v411
    %1625 = vmatprep.subr.mxu0 0.0
    %1626 = vmatpush1.msra.mxu0 %v414
    %1627 = vmatprep.subr.mxu0 0.0
    %1628 = vmatpush1.msra.mxu0 0.0
    %1629 = vmatprep.subr.mxu0 0.0
    %1630 = vmatpush1.msra.mxu0 0.0
    %1631 = vmatprep.subr.mxu0 0.0
    %1632 = vmatpush1.msra.mxu0 0.0
    %1633 = vmatprep.subr.mxu0 0.0
    %1634 = vmatpush1.msra.mxu0 0.0
    %1635 = vmatprep.subr.mxu0 0.0
    %1636 = vmatpush1.msra.mxu0 0.0
    %1637 = vmatprep.subr.mxu0 0.0
    %1638 = vmatpush1.msra.mxu0 0.0
    %1639 = vmatprep.subr.mxu0 0.0
    %1640 = vmatpush1.msra.mxu0 0.0
    %1641 = vmatprep.subr.mxu0 0.0
    %1642 = vmatpush1.msra.mxu0 0.0
    %1643 = vmatprep.subr.mxu0 0.0
    %1644 = vmatpush1.msra.mxu0 0.0
    %1645 = vmatprep.subr.mxu0 0.0
    %1646 = vmatpush1.msra.mxu0 0.0
    %1647 = vmatprep.subr.mxu0 0.0
    %1648 = vmatpush1.msra.mxu0 0.0
    %1649 = vmatprep.subr.mxu0 0.0
    %1650 = vmatpush1.msra.mxu0 0.0
    %1651 = vmatprep.subr.mxu0 0.0
    %1652 = vmatpush1.msra.mxu0 0.0
    %1653 = vmatprep.subr.mxu0 0.0
    %1654 = vmatpush1.msra.mxu0 0.0
    %1655 = vmatprep.subr.mxu0 0.0
    %1656 = vmatpush1.msra.mxu0 0.0
    %1657 = vmatprep.subr.mxu0 0.0
    %1658 = vmatpush1.msra.mxu0 0.0
    %1659 = vmatprep.mubr.f32.mxu0 0.0
    %1660 = vmatmul.mubr.f32.gmra.mrb[0].mxu0 %v1359
    %v1661 = vpop.f32.mrb[0].mxu0
    %v1662 = vadd.f32 0.0, %v1661
    %v1663 = vpop.f32.mrb[0].mxu0
    %1664 = vdwg.mxu0
    %v1665 = vadd.f32 %v1521, %v1591
    %v1666 = vadd.f32 %v1522, %v1593
    %v1667 = vxor.u32 %v1665, 2147483648
    %v1668 = vxor.u32 %v1666, 2147483648
    %v1669 = vmul.f32 %v1667, 1.442695
    %v1670 = vpow.pop %v1669
    %v1671 = vmul.f32 %v1668, 1.442695
    %v1672 = vpow.pop %v1671
    %v1673 = vadd.f32 %v1670, 1.0
    %v1674 = vadd.f32 %v1672, 1.0
    %v1675 = vrcp.pop %v1673
    %v1676 = vmul.f32 1.0, %v1675
    %v1677 = vrcp.pop %v1674
    %v1678 = vmul.f32 1.0, %v1677
    %v1679 = vadd.f32 %v1662, %v340
    %v1680 = vmul.f32 %v1676, %v1679
    %v1681 = vadd.f32 %v1523, %v1680
    %v1682 = vtanh.pop %v1681
    %v1683 = vsub.f32 1.0, %v1678
    %v1684 = vmul.f32 %v1683, %v1682
    %v1685 = vmul.f32 %v1678, %v1359
    %v1686 = vadd.f32 %v1684, %v1685
    %1687 = vmatprep.subr.mxu0 %v579
    %1688 = vmatpush1.msra.mxu0 %v578
    %1689 = vmatprep.subr.mxu0 %v583
    %1690 = vmatpush1.msra.mxu0 %v582
    %1691 = vmatprep.subr.mxu0 %v587
    %1692 = vmatpush1.msra.mxu0 %v586
    %1693 = vmatprep.subr.mxu0 %v591
    %1694 = vmatpush1.msra.mxu0 %v590
    %1695 = vmatprep.subr.mxu0 %v595
    %1696 = vmatpush1.msra.mxu0 %v594
    %1697 = vmatprep.subr.mxu0 %v599
    %1698 = vmatpush1.msra.mxu0 %v598
    %1699 = vmatprep.subr.mxu0 %v603
    %1700 = vmatpush1.msra.mxu0 %v602
    %1701 = vmatprep.subr.mxu0 %v607
    %1702 = vmatpush1.msra.mxu0 %v606
    %1703 = vmatprep.subr.mxu0 %v611
    %1704 = vmatpush1.msra.mxu0 %v610
    %1705 = vmatprep.subr.mxu0 %v615
    %1706 = vmatpush1.msra.mxu0 %v614
    %1707 = vmatprep.subr.mxu0 %v619
    %1708 = vmatpush1.msra.mxu0 %v618
    %1709 = vmatprep.subr.mxu0 %v623
    %1710 = vmatpush1.msra.mxu0 %v622
    %1711 = vmatprep.subr.mxu0 %v627
    %1712 = vmatpush1.msra.mxu0 %v626
    %1713 = vmatprep.subr.mxu0 %v631
    %1714 = vmatpush1.msra.mxu0 %v630
    %1715 = vmatprep.subr.mxu0 %v635
    %1716 = vmatpush1.msra.mxu0 %v634
    %1717 = vmatprep.subr.mxu0 %v639
    %1718 = vmatpush1.msra.mxu0 %v638
    %1719 = vmatprep.subr.mxu0 %v643
    %1720 = vmatpush1.msra.mxu0 %v642
    %1721 = vmatprep.subr.mxu0 %v647
    %1722 = vmatpush1.msra.mxu0 %v646
    %1723 = vmatprep.subr.mxu0 %v651
    %1724 = vmatpush1.msra.mxu0 %v650
    %1725 = vmatprep.subr.mxu0 %v655
    %1726 = vmatpush1.msra.mxu0 %v654
    %1727 = vmatprep.subr.mxu0 %v659
    %1728 = vmatpush1.msra.mxu0 %v658
    %1729 = vmatprep.subr.mxu0 %v663
    %1730 = vmatpush1.msra.mxu0 %v662
    %1731 = vmatprep.subr.mxu0 %v667
    %1732 = vmatpush1.msra.mxu0 %v666
    %1733 = vmatprep.subr.mxu0 %v671
    %1734 = vmatpush1.msra.mxu0 %v670
    %1735 = vmatprep.subr.mxu0 %v675
    %1736 = vmatpush1.msra.mxu0 %v674
    %1737 = vmatprep.subr.mxu0 %v679
    %1738 = vmatpush1.msra.mxu0 %v678
    %1739 = vmatprep.subr.mxu0 %v683
    %1740 = vmatpush1.msra.mxu0 %v682
    %1741 = vmatprep.subr.mxu0 %v687
    %1742 = vmatpush1.msra.mxu0 %v686
    %1743 = vmatprep.subr.mxu0 %v691
    %1744 = vmatpush1.msra.mxu0 %v690
    %1745 = vmatprep.subr.mxu0 %v695
    %1746 = vmatpush1.msra.mxu0 %v694
    %1747 = vmatprep.subr.mxu0 %v699
    %1748 = vmatpush1.msra.mxu0 %v698
    %1749 = vmatprep.subr.mxu0 %v703
    %1750 = vmatpush1.msra.mxu0 %v702
    %1751 = vmatprep.mubr.f32.mxu0 %v1520
    %1752 = vmatmul.mubr.f32.gmra.mrb[0].mxu0 %v1686
    %v1753 = vpop.f32.mrb[0].mxu0
    %v1754 = vadd.f32 %v347, %v1753
    %v1755 = vpop.f32.mrb[0].mxu0
    %v1756 = vadd.f32 %v351, %v1755
    %1757 = vdwg.mxu0
    %1758 = vmatprep.subr.mxu0 %v581
    %1759 = vmatpush1.msra.mxu0 %v580
    %1760 = vmatprep.subr.mxu0 %v585
    %1761 = vmatpush1.msra.mxu0 %v584
    %1762 = vmatprep.subr.mxu0 %v589
    %1763 = vmatpush1.msra.mxu0 %v588
    %1764 = vmatprep.subr.mxu0 %v593
    %1765 = vmatpush1.msra.mxu0 %v592
    %1766 = vmatprep.subr.mxu0 %v597
    %1767 = vmatpush1.msra.mxu0 %v596
    %1768 = vmatprep.subr.mxu0 %v601
    %1769 = vmatpush1.msra.mxu0 %v600
    %1770 = vmatprep.subr.mxu0 %v605
    %1771 = vmatpush1.msra.mxu0 %v604
    %1772 = vmatprep.subr.mxu0 %v609
    %1773 = vmatpush1.msra.mxu0 %v608
    %1774 = vmatprep.subr.mxu0 %v613
    %1775 = vmatpush1.msra.mxu0 %v612
    %1776 = vmatprep.subr.mxu0 %v617
    %1777 = vmatpush1.msra.mxu0 %v616
    %1778 = vmatprep.subr.mxu0 %v621
    %1779 = vmatpush1.msra.mxu0 %v620
    %1780 = vmatprep.subr.mxu0 %v625
    %1781 = vmatpush1.msra.mxu0 %v624
    %1782 = vmatprep.subr.mxu0 %v629
    %1783 = vmatpush1.msra.mxu0 %v628
    %1784 = vmatprep.subr.mxu0 %v633
    %1785 = vmatpush1.msra.mxu0 %v632
    %1786 = vmatprep.subr.mxu0 %v637
    %1787 = vmatpush1.msra.mxu0 %v636
    %1788 = vmatprep.subr.mxu0 %v641
    %1789 = vmatpush1.msra.mxu0 %v640
    %1790 = vmatprep.subr.mxu0 %v645
    %1791 = vmatpush1.msra.mxu0 %v644
    %1792 = vmatprep.subr.mxu0 %v649
    %1793 = vmatpush1.msra.mxu0 %v648
    %1794 = vmatprep.subr.mxu0 %v653
    %1795 = vmatpush1.msra.mxu0 %v652
    %1796 = vmatprep.subr.mxu0 %v657
    %1797 = vmatpush1.msra.mxu0 %v656
    %1798 = vmatprep.subr.mxu0 %v661
    %1799 = vmatpush1.msra.mxu0 %v660
    %1800 = vmatprep.subr.mxu0 %v665
    %1801 = vmatpush1.msra.mxu0 %v664
    %1802 = vmatprep.subr.mxu0 %v669
    %1803 = vmatpush1.msra.mxu0 %v668
    %1804 = vmatprep.subr.mxu0 %v673
    %1805 = vmatpush1.msra.mxu0 %v672
    %1806 = vmatprep.subr.mxu0 %v677
    %1807 = vmatpush1.msra.mxu0 %v676
    %1808 = vmatprep.subr.mxu0 %v681
    %1809 = vmatpush1.msra.mxu0 %v680
    %1810 = vmatprep.subr.mxu0 %v685
    %1811 = vmatpush1.msra.mxu0 %v684
    %1812 = vmatprep.subr.mxu0 %v689
    %1813 = vmatpush1.msra.mxu0 %v688
    %1814 = vmatprep.subr.mxu0 %v693
    %1815 = vmatpush1.msra.mxu0 %v692
    %1816 = vmatprep.subr.mxu0 %v697
    %1817 = vmatpush1.msra.mxu0 %v696
    %1818 = vmatprep.subr.mxu0 %v701
    %1819 = vmatpush1.msra.mxu0 %v700
    %1820 = vmatprep.subr.mxu0 %v705
    %1821 = vmatpush1.msra.mxu0 %v704
    %1822 = vmatprep.mubr.f32.mxu0 %v1520
    %1823 = vmatmul.mubr.f32.gmra.mrb[0].mxu0 %v1686
    %v1824 = vpop.f32.mrb[0].mxu0
    %v1825 = vadd.f32 %v355, %v1824
    %v1826 = vpop.f32.mrb[0].mxu0
    %v1827 = vadd.f32 %v359, %v1826
    %1828 = vdwg.mxu0
    %v1829 = vxor.u32 %v1754, 2147483648
    %v1830 = vxor.u32 %v1756, 2147483648
    %v1831 = vmul.f32 %v1829, 1.442695
    %v1832 = vpow.pop %v1831
    %v1833 = vmul.f32 %v1830, 1.442695
    %v1834 = vpow.pop %v1833
    %v1835 = vadd.f32 %v1832, 1.0
    %v1836 = vadd.f32 %v1834, 1.0
    %v1837 = vrcp.pop %v1835
    %v1838 = vmul.f32 1.0, %v1837
    %v1839 = vrcp.pop %v1836
    %v1840 = vmul.f32 1.0, %v1839
    %v1841 = vmul.f32 %v1838, %v1827
    %v1842 = vadd.f32 %v1825, %v1841
    %v1843 = vtanh.pop %v1842
    %v1844 = vsub.f32 1.0, %v1840
    %v1845 = vmul.f32 %v1844, %v1843
    %v1846 = vmul.f32 %v1840, %v1520
    %v1847 = vadd.f32 %v1845, %v1846
    %v1848 = vld [vmem:[#allocation2 + $0x60] sm:$0xff]
    %v1849 = vld [vmem:[#allocation2 + $0x68] sm:$0xff]
    %v1850 = vld [vmem:[#allocation2 + $0x70] sm:$0xff]
    %1851 = vmatprep.subr.mxu0 %v368
    %1852 = vmatpush1.msra.mxu0 %v367
    %1853 = vmatprep.subr.mxu0 %v371
    %1854 = vmatpush1.msra.mxu0 %v370
    %1855 = vmatprep.subr.mxu0 %v374
    %1856 = vmatpush1.msra.mxu0 %v373
    %1857 = vmatprep.subr.mxu0 %v377
    %1858 = vmatpush1.msra.mxu0 %v376
    %1859 = vmatprep.subr.mxu0 %v380
    %1860 = vmatpush1.msra.mxu0 %v379
    %1861 = vmatprep.subr.mxu0 %v383
    %1862 = vmatpush1.msra.mxu0 %v382
    %1863 = vmatprep.subr.mxu0 %v386
    %1864 = vmatpush1.msra.mxu0 %v385
    %1865 = vmatprep.subr.mxu0 %v389
    %1866 = vmatpush1.msra.mxu0 %v388
    %1867 = vmatprep.subr.mxu0 %v392
    %1868 = vmatpush1.msra.mxu0 %v391
    %1869 = vmatprep.subr.mxu0 %v395
    %1870 = vmatpush1.msra.mxu0 %v394
    %1871 = vmatprep.subr.mxu0 %v398
    %1872 = vmatpush1.msra.mxu0 %v397
    %1873 = vmatprep.subr.mxu0 %v401
    %1874 = vmatpush1.msra.mxu0 %v400
    %1875 = vmatprep.subr.mxu0 %v404
    %1876 = vmatpush1.msra.mxu0 %v403
    %1877 = vmatprep.subr.mxu0 %v407
    %1878 = vmatpush1.msra.mxu0 %v406
    %1879 = vmatprep.subr.mxu0 %v410
    %1880 = vmatpush1.msra.mxu0 %v409
    %1881 = vmatprep.subr.mxu0 %v413
    %1882 = vmatpush1.msra.mxu0 %v412
    %1883 = vmatprep.subr.mxu0 0.0
    %1884 = vmatpush1.msra.mxu0 0.0
    %1885 = vmatprep.subr.mxu0 0.0
    %1886 = vmatpush1.msra.mxu0 0.0
    %1887 = vmatprep.subr.mxu0 0.0
    %1888 = vmatpush1.msra.mxu0 0.0
    %1889 = vmatprep.subr.mxu0 0.0
    %1890 = vmatpush1.msra.mxu0 0.0
    %1891 = vmatprep.subr.mxu0 0.0
    %1892 = vmatpush1.msra.mxu0 0.0
    %1893 = vmatprep.subr.mxu0 0.0
    %1894 = vmatpush1.msra.mxu0 0.0
    %1895 = vmatprep.subr.mxu0 0.0
    %1896 = vmatpush1.msra.mxu0 0.0
    %1897 = vmatprep.subr.mxu0 0.0
    %1898 = vmatpush1.msra.mxu0 0.0
    %1899 = vmatprep.subr.mxu0 0.0
    %1900 = vmatpush1.msra.mxu0 0.0
    %1901 = vmatprep.subr.mxu0 0.0
    %1902 = vmatpush1.msra.mxu0 0.0
    %1903 = vmatprep.subr.mxu0 0.0
    %1904 = vmatpush1.msra.mxu0 0.0
    %1905 = vmatprep.subr.mxu0 0.0
    %1906 = vmatpush1.msra.mxu0 0.0
    %1907 = vmatprep.subr.mxu0 0.0
    %1908 = vmatpush1.msra.mxu0 0.0
    %1909 = vmatprep.subr.mxu0 0.0
    %1910 = vmatpush1.msra.mxu0 0.0
    %1911 = vmatprep.subr.mxu0 0.0
    %1912 = vmatpush1.msra.mxu0 0.0
    %1913 = vmatprep.subr.mxu0 0.0
    %1914 = vmatpush1.msra.mxu0 0.0
    %1915 = vmatprep.mubr.f32.mxu0 0.0
    %1916 = vmatmul.mubr.f32.gmra.mrb[0].mxu0 %v1686
    %v1917 = vpop.f32.mrb[0].mxu0
    %v1918 = vadd.f32 0.0, %v1917
    %v1919 = vpop.f32.mrb[0].mxu0
    %v1920 = vadd.f32 0.0, %v1919
    %1921 = vdwg.mxu0
    %1922 = vmatprep.subr.mxu0 0.0
    %1923 = vmatpush1.msra.mxu0 %v369
    %1924 = vmatprep.subr.mxu0 0.0
    %1925 = vmatpush1.msra.mxu0 %v372
    %1926 = vmatprep.subr.mxu0 0.0
    %1927 = vmatpush1.msra.mxu0 %v375
    %1928 = vmatprep.subr.mxu0 0.0
    %1929 = vmatpush1.msra.mxu0 %v378
    %1930 = vmatprep.subr.mxu0 0.0
    %1931 = vmatpush1.msra.mxu0 %v381
    %1932 = vmatprep.subr.mxu0 0.0
    %1933 = vmatpush1.msra.mxu0 %v384
    %1934 = vmatprep.subr.mxu0 0.0
    %1935 = vmatpush1.msra.mxu0 %v387
    %1936 = vmatprep.subr.mxu0 0.0
    %1937 = vmatpush1.msra.mxu0 %v390
    %1938 = vmatprep.subr.mxu0 0.0
    %1939 = vmatpush1.msra.mxu0 %v393
    %1940 = vmatprep.subr.mxu0 0.0
    %1941 = vmatpush1.msra.mxu0 %v396
    %1942 = vmatprep.subr.mxu0 0.0
    %1943 = vmatpush1.msra.mxu0 %v399
    %1944 = vmatprep.subr.mxu0 0.0
    %1945 = vmatpush1.msra.mxu0 %v402
    %1946 = vmatprep.subr.mxu0 0.0
    %1947 = vmatpush1.msra.mxu0 %v405
    %1948 = vmatprep.subr.mxu0 0.0
    %1949 = vmatpush1.msra.mxu0 %v408
    %1950 = vmatprep.subr.mxu0 0.0
    %1951 = vmatpush1.msra.mxu0 %v411
    %1952 = vmatprep.subr.mxu0 0.0
    %1953 = vmatpush1.msra.mxu0 %v414
    %1954 = vmatprep.subr.mxu0 0.0
    %1955 = vmatpush1.msra.mxu0 0.0
    %1956 = vmatprep.subr.mxu0 0.0
    %1957 = vmatpush1.msra.mxu0 0.0
    %1958 = vmatprep.subr.mxu0 0.0
    %1959 = vmatpush1.msra.mxu0 0.0
    %1960 = vmatprep.subr.mxu0 0.0
    %1961 = vmatpush1.msra.mxu0 0.0
    %1962 = vmatprep.subr.mxu0 0.0
    %1963 = vmatpush1.msra.mxu0 0.0
    %1964 = vmatprep.subr.mxu0 0.0
    %1965 = vmatpush1.msra.mxu0 0.0
    %1966 = vmatprep.subr.mxu0 0.0
    %1967 = vmatpush1.msra.mxu0 0.0
    %1968 = vmatprep.subr.mxu0 0.0
    %1969 = vmatpush1.msra.mxu0 0.0
    %1970 = vmatprep.subr.mxu0 0.0
    %1971 = vmatpush1.msra.mxu0 0.0
    %1972 = vmatprep.subr.mxu0 0.0
    %1973 = vmatpush1.msra.mxu0 0.0
    %1974 = vmatprep.subr.mxu0 0.0
    %1975 = vmatpush1.msra.mxu0 0.0
    %1976 = vmatprep.subr.mxu0 0.0
    %1977 = vmatpush1.msra.mxu0 0.0
    %1978 = vmatprep.subr.mxu0 0.0
    %1979 = vmatpush1.msra.mxu0 0.0
    %1980 = vmatprep.subr.mxu0 0.0
    %1981 = vmatpush1.msra.mxu0 0.0
    %1982 = vmatprep.subr.mxu0 0.0
    %1983 = vmatpush1.msra.mxu0 0.0
    %1984 = vmatprep.subr.mxu0 0.0
    %1985 = vmatpush1.msra.mxu0 0.0
    %1986 = vmatprep.mubr.f32.mxu0 0.0
    %1987 = vmatmul.mubr.f32.gmra.mrb[0].mxu0 %v1686
    %v1988 = vpop.f32.mrb[0].mxu0
    %v1989 = vadd.f32 0.0, %v1988
    %v1990 = vpop.f32.mrb[0].mxu0
    %1991 = vdwg.mxu0
    %v1992 = vadd.f32 %v1848, %v1918
    %v1993 = vadd.f32 %v1849, %v1920
    %v1994 = vxor.u32 %v1992, 2147483648
    %v1995 = vxor.u32 %v1993, 2147483648
    %v1996 = vmul.f32 %v1994, 1.442695
    %v1997 = vpow.pop %v1996
    %v1998 = vmul.f32 %v1995, 1.442695
    %v1999 = vpow.pop %v1998
    %v2000 = vadd.f32 %v1997, 1.0
    %v2001 = vadd.f32 %v1999, 1.0
    %v2002 = vrcp.pop %v2000
    %v2003 = vmul.f32 1.0, %v2002
    %v2004 = vrcp.pop %v2001
    %v2005 = vmul.f32 1.0, %v2004
    %v2006 = vadd.f32 %v1989, %v340
    %v2007 = vmul.f32 %v2003, %v2006
    %v2008 = vadd.f32 %v1850, %v2007
    %v2009 = vtanh.pop %v2008
    %v2010 = vsub.f32 1.0, %v2005
    %v2011 = vmul.f32 %v2010, %v2009
    %v2012 = vmul.f32 %v2005, %v1686
    %v2013 = vadd.f32 %v2011, %v2012
    %2014 = vmatprep.subr.mxu0 %v579
    %2015 = vmatpush1.msra.mxu0 %v578
    %2016 = vmatprep.subr.mxu0 %v583
    %2017 = vmatpush1.msra.mxu0 %v582
    %2018 = vmatprep.subr.mxu0 %v587
    %2019 = vmatpush1.msra.mxu0 %v586
    %2020 = vmatprep.subr.mxu0 %v591
    %2021 = vmatpush1.msra.mxu0 %v590
    %2022 = vmatprep.subr.mxu0 %v595
    %2023 = vmatpush1.msra.mxu0 %v594
    %2024 = vmatprep.subr.mxu0 %v599
    %2025 = vmatpush1.msra.mxu0 %v598
    %2026 = vmatprep.subr.mxu0 %v603
    %2027 = vmatpush1.msra.mxu0 %v602
    %2028 = vmatprep.subr.mxu0 %v607
    %2029 = vmatpush1.msra.mxu0 %v606
    %2030 = vmatprep.subr.mxu0 %v611
    %2031 = vmatpush1.msra.mxu0 %v610
    %2032 = vmatprep.subr.mxu0 %v615
    %2033 = vmatpush1.msra.mxu0 %v614
    %2034 = vmatprep.subr.mxu0 %v619
    %2035 = vmatpush1.msra.mxu0 %v618
    %2036 = vmatprep.subr.mxu0 %v623
    %2037 = vmatpush1.msra.mxu0 %v622
    %2038 = vmatprep.subr.mxu0 %v627
    %2039 = vmatpush1.msra.mxu0 %v626
    %2040 = vmatprep.subr.mxu0 %v631
    %2041 = vmatpush1.msra.mxu0 %v630
    %2042 = vmatprep.subr.mxu0 %v635
    %2043 = vmatpush1.msra.mxu0 %v634
    %2044 = vmatprep.subr.mxu0 %v639
    %2045 = vmatpush1.msra.mxu0 %v638
    %2046 = vmatprep.subr.mxu0 %v643
    %2047 = vmatpush1.msra.mxu0 %v642
    %2048 = vmatprep.subr.mxu0 %v647
    %2049 = vmatpush1.msra.mxu0 %v646
    %2050 = vmatprep.subr.mxu0 %v651
    %2051 = vmatpush1.msra.mxu0 %v650
    %2052 = vmatprep.subr.mxu0 %v655
    %2053 = vmatpush1.msra.mxu0 %v654
    %2054 = vmatprep.subr.mxu0 %v659
    %2055 = vmatpush1.msra.mxu0 %v658
    %2056 = vmatprep.subr.mxu0 %v663
    %2057 = vmatpush1.msra.mxu0 %v662
    %2058 = vmatprep.subr.mxu0 %v667
    %2059 = vmatpush1.msra.mxu0 %v666
    %2060 = vmatprep.subr.mxu0 %v671
    %2061 = vmatpush1.msra.mxu0 %v670
    %2062 = vmatprep.subr.mxu0 %v675
    %2063 = vmatpush1.msra.mxu0 %v674
    %2064 = vmatprep.subr.mxu0 %v679
    %2065 = vmatpush1.msra.mxu0 %v678
    %2066 = vmatprep.subr.mxu0 %v683
    %2067 = vmatpush1.msra.mxu0 %v682
    %2068 = vmatprep.subr.mxu0 %v687
    %2069 = vmatpush1.msra.mxu0 %v686
    %2070 = vmatprep.subr.mxu0 %v691
    %2071 = vmatpush1.msra.mxu0 %v690
    %2072 = vmatprep.subr.mxu0 %v695
    %2073 = vmatpush1.msra.mxu0 %v694
    %2074 = vmatprep.subr.mxu0 %v699
    %2075 = vmatpush1.msra.mxu0 %v698
    %2076 = vmatprep.subr.mxu0 %v703
    %2077 = vmatpush1.msra.mxu0 %v702
    %2078 = vmatprep.mubr.f32.mxu0 %v1847
    %2079 = vmatmul.mubr.f32.gmra.mrb[0].mxu0 %v2013
    %v2080 = vpop.f32.mrb[0].mxu0
    %v2081 = vadd.f32 %v347, %v2080
    %v2082 = vpop.f32.mrb[0].mxu0
    %v2083 = vadd.f32 %v351, %v2082
    %2084 = vdwg.mxu0
    %2085 = vmatprep.subr.mxu0 %v581
    %2086 = vmatpush1.msra.mxu0 %v580
    %2087 = vmatprep.subr.mxu0 %v585
    %2088 = vmatpush1.msra.mxu0 %v584
    %2089 = vmatprep.subr.mxu0 %v589
    %2090 = vmatpush1.msra.mxu0 %v588
    %2091 = vmatprep.subr.mxu0 %v593
    %2092 = vmatpush1.msra.mxu0 %v592
    %2093 = vmatprep.subr.mxu0 %v597
    %2094 = vmatpush1.msra.mxu0 %v596
    %2095 = vmatprep.subr.mxu0 %v601
    %2096 = vmatpush1.msra.mxu0 %v600
    %2097 = vmatprep.subr.mxu0 %v605
    %2098 = vmatpush1.msra.mxu0 %v604
    %2099 = vmatprep.subr.mxu0 %v609
    %2100 = vmatpush1.msra.mxu0 %v608
    %2101 = vmatprep.subr.mxu0 %v613
    %2102 = vmatpush1.msra.mxu0 %v612
    %2103 = vmatprep.subr.mxu0 %v617
    %2104 = vmatpush1.msra.mxu0 %v616
    %2105 = vmatprep.subr.mxu0 %v621
    %2106 = vmatpush1.msra.mxu0 %v620
    %2107 = vmatprep.subr.mxu0 %v625
    %2108 = vmatpush1.msra.mxu0 %v624
    %2109 = vmatprep.subr.mxu0 %v629
    %2110 = vmatpush1.msra.mxu0 %v628
    %2111 = vmatprep.subr.mxu0 %v633
    %2112 = vmatpush1.msra.mxu0 %v632
    %2113 = vmatprep.subr.mxu0 %v637
    %2114 = vmatpush1.msra.mxu0 %v636
    %2115 = vmatprep.subr.mxu0 %v641
    %2116 = vmatpush1.msra.mxu0 %v640
    %2117 = vmatprep.subr.mxu0 %v645
    %2118 = vmatpush1.msra.mxu0 %v644
    %2119 = vmatprep.subr.mxu0 %v649
    %2120 = vmatpush1.msra.mxu0 %v648
    %2121 = vmatprep.subr.mxu0 %v653
    %2122 = vmatpush1.msra.mxu0 %v652
    %2123 = vmatprep.subr.mxu0 %v657
    %2124 = vmatpush1.msra.mxu0 %v656
    %2125 = vmatprep.subr.mxu0 %v661
    %2126 = vmatpush1.msra.mxu0 %v660
    %2127 = vmatprep.subr.mxu0 %v665
    %2128 = vmatpush1.msra.mxu0 %v664
    %2129 = vmatprep.subr.mxu0 %v669
    %2130 = vmatpush1.msra.mxu0 %v668
    %2131 = vmatprep.subr.mxu0 %v673
    %2132 = vmatpush1.msra.mxu0 %v672
    %2133 = vmatprep.subr.mxu0 %v677
    %2134 = vmatpush1.msra.mxu0 %v676
    %2135 = vmatprep.subr.mxu0 %v681
    %2136 = vmatpush1.msra.mxu0 %v680
    %2137 = vmatprep.subr.mxu0 %v685
    %2138 = vmatpush1.msra.mxu0 %v684
    %2139 = vmatprep.subr.mxu0 %v689
    %2140 = vmatpush1.msra.mxu0 %v688
    %2141 = vmatprep.subr.mxu0 %v693
    %2142 = vmatpush1.msra.mxu0 %v692
    %2143 = vmatprep.subr.mxu0 %v697
    %2144 = vmatpush1.msra.mxu0 %v696
    %2145 = vmatprep.subr.mxu0 %v701
    %2146 = vmatpush1.msra.mxu0 %v700
    %2147 = vmatprep.subr.mxu0 %v705
    %2148 = vmatpush1.msra.mxu0 %v704
    %2149 = vmatprep.mubr.f32.mxu0 %v1847
    %2150 = vmatmul.mubr.f32.gmra.mrb[0].mxu0 %v2013
    %v2151 = vpop.f32.mrb[0].mxu0
    %v2152 = vadd.f32 %v355, %v2151
    %v2153 = vpop.f32.mrb[0].mxu0
    %v2154 = vadd.f32 %v359, %v2153
    %2155 = vdwg.mxu0
    %v2156 = vxor.u32 %v2081, 2147483648
    %v2157 = vxor.u32 %v2083, 2147483648
    %v2158 = vmul.f32 %v2156, 1.442695
    %v2159 = vpow.pop %v2158
    %v2160 = vmul.f32 %v2157, 1.442695
    %v2161 = vpow.pop %v2160
    %v2162 = vadd.f32 %v2159, 1.0
    %v2163 = vadd.f32 %v2161, 1.0
    %v2164 = vrcp.pop %v2162
    %v2165 = vmul.f32 1.0, %v2164
    %v2166 = vrcp.pop %v2163
    %v2167 = vmul.f32 1.0, %v2166
    %v2168 = vmul.f32 %v2165, %v2154
    %v2169 = vadd.f32 %v2152, %v2168
    %v2170 = vtanh.pop %v2169
    %v2171 = vsub.f32 1.0, %v2167
    %v2172 = vmul.f32 %v2171, %v2170
    %v2173 = vmul.f32 %v2167, %v1847
    %v2174 = vadd.f32 %v2172, %v2173
    %v2175 = vld [vmem:[#allocation2 + $0x78] sm:$0xff]
    %v2176 = vld [vmem:[#allocation2 + $0x80] sm:$0xff]
    %v2177 = vld [vmem:[#allocation2 + $0x88] sm:$0xff]
    %2178 = vmatprep.subr.mxu0 %v368
    %2179 = vmatpush1.msra.mxu0 %v367
    %2180 = vmatprep.subr.mxu0 %v371
    %2181 = vmatpush1.msra.mxu0 %v370
    %2182 = vmatprep.subr.mxu0 %v374
    %2183 = vmatpush1.msra.mxu0 %v373
    %2184 = vmatprep.subr.mxu0 %v377
    %2185 = vmatpush1.msra.mxu0 %v376
    %2186 = vmatprep.subr.mxu0 %v380
    %2187 = vmatpush1.msra.mxu0 %v379
    %2188 = vmatprep.subr.mxu0 %v383
    %2189 = vmatpush1.msra.mxu0 %v382
    %2190 = vmatprep.subr.mxu0 %v386
    %2191 = vmatpush1.msra.mxu0 %v385
    %2192 = vmatprep.subr.mxu0 %v389
    %2193 = vmatpush1.msra.mxu0 %v388
    %2194 = vmatprep.subr.mxu0 %v392
    %2195 = vmatpush1.msra.mxu0 %v391
    %2196 = vmatprep.subr.mxu0 %v395
    %2197 = vmatpush1.msra.mxu0 %v394
    %2198 = vmatprep.subr.mxu0 %v398
    %2199 = vmatpush1.msra.mxu0 %v397
    %2200 = vmatprep.subr.mxu0 %v401
    %2201 = vmatpush1.msra.mxu0 %v400
    %2202 = vmatprep.subr.mxu0 %v404
    %2203 = vmatpush1.msra.mxu0 %v403
    %2204 = vmatprep.subr.mxu0 %v407
    %2205 = vmatpush1.msra.mxu0 %v406
    %2206 = vmatprep.subr.mxu0 %v410
    %2207 = vmatpush1.msra.mxu0 %v409
    %2208 = vmatprep.subr.mxu0 %v413
    %2209 = vmatpush1.msra.mxu0 %v412
    %2210 = vmatprep.subr.mxu0 0.0
    %2211 = vmatpush1.msra.mxu0 0.0
    %2212 = vmatprep.subr.mxu0 0.0
    %2213 = vmatpush1.msra.mxu0 0.0
    %2214 = vmatprep.subr.mxu0 0.0
    %2215 = vmatpush1.msra.mxu0 0.0
    %2216 = vmatprep.subr.mxu0 0.0
    %2217 = vmatpush1.msra.mxu0 0.0
    %2218 = vmatprep.subr.mxu0 0.0
    %2219 = vmatpush1.msra.mxu0 0.0
    %2220 = vmatprep.subr.mxu0 0.0
    %2221 = vmatpush1.msra.mxu0 0.0
    %2222 = vmatprep.subr.mxu0 0.0
    %2223 = vmatpush1.msra.mxu0 0.0
    %2224 = vmatprep.subr.mxu0 0.0
    %2225 = vmatpush1.msra.mxu0 0.0
    %2226 = vmatprep.subr.mxu0 0.0
    %2227 = vmatpush1.msra.mxu0 0.0
    %2228 = vmatprep.subr.mxu0 0.0
    %2229 = vmatpush1.msra.mxu0 0.0
    %2230 = vmatprep.subr.mxu0 0.0
    %2231 = vmatpush1.msra.mxu0 0.0
    %2232 = vmatprep.subr.mxu0 0.0
    %2233 = vmatpush1.msra.mxu0 0.0
    %2234 = vmatprep.subr.mxu0 0.0
    %2235 = vmatpush1.msra.mxu0 0.0
    %2236 = vmatprep.subr.mxu0 0.0
    %2237 = vmatpush1.msra.mxu0 0.0
    %2238 = vmatprep.subr.mxu0 0.0
    %2239 = vmatpush1.msra.mxu0 0.0
    %2240 = vmatprep.subr.mxu0 0.0
    %2241 = vmatpush1.msra.mxu0 0.0
    %2242 = vmatprep.mubr.f32.mxu0 0.0
    %2243 = vmatmul.mubr.f32.gmra.mrb[0].mxu0 %v2013
    %v2244 = vpop.f32.mrb[0].mxu0
    %v2245 = vadd.f32 0.0, %v2244
    %v2246 = vpop.f32.mrb[0].mxu0
    %v2247 = vadd.f32 0.0, %v2246
    %2248 = vdwg.mxu0
    %2249 = vmatprep.subr.mxu0 0.0
    %2250 = vmatpush1.msra.mxu0 %v369
    %2251 = vmatprep.subr.mxu0 0.0
    %2252 = vmatpush1.msra.mxu0 %v372
    %2253 = vmatprep.subr.mxu0 0.0
    %2254 = vmatpush1.msra.mxu0 %v375
    %2255 = vmatprep.subr.mxu0 0.0
    %2256 = vmatpush1.msra.mxu0 %v378
    %2257 = vmatprep.subr.mxu0 0.0
    %2258 = vmatpush1.msra.mxu0 %v381
    %2259 = vmatprep.subr.mxu0 0.0
    %2260 = vmatpush1.msra.mxu0 %v384
    %2261 = vmatprep.subr.mxu0 0.0
    %2262 = vmatpush1.msra.mxu0 %v387
    %2263 = vmatprep.subr.mxu0 0.0
    %2264 = vmatpush1.msra.mxu0 %v390
    %2265 = vmatprep.subr.mxu0 0.0
    %2266 = vmatpush1.msra.mxu0 %v393
    %2267 = vmatprep.subr.mxu0 0.0
    %2268 = vmatpush1.msra.mxu0 %v396
    %2269 = vmatprep.subr.mxu0 0.0
    %2270 = vmatpush1.msra.mxu0 %v399
    %2271 = vmatprep.subr.mxu0 0.0
    %2272 = vmatpush1.msra.mxu0 %v402
    %2273 = vmatprep.subr.mxu0 0.0
    %2274 = vmatpush1.msra.mxu0 %v405
    %2275 = vmatprep.subr.mxu0 0.0
    %2276 = vmatpush1.msra.mxu0 %v408
    %2277 = vmatprep.subr.mxu0 0.0
    %2278 = vmatpush1.msra.mxu0 %v411
    %2279 = vmatprep.subr.mxu0 0.0
    %2280 = vmatpush1.msra.mxu0 %v414
    %2281 = vmatprep.subr.mxu0 0.0
    %2282 = vmatpush1.msra.mxu0 0.0
    %2283 = vmatprep.subr.mxu0 0.0
    %2284 = vmatpush1.msra.mxu0 0.0
    %2285 = vmatprep.subr.mxu0 0.0
    %2286 = vmatpush1.msra.mxu0 0.0
    %2287 = vmatprep.subr.mxu0 0.0
    %2288 = vmatpush1.msra.mxu0 0.0
    %2289 = vmatprep.subr.mxu0 0.0
    %2290 = vmatpush1.msra.mxu0 0.0
    %2291 = vmatprep.subr.mxu0 0.0
    %2292 = vmatpush1.msra.mxu0 0.0
    %2293 = vmatprep.subr.mxu0 0.0
    %2294 = vmatpush1.msra.mxu0 0.0
    %2295 = vmatprep.subr.mxu0 0.0
    %2296 = vmatpush1.msra.mxu0 0.0
    %2297 = vmatprep.subr.mxu0 0.0
    %2298 = vmatpush1.msra.mxu0 0.0
    %2299 = vmatprep.subr.mxu0 0.0
    %2300 = vmatpush1.msra.mxu0 0.0
    %2301 = vmatprep.subr.mxu0 0.0
    %2302 = vmatpush1.msra.mxu0 0.0
    %2303 = vmatprep.subr.mxu0 0.0
    %2304 = vmatpush1.msra.mxu0 0.0
    %2305 = vmatprep.subr.mxu0 0.0
    %2306 = vmatpush1.msra.mxu0 0.0
    %2307 = vmatprep.subr.mxu0 0.0
    %2308 = vmatpush1.msra.mxu0 0.0
    %2309 = vmatprep.subr.mxu0 0.0
    %2310 = vmatpush1.msra.mxu0 0.0
    %2311 = vmatprep.subr.mxu0 0.0
    %2312 = vmatpush1.msra.mxu0 0.0
    %2313 = vmatprep.mubr.f32.mxu0 0.0
    %2314 = vmatmul.mubr.f32.gmra.mrb[0].mxu0 %v2013
    %v2315 = vpop.f32.mrb[0].mxu0
    %v2316 = vadd.f32 0.0, %v2315
    %v2317 = vpop.f32.mrb[0].mxu0
    %2318 = vdwg.mxu0
    %v2319 = vadd.f32 %v2175, %v2245
    %v2320 = vadd.f32 %v2176, %v2247
    %v2321 = vxor.u32 %v2319, 2147483648
    %v2322 = vxor.u32 %v2320, 2147483648
    %v2323 = vmul.f32 %v2321, 1.442695
    %v2324 = vpow.pop %v2323
    %v2325 = vmul.f32 %v2322, 1.442695
    %v2326 = vpow.pop %v2325
    %v2327 = vadd.f32 %v2324, 1.0
    %v2328 = vadd.f32 %v2326, 1.0
    %v2329 = vrcp.pop %v2327
    %v2330 = vmul.f32 1.0, %v2329
    %v2331 = vrcp.pop %v2328
    %v2332 = vmul.f32 1.0, %v2331
    %v2333 = vadd.f32 %v2316, %v340
    %v2334 = vmul.f32 %v2330, %v2333
    %v2335 = vadd.f32 %v2177, %v2334
    %v2336 = vtanh.pop %v2335
    %v2337 = vsub.f32 1.0, %v2332
    %v2338 = vmul.f32 %v2337, %v2336
    %v2339 = vmul.f32 %v2332, %v2013
    %v2340 = vadd.f32 %v2338, %v2339
    %2341 = vmatprep.subr.mxu0 %v579
    %2342 = vmatpush1.msra.mxu0 %v578
    %2343 = vmatprep.subr.mxu0 %v583
    %2344 = vmatpush1.msra.mxu0 %v582
    %2345 = vmatprep.subr.mxu0 %v587
    %2346 = vmatpush1.msra.mxu0 %v586
    %2347 = vmatprep.subr.mxu0 %v591
    %2348 = vmatpush1.msra.mxu0 %v590
    %2349 = vmatprep.subr.mxu0 %v595
    %2350 = vmatpush1.msra.mxu0 %v594
    %2351 = vmatprep.subr.mxu0 %v599
    %2352 = vmatpush1.msra.mxu0 %v598
    %2353 = vmatprep.subr.mxu0 %v603
    %2354 = vmatpush1.msra.mxu0 %v602
    %2355 = vmatprep.subr.mxu0 %v607
    %2356 = vmatpush1.msra.mxu0 %v606
    %2357 = vmatprep.subr.mxu0 %v611
    %2358 = vmatpush1.msra.mxu0 %v610
    %2359 = vmatprep.subr.mxu0 %v615
    %2360 = vmatpush1.msra.mxu0 %v614
    %2361 = vmatprep.subr.mxu0 %v619
    %2362 = vmatpush1.msra.mxu0 %v618
    %2363 = vmatprep.subr.mxu0 %v623
    %2364 = vmatpush1.msra.mxu0 %v622
    %2365 = vmatprep.subr.mxu0 %v627
    %2366 = vmatpush1.msra.mxu0 %v626
    %2367 = vmatprep.subr.mxu0 %v631
    %2368 = vmatpush1.msra.mxu0 %v630
    %2369 = vmatprep.subr.mxu0 %v635
    %2370 = vmatpush1.msra.mxu0 %v634
    %2371 = vmatprep.subr.mxu0 %v639
    %2372 = vmatpush1.msra.mxu0 %v638
    %2373 = vmatprep.subr.mxu0 %v643
    %2374 = vmatpush1.msra.mxu0 %v642
    %2375 = vmatprep.subr.mxu0 %v647
    %2376 = vmatpush1.msra.mxu0 %v646
    %2377 = vmatprep.subr.mxu0 %v651
    %2378 = vmatpush1.msra.mxu0 %v650
    %2379 = vmatprep.subr.mxu0 %v655
    %2380 = vmatpush1.msra.mxu0 %v654
    %2381 = vmatprep.subr.mxu0 %v659
    %2382 = vmatpush1.msra.mxu0 %v658
    %2383 = vmatprep.subr.mxu0 %v663
    %2384 = vmatpush1.msra.mxu0 %v662
    %2385 = vmatprep.subr.mxu0 %v667
    %2386 = vmatpush1.msra.mxu0 %v666
    %2387 = vmatprep.subr.mxu0 %v671
    %2388 = vmatpush1.msra.mxu0 %v670
    %2389 = vmatprep.subr.mxu0 %v675
    %2390 = vmatpush1.msra.mxu0 %v674
    %2391 = vmatprep.subr.mxu0 %v679
    %2392 = vmatpush1.msra.mxu0 %v678
    %2393 = vmatprep.subr.mxu0 %v683
    %2394 = vmatpush1.msra.mxu0 %v682
    %2395 = vmatprep.subr.mxu0 %v687
    %2396 = vmatpush1.msra.mxu0 %v686
    %2397 = vmatprep.subr.mxu0 %v691
    %2398 = vmatpush1.msra.mxu0 %v690
    %2399 = vmatprep.subr.mxu0 %v695
    %2400 = vmatpush1.msra.mxu0 %v694
    %2401 = vmatprep.subr.mxu0 %v699
    %2402 = vmatpush1.msra.mxu0 %v698
    %2403 = vmatprep.subr.mxu0 %v703
    %2404 = vmatpush1.msra.mxu0 %v702
    %2405 = vmatprep.mubr.f32.mxu0 %v2174
    %2406 = vmatmul.mubr.f32.gmra.mrb[0].mxu0 %v2340
    %v2407 = vpop.f32.mrb[0].mxu0
    %v2408 = vadd.f32 %v347, %v2407
    %v2409 = vpop.f32.mrb[0].mxu0
    %v2410 = vadd.f32 %v351, %v2409
    %2411 = vdwg.mxu0
    %2412 = vmatprep.subr.mxu0 %v581
    %2413 = vmatpush1.msra.mxu0 %v580
    %2414 = vmatprep.subr.mxu0 %v585
    %2415 = vmatpush1.msra.mxu0 %v584
    %2416 = vmatprep.subr.mxu0 %v589
    %2417 = vmatpush1.msra.mxu0 %v588
    %2418 = vmatprep.subr.mxu0 %v593
    %2419 = vmatpush1.msra.mxu0 %v592
    %2420 = vmatprep.subr.mxu0 %v597
    %2421 = vmatpush1.msra.mxu0 %v596
    %2422 = vmatprep.subr.mxu0 %v601
    %2423 = vmatpush1.msra.mxu0 %v600
    %2424 = vmatprep.subr.mxu0 %v605
    %2425 = vmatpush1.msra.mxu0 %v604
    %2426 = vmatprep.subr.mxu0 %v609
    %2427 = vmatpush1.msra.mxu0 %v608
    %2428 = vmatprep.subr.mxu0 %v613
    %2429 = vmatpush1.msra.mxu0 %v612
    %2430 = vmatprep.subr.mxu0 %v617
    %2431 = vmatpush1.msra.mxu0 %v616
    %2432 = vmatprep.subr.mxu0 %v621
    %2433 = vmatpush1.msra.mxu0 %v620
    %2434 = vmatprep.subr.mxu0 %v625
    %2435 = vmatpush1.msra.mxu0 %v624
    %2436 = vmatprep.subr.mxu0 %v629
    %2437 = vmatpush1.msra.mxu0 %v628
    %2438 = vmatprep.subr.mxu0 %v633
    %2439 = vmatpush1.msra.mxu0 %v632
    %2440 = vmatprep.subr.mxu0 %v637
    %2441 = vmatpush1.msra.mxu0 %v636
    %2442 = vmatprep.subr.mxu0 %v641
    %2443 = vmatpush1.msra.mxu0 %v640
    %2444 = vmatprep.subr.mxu0 %v645
    %2445 = vmatpush1.msra.mxu0 %v644
    %2446 = vmatprep.subr.mxu0 %v649
    %2447 = vmatpush1.msra.mxu0 %v648
    %2448 = vmatprep.subr.mxu0 %v653
    %2449 = vmatpush1.msra.mxu0 %v652
    %2450 = vmatprep.subr.mxu0 %v657
    %2451 = vmatpush1.msra.mxu0 %v656
    %2452 = vmatprep.subr.mxu0 %v661
    %2453 = vmatpush1.msra.mxu0 %v660
    %2454 = vmatprep.subr.mxu0 %v665
    %2455 = vmatpush1.msra.mxu0 %v664
    %2456 = vmatprep.subr.mxu0 %v669
    %2457 = vmatpush1.msra.mxu0 %v668
    %2458 = vmatprep.subr.mxu0 %v673
    %2459 = vmatpush1.msra.mxu0 %v672
    %2460 = vmatprep.subr.mxu0 %v677
    %2461 = vmatpush1.msra.mxu0 %v676
    %2462 = vmatprep.subr.mxu0 %v681
    %2463 = vmatpush1.msra.mxu0 %v680
    %2464 = vmatprep.subr.mxu0 %v685
    %2465 = vmatpush1.msra.mxu0 %v684
    %2466 = vmatprep.subr.mxu0 %v689
    %2467 = vmatpush1.msra.mxu0 %v688
    %2468 = vmatprep.subr.mxu0 %v693
    %2469 = vmatpush1.msra.mxu0 %v692
    %2470 = vmatprep.subr.mxu0 %v697
    %2471 = vmatpush1.msra.mxu0 %v696
    %2472 = vmatprep.subr.mxu0 %v701
    %2473 = vmatpush1.msra.mxu0 %v700
    %2474 = vmatprep.subr.mxu0 %v705
    %2475 = vmatpush1.msra.mxu0 %v704
    %2476 = vmatprep.mubr.f32.mxu0 %v2174
    %2477 = vmatmul.mubr.f32.gmra.mrb[0].mxu0 %v2340
    %v2478 = vpop.f32.mrb[0].mxu0
    %v2479 = vadd.f32 %v355, %v2478
    %v2480 = vpop.f32.mrb[0].mxu0
    %v2481 = vadd.f32 %v359, %v2480
    %2482 = vdwg.mxu0
    %v2483 = vxor.u32 %v2408, 2147483648
    %v2484 = vxor.u32 %v2410, 2147483648
    %v2485 = vmul.f32 %v2483, 1.442695
    %v2486 = vpow.pop %v2485
    %v2487 = vmul.f32 %v2484, 1.442695
    %v2488 = vpow.pop %v2487
    %v2489 = vadd.f32 %v2486, 1.0
    %v2490 = vadd.f32 %v2488, 1.0
    %v2491 = vrcp.pop %v2489
    %v2492 = vmul.f32 1.0, %v2491
    %v2493 = vrcp.pop %v2490
    %v2494 = vmul.f32 1.0, %v2493
    %v2495 = vmul.f32 %v2492, %v2481
    %v2496 = vadd.f32 %v2479, %v2495
    %v2497 = vtanh.pop %v2496
    %v2498 = vsub.f32 1.0, %v2494
    %v2499 = vmul.f32 %v2498, %v2497
    %v2500 = vmul.f32 %v2494, %v2174
    %v2501 = vadd.f32 %v2499, %v2500
    %v2502 = vld [vmem:[#allocation2 + $0x90] sm:$0xff]
    %v2503 = vld [vmem:[#allocation2 + $0x98] sm:$0xff]
    %v2504 = vld [vmem:[#allocation2 + $0xa0] sm:$0xff]
    %2505 = vmatprep.subr.mxu0 %v368
    %2506 = vmatpush1.msra.mxu0 %v367
    %2507 = vmatprep.subr.mxu0 %v371
    %2508 = vmatpush1.msra.mxu0 %v370
    %2509 = vmatprep.subr.mxu0 %v374
    %2510 = vmatpush1.msra.mxu0 %v373
    %2511 = vmatprep.subr.mxu0 %v377
    %2512 = vmatpush1.msra.mxu0 %v376
    %2513 = vmatprep.subr.mxu0 %v380
    %2514 = vmatpush1.msra.mxu0 %v379
    %2515 = vmatprep.subr.mxu0 %v383
    %2516 = vmatpush1.msra.mxu0 %v382
    %2517 = vmatprep.subr.mxu0 %v386
    %2518 = vmatpush1.msra.mxu0 %v385
    %2519 = vmatprep.subr.mxu0 %v389
    %2520 = vmatpush1.msra.mxu0 %v388
    %2521 = vmatprep.subr.mxu0 %v392
    %2522 = vmatpush1.msra.mxu0 %v391
    %2523 = vmatprep.subr.mxu0 %v395
    %2524 = vmatpush1.msra.mxu0 %v394
    %2525 = vmatprep.subr.mxu0 %v398
    %2526 = vmatpush1.msra.mxu0 %v397
    %2527 = vmatprep.subr.mxu0 %v401
    %2528 = vmatpush1.msra.mxu0 %v400
    %2529 = vmatprep.subr.mxu0 %v404
    %2530 = vmatpush1.msra.mxu0 %v403
    %2531 = vmatprep.subr.mxu0 %v407
    %2532 = vmatpush1.msra.mxu0 %v406
    %2533 = vmatprep.subr.mxu0 %v410
    %2534 = vmatpush1.msra.mxu0 %v409
    %2535 = vmatprep.subr.mxu0 %v413
    %2536 = vmatpush1.msra.mxu0 %v412
    %2537 = vmatprep.subr.mxu0 0.0
    %2538 = vmatpush1.msra.mxu0 0.0
    %2539 = vmatprep.subr.mxu0 0.0
    %2540 = vmatpush1.msra.mxu0 0.0
    %2541 = vmatprep.subr.mxu0 0.0
    %2542 = vmatpush1.msra.mxu0 0.0
    %2543 = vmatprep.subr.mxu0 0.0
    %2544 = vmatpush1.msra.mxu0 0.0
    %2545 = vmatprep.subr.mxu0 0.0
    %2546 = vmatpush1.msra.mxu0 0.0
    %2547 = vmatprep.subr.mxu0 0.0
    %2548 = vmatpush1.msra.mxu0 0.0
    %2549 = vmatprep.subr.mxu0 0.0
    %2550 = vmatpush1.msra.mxu0 0.0
    %2551 = vmatprep.subr.mxu0 0.0
    %2552 = vmatpush1.msra.mxu0 0.0
    %2553 = vmatprep.subr.mxu0 0.0
    %2554 = vmatpush1.msra.mxu0 0.0
    %2555 = vmatprep.subr.mxu0 0.0
    %2556 = vmatpush1.msra.mxu0 0.0
    %2557 = vmatprep.subr.mxu0 0.0
    %2558 = vmatpush1.msra.mxu0 0.0
    %2559 = vmatprep.subr.mxu0 0.0
    %2560 = vmatpush1.msra.mxu0 0.0
    %2561 = vmatprep.subr.mxu0 0.0
    %2562 = vmatpush1.msra.mxu0 0.0
    %2563 = vmatprep.subr.mxu0 0.0
    %2564 = vmatpush1.msra.mxu0 0.0
    %2565 = vmatprep.subr.mxu0 0.0
    %2566 = vmatpush1.msra.mxu0 0.0
    %2567 = vmatprep.subr.mxu0 0.0
    %2568 = vmatpush1.msra.mxu0 0.0
    %2569 = vmatprep.mubr.f32.mxu0 0.0
    %2570 = vmatmul.mubr.f32.gmra.mrb[0].mxu0 %v2340
    %v2571 = vpop.f32.mrb[0].mxu0
    %v2572 = vadd.f32 0.0, %v2571
    %v2573 = vpop.f32.mrb[0].mxu0
    %v2574 = vadd.f32 0.0, %v2573
    %2575 = vdwg.mxu0
    %2576 = vmatprep.subr.mxu0 0.0
    %2577 = vmatpush1.msra.mxu0 %v369
    %2578 = vmatprep.subr.mxu0 0.0
    %2579 = vmatpush1.msra.mxu0 %v372
    %2580 = vmatprep.subr.mxu0 0.0
    %2581 = vmatpush1.msra.mxu0 %v375
    %2582 = vmatprep.subr.mxu0 0.0
    %2583 = vmatpush1.msra.mxu0 %v378
    %2584 = vmatprep.subr.mxu0 0.0
    %2585 = vmatpush1.msra.mxu0 %v381
    %2586 = vmatprep.subr.mxu0 0.0
    %2587 = vmatpush1.msra.mxu0 %v384
    %2588 = vmatprep.subr.mxu0 0.0
    %2589 = vmatpush1.msra.mxu0 %v387
    %2590 = vmatprep.subr.mxu0 0.0
    %2591 = vmatpush1.msra.mxu0 %v390
    %2592 = vmatprep.subr.mxu0 0.0
    %2593 = vmatpush1.msra.mxu0 %v393
    %2594 = vmatprep.subr.mxu0 0.0
    %2595 = vmatpush1.msra.mxu0 %v396
    %2596 = vmatprep.subr.mxu0 0.0
    %2597 = vmatpush1.msra.mxu0 %v399
    %2598 = vmatprep.subr.mxu0 0.0
    %2599 = vmatpush1.msra.mxu0 %v402
    %2600 = vmatprep.subr.mxu0 0.0
    %2601 = vmatpush1.msra.mxu0 %v405
    %2602 = vmatprep.subr.mxu0 0.0
    %2603 = vmatpush1.msra.mxu0 %v408
    %2604 = vmatprep.subr.mxu0 0.0
    %2605 = vmatpush1.msra.mxu0 %v411
    %2606 = vmatprep.subr.mxu0 0.0
    %2607 = vmatpush1.msra.mxu0 %v414
    %2608 = vmatprep.subr.mxu0 0.0
    %2609 = vmatpush1.msra.mxu0 0.0
    %2610 = vmatprep.subr.mxu0 0.0
    %2611 = vmatpush1.msra.mxu0 0.0
    %2612 = vmatprep.subr.mxu0 0.0
    %2613 = vmatpush1.msra.mxu0 0.0
    %2614 = vmatprep.subr.mxu0 0.0
    %2615 = vmatpush1.msra.mxu0 0.0
    %2616 = vmatprep.subr.mxu0 0.0
    %2617 = vmatpush1.msra.mxu0 0.0
    %2618 = vmatprep.subr.mxu0 0.0
    %2619 = vmatpush1.msra.mxu0 0.0
    %2620 = vmatprep.subr.mxu0 0.0
    %2621 = vmatpush1.msra.mxu0 0.0
    %2622 = vmatprep.subr.mxu0 0.0
    %2623 = vmatpush1.msra.mxu0 0.0
    %2624 = vmatprep.subr.mxu0 0.0
    %2625 = vmatpush1.msra.mxu0 0.0
    %2626 = vmatprep.subr.mxu0 0.0
    %2627 = vmatpush1.msra.mxu0 0.0
    %2628 = vmatprep.subr.mxu0 0.0
    %2629 = vmatpush1.msra.mxu0 0.0
    %2630 = vmatprep.subr.mxu0 0.0
    %2631 = vmatpush1.msra.mxu0 0.0
    %2632 = vmatprep.subr.mxu0 0.0
    %2633 = vmatpush1.msra.mxu0 0.0
    %2634 = vmatprep.subr.mxu0 0.0
    %2635 = vmatpush1.msra.mxu0 0.0
    %2636 = vmatprep.subr.mxu0 0.0
    %2637 = vmatpush1.msra.mxu0 0.0
    %2638 = vmatprep.subr.mxu0 0.0
    %2639 = vmatpush1.msra.mxu0 0.0
    %2640 = vmatprep.mubr.f32.mxu0 0.0
    %2641 = vmatmul.mubr.f32.gmra.mrb[0].mxu0 %v2340
    %v2642 = vpop.f32.mrb[0].mxu0
    %v2643 = vadd.f32 0.0, %v2642
    %v2644 = vpop.f32.mrb[0].mxu0
    %2645 = vdwg.mxu0
    %v2646 = vadd.f32 %v2502, %v2572
    %v2647 = vadd.f32 %v2503, %v2574
    %v2648 = vxor.u32 %v2646, 2147483648
    %v2649 = vxor.u32 %v2647, 2147483648
    %v2650 = vmul.f32 %v2648, 1.442695
    %v2651 = vpow.pop %v2650
    %v2652 = vmul.f32 %v2649, 1.442695
    %v2653 = vpow.pop %v2652
    %v2654 = vadd.f32 %v2651, 1.0
    %v2655 = vadd.f32 %v2653, 1.0
    %v2656 = vrcp.pop %v2654
    %v2657 = vmul.f32 1.0, %v2656
    %v2658 = vrcp.pop %v2655
    %v2659 = vmul.f32 1.0, %v2658
    %v2660 = vadd.f32 %v2643, %v340
    %v2661 = vmul.f32 %v2657, %v2660
    %v2662 = vadd.f32 %v2504, %v2661
    %v2663 = vtanh.pop %v2662
    %v2664 = vsub.f32 1.0, %v2659
    %v2665 = vmul.f32 %v2664, %v2663
    %v2666 = vmul.f32 %v2659, %v2340
    %v2667 = vadd.f32 %v2665, %v2666
    %2668 = vmatprep.subr.mxu0 %v579
    %2669 = vmatpush1.msra.mxu0 %v578
    %2670 = vmatprep.subr.mxu0 %v583
    %2671 = vmatpush1.msra.mxu0 %v582
    %2672 = vmatprep.subr.mxu0 %v587
    %2673 = vmatpush1.msra.mxu0 %v586
    %2674 = vmatprep.subr.mxu0 %v591
    %2675 = vmatpush1.msra.mxu0 %v590
    %2676 = vmatprep.subr.mxu0 %v595
    %2677 = vmatpush1.msra.mxu0 %v594
    %2678 = vmatprep.subr.mxu0 %v599
    %2679 = vmatpush1.msra.mxu0 %v598
    %2680 = vmatprep.subr.mxu0 %v603
    %2681 = vmatpush1.msra.mxu0 %v602
    %2682 = vmatprep.subr.mxu0 %v607
    %2683 = vmatpush1.msra.mxu0 %v606
    %2684 = vmatprep.subr.mxu0 %v611
    %2685 = vmatpush1.msra.mxu0 %v610
    %2686 = vmatprep.subr.mxu0 %v615
    %2687 = vmatpush1.msra.mxu0 %v614
    %2688 = vmatprep.subr.mxu0 %v619
    %2689 = vmatpush1.msra.mxu0 %v618
    %2690 = vmatprep.subr.mxu0 %v623
    %2691 = vmatpush1.msra.mxu0 %v622
    %2692 = vmatprep.subr.mxu0 %v627
    %2693 = vmatpush1.msra.mxu0 %v626
    %2694 = vmatprep.subr.mxu0 %v631
    %2695 = vmatpush1.msra.mxu0 %v630
    %2696 = vmatprep.subr.mxu0 %v635
    %2697 = vmatpush1.msra.mxu0 %v634
    %2698 = vmatprep.subr.mxu0 %v639
    %2699 = vmatpush1.msra.mxu0 %v638
    %2700 = vmatprep.subr.mxu0 %v643
    %2701 = vmatpush1.msra.mxu0 %v642
    %2702 = vmatprep.subr.mxu0 %v647
    %2703 = vmatpush1.msra.mxu0 %v646
    %2704 = vmatprep.subr.mxu0 %v651
    %2705 = vmatpush1.msra.mxu0 %v650
    %2706 = vmatprep.subr.mxu0 %v655
    %2707 = vmatpush1.msra.mxu0 %v654
    %2708 = vmatprep.subr.mxu0 %v659
    %2709 = vmatpush1.msra.mxu0 %v658
    %2710 = vmatprep.subr.mxu0 %v663
    %2711 = vmatpush1.msra.mxu0 %v662
    %2712 = vmatprep.subr.mxu0 %v667
    %2713 = vmatpush1.msra.mxu0 %v666
    %2714 = vmatprep.subr.mxu0 %v671
    %2715 = vmatpush1.msra.mxu0 %v670
    %2716 = vmatprep.subr.mxu0 %v675
    %2717 = vmatpush1.msra.mxu0 %v674
    %2718 = vmatprep.subr.mxu0 %v679
    %2719 = vmatpush1.msra.mxu0 %v678
    %2720 = vmatprep.subr.mxu0 %v683
    %2721 = vmatpush1.msra.mxu0 %v682
    %2722 = vmatprep.subr.mxu0 %v687
    %2723 = vmatpush1.msra.mxu0 %v686
    %2724 = vmatprep.subr.mxu0 %v691
    %2725 = vmatpush1.msra.mxu0 %v690
    %2726 = vmatprep.subr.mxu0 %v695
    %2727 = vmatpush1.msra.mxu0 %v694
    %2728 = vmatprep.subr.mxu0 %v699
    %2729 = vmatpush1.msra.mxu0 %v698
    %2730 = vmatprep.subr.mxu0 %v703
    %2731 = vmatpush1.msra.mxu0 %v702
    %2732 = vmatprep.mubr.f32.mxu0 %v2501
    %2733 = vmatmul.mubr.f32.gmra.mrb[0].mxu0 %v2667
    %v2734 = vpop.f32.mrb[0].mxu0
    %v2735 = vadd.f32 %v347, %v2734
    %v2736 = vpop.f32.mrb[0].mxu0
    %v2737 = vadd.f32 %v351, %v2736
    %2738 = vdwg.mxu0
    %2739 = vmatprep.subr.mxu0 %v581
    %2740 = vmatpush1.msra.mxu0 %v580
    %2741 = vmatprep.subr.mxu0 %v585
    %2742 = vmatpush1.msra.mxu0 %v584
    %2743 = vmatprep.subr.mxu0 %v589
    %2744 = vmatpush1.msra.mxu0 %v588
    %2745 = vmatprep.subr.mxu0 %v593
    %2746 = vmatpush1.msra.mxu0 %v592
    %2747 = vmatprep.subr.mxu0 %v597
    %2748 = vmatpush1.msra.mxu0 %v596
    %2749 = vmatprep.subr.mxu0 %v601
    %2750 = vmatpush1.msra.mxu0 %v600
    %2751 = vmatprep.subr.mxu0 %v605
    %2752 = vmatpush1.msra.mxu0 %v604
    %2753 = vmatprep.subr.mxu0 %v609
    %2754 = vmatpush1.msra.mxu0 %v608
    %2755 = vmatprep.subr.mxu0 %v613
    %2756 = vmatpush1.msra.mxu0 %v612
    %2757 = vmatprep.subr.mxu0 %v617
    %2758 = vmatpush1.msra.mxu0 %v616
    %2759 = vmatprep.subr.mxu0 %v621
    %2760 = vmatpush1.msra.mxu0 %v620
    %2761 = vmatprep.subr.mxu0 %v625
    %2762 = vmatpush1.msra.mxu0 %v624
    %2763 = vmatprep.subr.mxu0 %v629
    %2764 = vmatpush1.msra.mxu0 %v628
    %2765 = vmatprep.subr.mxu0 %v633
    %2766 = vmatpush1.msra.mxu0 %v632
    %2767 = vmatprep.subr.mxu0 %v637
    %2768 = vmatpush1.msra.mxu0 %v636
    %2769 = vmatprep.subr.mxu0 %v641
    %2770 = vmatpush1.msra.mxu0 %v640
    %2771 = vmatprep.subr.mxu0 %v645
    %2772 = vmatpush1.msra.mxu0 %v644
    %2773 = vmatprep.subr.mxu0 %v649
    %2774 = vmatpush1.msra.mxu0 %v648
    %2775 = vmatprep.subr.mxu0 %v653
    %2776 = vmatpush1.msra.mxu0 %v652
    %2777 = vmatprep.subr.mxu0 %v657
    %2778 = vmatpush1.msra.mxu0 %v656
    %2779 = vmatprep.subr.mxu0 %v661
    %2780 = vmatpush1.msra.mxu0 %v660
    %2781 = vmatprep.subr.mxu0 %v665
    %2782 = vmatpush1.msra.mxu0 %v664
    %2783 = vmatprep.subr.mxu0 %v669
    %2784 = vmatpush1.msra.mxu0 %v668
    %2785 = vmatprep.subr.mxu0 %v673
    %2786 = vmatpush1.msra.mxu0 %v672
    %2787 = vmatprep.subr.mxu0 %v677
    %2788 = vmatpush1.msra.mxu0 %v676
    %2789 = vmatprep.subr.mxu0 %v681
    %2790 = vmatpush1.msra.mxu0 %v680
    %2791 = vmatprep.subr.mxu0 %v685
    %2792 = vmatpush1.msra.mxu0 %v684
    %2793 = vmatprep.subr.mxu0 %v689
    %2794 = vmatpush1.msra.mxu0 %v688
    %2795 = vmatprep.subr.mxu0 %v693
    %2796 = vmatpush1.msra.mxu0 %v692
    %2797 = vmatprep.subr.mxu0 %v697
    %2798 = vmatpush1.msra.mxu0 %v696
    %2799 = vmatprep.subr.mxu0 %v701
    %2800 = vmatpush1.msra.mxu0 %v700
    %2801 = vmatprep.subr.mxu0 %v705
    %2802 = vmatpush1.msra.mxu0 %v704
    %2803 = vmatprep.mubr.f32.mxu0 %v2501
    %2804 = vmatmul.mubr.f32.gmra.mrb[0].mxu0 %v2667
    %v2805 = vpop.f32.mrb[0].mxu0
    %v2806 = vadd.f32 %v355, %v2805
    %v2807 = vpop.f32.mrb[0].mxu0
    %v2808 = vadd.f32 %v359, %v2807
    %2809 = vdwg.mxu0
    %v2810 = vxor.u32 %v2735, 2147483648
    %v2811 = vxor.u32 %v2737, 2147483648
    %v2812 = vmul.f32 %v2810, 1.442695
    %v2813 = vpow.pop %v2812
    %v2814 = vmul.f32 %v2811, 1.442695
    %v2815 = vpow.pop %v2814
    %v2816 = vadd.f32 %v2813, 1.0
    %v2817 = vadd.f32 %v2815, 1.0
    %v2818 = vrcp.pop %v2816
    %v2819 = vmul.f32 1.0, %v2818
    %v2820 = vrcp.pop %v2817
    %v2821 = vmul.f32 1.0, %v2820
    %v2822 = vmul.f32 %v2819, %v2808
    %v2823 = vadd.f32 %v2806, %v2822
    %v2824 = vtanh.pop %v2823
    %v2825 = vsub.f32 1.0, %v2821
    %v2826 = vmul.f32 %v2825, %v2824
    %v2827 = vmul.f32 %v2821, %v2501
    %v2828 = vadd.f32 %v2826, %v2827
    %v2829 = vld [vmem:[#allocation2 + $0xa8] sm:$0xff]
    %v2830 = vld [vmem:[#allocation2 + $0xb0] sm:$0xff]
    %v2831 = vld [vmem:[#allocation2 + $0xb8] sm:$0xff]
    %2832 = vmatprep.subr.mxu0 %v368
    %2833 = vmatpush1.msra.mxu0 %v367
    %2834 = vmatprep.subr.mxu0 %v371
    %2835 = vmatpush1.msra.mxu0 %v370
    %2836 = vmatprep.subr.mxu0 %v374
    %2837 = vmatpush1.msra.mxu0 %v373
    %2838 = vmatprep.subr.mxu0 %v377
    %2839 = vmatpush1.msra.mxu0 %v376
    %2840 = vmatprep.subr.mxu0 %v380
    %2841 = vmatpush1.msra.mxu0 %v379
    %2842 = vmatprep.subr.mxu0 %v383
    %2843 = vmatpush1.msra.mxu0 %v382
    %2844 = vmatprep.subr.mxu0 %v386
    %2845 = vmatpush1.msra.mxu0 %v385
    %2846 = vmatprep.subr.mxu0 %v389
    %2847 = vmatpush1.msra.mxu0 %v388
    %2848 = vmatprep.subr.mxu0 %v392
    %2849 = vmatpush1.msra.mxu0 %v391
    %2850 = vmatprep.subr.mxu0 %v395
    %2851 = vmatpush1.msra.mxu0 %v394
    %2852 = vmatprep.subr.mxu0 %v398
    %2853 = vmatpush1.msra.mxu0 %v397
    %2854 = vmatprep.subr.mxu0 %v401
    %2855 = vmatpush1.msra.mxu0 %v400
    %2856 = vmatprep.subr.mxu0 %v404
    %2857 = vmatpush1.msra.mxu0 %v403
    %2858 = vmatprep.subr.mxu0 %v407
    %2859 = vmatpush1.msra.mxu0 %v406
    %2860 = vmatprep.subr.mxu0 %v410
    %2861 = vmatpush1.msra.mxu0 %v409
    %2862 = vmatprep.subr.mxu0 %v413
    %2863 = vmatpush1.msra.mxu0 %v412
    %2864 = vmatprep.subr.mxu0 0.0
    %2865 = vmatpush1.msra.mxu0 0.0
    %2866 = vmatprep.subr.mxu0 0.0
    %2867 = vmatpush1.msra.mxu0 0.0
    %2868 = vmatprep.subr.mxu0 0.0
    %2869 = vmatpush1.msra.mxu0 0.0
    %2870 = vmatprep.subr.mxu0 0.0
    %2871 = vmatpush1.msra.mxu0 0.0
    %2872 = vmatprep.subr.mxu0 0.0
    %2873 = vmatpush1.msra.mxu0 0.0
    %2874 = vmatprep.subr.mxu0 0.0
    %2875 = vmatpush1.msra.mxu0 0.0
    %2876 = vmatprep.subr.mxu0 0.0
    %2877 = vmatpush1.msra.mxu0 0.0
    %2878 = vmatprep.subr.mxu0 0.0
    %2879 = vmatpush1.msra.mxu0 0.0
    %2880 = vmatprep.subr.mxu0 0.0
    %2881 = vmatpush1.msra.mxu0 0.0
    %2882 = vmatprep.subr.mxu0 0.0
    %2883 = vmatpush1.msra.mxu0 0.0
    %2884 = vmatprep.subr.mxu0 0.0
    %2885 = vmatpush1.msra.mxu0 0.0
    %2886 = vmatprep.subr.mxu0 0.0
    %2887 = vmatpush1.msra.mxu0 0.0
    %2888 = vmatprep.subr.mxu0 0.0
    %2889 = vmatpush1.msra.mxu0 0.0
    %2890 = vmatprep.subr.mxu0 0.0
    %2891 = vmatpush1.msra.mxu0 0.0
    %2892 = vmatprep.subr.mxu0 0.0
    %2893 = vmatpush1.msra.mxu0 0.0
    %2894 = vmatprep.subr.mxu0 0.0
    %2895 = vmatpush1.msra.mxu0 0.0
    %2896 = vmatprep.mubr.f32.mxu0 0.0
    %2897 = vmatmul.mubr.f32.gmra.mrb[0].mxu0 %v2667
    %v2898 = vpop.f32.mrb[0].mxu0
    %v2899 = vadd.f32 0.0, %v2898
    %v2900 = vpop.f32.mrb[0].mxu0
    %v2901 = vadd.f32 0.0, %v2900
    %2902 = vdwg.mxu0
    %2903 = vmatprep.subr.mxu0 0.0
    %2904 = vmatpush1.msra.mxu0 %v369
    %2905 = vmatprep.subr.mxu0 0.0
    %2906 = vmatpush1.msra.mxu0 %v372
    %2907 = vmatprep.subr.mxu0 0.0
    %2908 = vmatpush1.msra.mxu0 %v375
    %2909 = vmatprep.subr.mxu0 0.0
    %2910 = vmatpush1.msra.mxu0 %v378
    %2911 = vmatprep.subr.mxu0 0.0
    %2912 = vmatpush1.msra.mxu0 %v381
    %2913 = vmatprep.subr.mxu0 0.0
    %2914 = vmatpush1.msra.mxu0 %v384
    %2915 = vmatprep.subr.mxu0 0.0
    %2916 = vmatpush1.msra.mxu0 %v387
    %2917 = vmatprep.subr.mxu0 0.0
    %2918 = vmatpush1.msra.mxu0 %v390
    %2919 = vmatprep.subr.mxu0 0.0
    %2920 = vmatpush1.msra.mxu0 %v393
    %2921 = vmatprep.subr.mxu0 0.0
    %2922 = vmatpush1.msra.mxu0 %v396
    %2923 = vmatprep.subr.mxu0 0.0
    %2924 = vmatpush1.msra.mxu0 %v399
    %2925 = vmatprep.subr.mxu0 0.0
    %2926 = vmatpush1.msra.mxu0 %v402
    %2927 = vmatprep.subr.mxu0 0.0
    %2928 = vmatpush1.msra.mxu0 %v405
    %2929 = vmatprep.subr.mxu0 0.0
    %2930 = vmatpush1.msra.mxu0 %v408
    %2931 = vmatprep.subr.mxu0 0.0
    %2932 = vmatpush1.msra.mxu0 %v411
    %2933 = vmatprep.subr.mxu0 0.0
    %2934 = vmatpush1.msra.mxu0 %v414
    %2935 = vmatprep.subr.mxu0 0.0
    %2936 = vmatpush1.msra.mxu0 0.0
    %2937 = vmatprep.subr.mxu0 0.0
    %2938 = vmatpush1.msra.mxu0 0.0
    %2939 = vmatprep.subr.mxu0 0.0
    %2940 = vmatpush1.msra.mxu0 0.0
    %2941 = vmatprep.subr.mxu0 0.0
    %2942 = vmatpush1.msra.mxu0 0.0
    %2943 = vmatprep.subr.mxu0 0.0
    %2944 = vmatpush1.msra.mxu0 0.0
    %2945 = vmatprep.subr.mxu0 0.0
    %2946 = vmatpush1.msra.mxu0 0.0
    %2947 = vmatprep.subr.mxu0 0.0
    %2948 = vmatpush1.msra.mxu0 0.0
    %2949 = vmatprep.subr.mxu0 0.0
    %2950 = vmatpush1.msra.mxu0 0.0
    %2951 = vmatprep.subr.mxu0 0.0
    %2952 = vmatpush1.msra.mxu0 0.0
    %2953 = vmatprep.subr.mxu0 0.0
    %2954 = vmatpush1.msra.mxu0 0.0
    %2955 = vmatprep.subr.mxu0 0.0
    %2956 = vmatpush1.msra.mxu0 0.0
    %2957 = vmatprep.subr.mxu0 0.0
    %2958 = vmatpush1.msra.mxu0 0.0
    %2959 = vmatprep.subr.mxu0 0.0
    %2960 = vmatpush1.msra.mxu0 0.0
    %2961 = vmatprep.subr.mxu0 0.0
    %2962 = vmatpush1.msra.mxu0 0.0
    %2963 = vmatprep.subr.mxu0 0.0
    %2964 = vmatpush1.msra.mxu0 0.0
    %2965 = vmatprep.subr.mxu0 0.0
    %2966 = vmatpush1.msra.mxu0 0.0
    %2967 = vmatprep.mubr.f32.mxu0 0.0
    %2968 = vmatmul.mubr.f32.gmra.mrb[0].mxu0 %v2667
    %v2969 = vpop.f32.mrb[0].mxu0
    %v2970 = vadd.f32 0.0, %v2969
    %v2971 = vpop.f32.mrb[0].mxu0
    %2972 = vdwg.mxu0
    %v2973 = vadd.f32 %v2829, %v2899
    %v2974 = vadd.f32 %v2830, %v2901
    %v2975 = vxor.u32 %v2973, 2147483648
    %v2976 = vxor.u32 %v2974, 2147483648
    %v2977 = vmul.f32 %v2975, 1.442695
    %v2978 = vpow.pop %v2977
    %v2979 = vmul.f32 %v2976, 1.442695
    %v2980 = vpow.pop %v2979
    %v2981 = vadd.f32 %v2978, 1.0
    %v2982 = vadd.f32 %v2980, 1.0
    %v2983 = vrcp.pop %v2981
    %v2984 = vmul.f32 1.0, %v2983
    %v2985 = vrcp.pop %v2982
    %v2986 = vmul.f32 1.0, %v2985
    %v2987 = vadd.f32 %v2970, %v340
    %v2988 = vmul.f32 %v2984, %v2987
    %v2989 = vadd.f32 %v2831, %v2988
    %v2990 = vtanh.pop %v2989
    %v2991 = vsub.f32 1.0, %v2986
    %v2992 = vmul.f32 %v2991, %v2990
    %v2993 = vmul.f32 %v2986, %v2667
    %v2994 = vadd.f32 %v2992, %v2993
    %2995 = vmatprep.subr.mxu0 %v579
    %2996 = vmatpush1.msra.mxu0 %v578
    %2997 = vmatprep.subr.mxu0 %v583
    %2998 = vmatpush1.msra.mxu0 %v582
    %2999 = vmatprep.subr.mxu0 %v587
    %3000 = vmatpush1.msra.mxu0 %v586
    %3001 = vmatprep.subr.mxu0 %v591
    %3002 = vmatpush1.msra.mxu0 %v590
    %3003 = vmatprep.subr.mxu0 %v595
    %3004 = vmatpush1.msra.mxu0 %v594
    %3005 = vmatprep.subr.mxu0 %v599
    %3006 = vmatpush1.msra.mxu0 %v598
    %3007 = vmatprep.subr.mxu0 %v603
    %3008 = vmatpush1.msra.mxu0 %v602
    %3009 = vmatprep.subr.mxu0 %v607
    %3010 = vmatpush1.msra.mxu0 %v606
    %3011 = vmatprep.subr.mxu0 %v611
    %3012 = vmatpush1.msra.mxu0 %v610
    %3013 = vmatprep.subr.mxu0 %v615
    %3014 = vmatpush1.msra.mxu0 %v614
    %3015 = vmatprep.subr.mxu0 %v619
    %3016 = vmatpush1.msra.mxu0 %v618
    %3017 = vmatprep.subr.mxu0 %v623
    %3018 = vmatpush1.msra.mxu0 %v622
    %3019 = vmatprep.subr.mxu0 %v627
    %3020 = vmatpush1.msra.mxu0 %v626
    %3021 = vmatprep.subr.mxu0 %v631
    %3022 = vmatpush1.msra.mxu0 %v630
    %3023 = vmatprep.subr.mxu0 %v635
    %3024 = vmatpush1.msra.mxu0 %v634
    %3025 = vmatprep.subr.mxu0 %v639
    %3026 = vmatpush1.msra.mxu0 %v638
    %3027 = vmatprep.subr.mxu0 %v643
    %3028 = vmatpush1.msra.mxu0 %v642
    %3029 = vmatprep.subr.mxu0 %v647
    %3030 = vmatpush1.msra.mxu0 %v646
    %3031 = vmatprep.subr.mxu0 %v651
    %3032 = vmatpush1.msra.mxu0 %v650
    %3033 = vmatprep.subr.mxu0 %v655
    %3034 = vmatpush1.msra.mxu0 %v654
    %3035 = vmatprep.subr.mxu0 %v659
    %3036 = vmatpush1.msra.mxu0 %v658
    %3037 = vmatprep.subr.mxu0 %v663
    %3038 = vmatpush1.msra.mxu0 %v662
    %3039 = vmatprep.subr.mxu0 %v667
    %3040 = vmatpush1.msra.mxu0 %v666
    %3041 = vmatprep.subr.mxu0 %v671
    %3042 = vmatpush1.msra.mxu0 %v670
    %3043 = vmatprep.subr.mxu0 %v675
    %3044 = vmatpush1.msra.mxu0 %v674
    %3045 = vmatprep.subr.mxu0 %v679
    %3046 = vmatpush1.msra.mxu0 %v678
    %3047 = vmatprep.subr.mxu0 %v683
    %3048 = vmatpush1.msra.mxu0 %v682
    %3049 = vmatprep.subr.mxu0 %v687
    %3050 = vmatpush1.msra.mxu0 %v686
    %3051 = vmatprep.subr.mxu0 %v691
    %3052 = vmatpush1.msra.mxu0 %v690
    %3053 = vmatprep.subr.mxu0 %v695
    %3054 = vmatpush1.msra.mxu0 %v694
    %3055 = vmatprep.subr.mxu0 %v699
    %3056 = vmatpush1.msra.mxu0 %v698
    %3057 = vmatprep.subr.mxu0 %v703
    %3058 = vmatpush1.msra.mxu0 %v702
    %3059 = vmatprep.mubr.f32.mxu0 %v2828
    %3060 = vmatmul.mubr.f32.gmra.mrb[0].mxu0 %v2994
    %v3061 = vpop.f32.mrb[0].mxu0
    %v3062 = vadd.f32 %v347, %v3061
    %v3063 = vpop.f32.mrb[0].mxu0
    %v3064 = vadd.f32 %v351, %v3063
    %3065 = vdwg.mxu0
    %3066 = vmatprep.subr.mxu0 %v581
    %3067 = vmatpush1.msra.mxu0 %v580
    %3068 = vmatprep.subr.mxu0 %v585
    %3069 = vmatpush1.msra.mxu0 %v584
    %3070 = vmatprep.subr.mxu0 %v589
    %3071 = vmatpush1.msra.mxu0 %v588
    %3072 = vmatprep.subr.mxu0 %v593
    %3073 = vmatpush1.msra.mxu0 %v592
    %3074 = vmatprep.subr.mxu0 %v597
    %3075 = vmatpush1.msra.mxu0 %v596
    %3076 = vmatprep.subr.mxu0 %v601
    %3077 = vmatpush1.msra.mxu0 %v600
    %3078 = vmatprep.subr.mxu0 %v605
    %3079 = vmatpush1.msra.mxu0 %v604
    %3080 = vmatprep.subr.mxu0 %v609
    %3081 = vmatpush1.msra.mxu0 %v608
    %3082 = vmatprep.subr.mxu0 %v613
    %3083 = vmatpush1.msra.mxu0 %v612
    %3084 = vmatprep.subr.mxu0 %v617
    %3085 = vmatpush1.msra.mxu0 %v616
    %3086 = vmatprep.subr.mxu0 %v621
    %3087 = vmatpush1.msra.mxu0 %v620
    %3088 = vmatprep.subr.mxu0 %v625
    %3089 = vmatpush1.msra.mxu0 %v624
    %3090 = vmatprep.subr.mxu0 %v629
    %3091 = vmatpush1.msra.mxu0 %v628
    %3092 = vmatprep.subr.mxu0 %v633
    %3093 = vmatpush1.msra.mxu0 %v632
    %3094 = vmatprep.subr.mxu0 %v637
    %3095 = vmatpush1.msra.mxu0 %v636
    %3096 = vmatprep.subr.mxu0 %v641
    %3097 = vmatpush1.msra.mxu0 %v640
    %3098 = vmatprep.subr.mxu0 %v645
    %3099 = vmatpush1.msra.mxu0 %v644
    %3100 = vmatprep.subr.mxu0 %v649
    %3101 = vmatpush1.msra.mxu0 %v648
    %3102 = vmatprep.subr.mxu0 %v653
    %3103 = vmatpush1.msra.mxu0 %v652
    %3104 = vmatprep.subr.mxu0 %v657
    %3105 = vmatpush1.msra.mxu0 %v656
    %3106 = vmatprep.subr.mxu0 %v661
    %3107 = vmatpush1.msra.mxu0 %v660
    %3108 = vmatprep.subr.mxu0 %v665
    %3109 = vmatpush1.msra.mxu0 %v664
    %3110 = vmatprep.subr.mxu0 %v669
    %3111 = vmatpush1.msra.mxu0 %v668
    %3112 = vmatprep.subr.mxu0 %v673
    %3113 = vmatpush1.msra.mxu0 %v672
    %3114 = vmatprep.subr.mxu0 %v677
    %3115 = vmatpush1.msra.mxu0 %v676
    %3116 = vmatprep.subr.mxu0 %v681
    %3117 = vmatpush1.msra.mxu0 %v680
    %3118 = vmatprep.subr.mxu0 %v685
    %3119 = vmatpush1.msra.mxu0 %v684
    %3120 = vmatprep.subr.mxu0 %v689
    %3121 = vmatpush1.msra.mxu0 %v688
    %3122 = vmatprep.subr.mxu0 %v693
    %3123 = vmatpush1.msra.mxu0 %v692
    %3124 = vmatprep.subr.mxu0 %v697
    %3125 = vmatpush1.msra.mxu0 %v696
    %3126 = vmatprep.subr.mxu0 %v701
    %3127 = vmatpush1.msra.mxu0 %v700
    %3128 = vmatprep.subr.mxu0 %v705
    %3129 = vmatpush1.msra.mxu0 %v704
    %3130 = vmatprep.mubr.f32.mxu0 %v2828
    %3131 = vmatmul.mubr.f32.gmra.mrb[0].mxu0 %v2994
    %v3132 = vpop.f32.mrb[0].mxu0
    %v3133 = vadd.f32 %v355, %v3132
    %v3134 = vpop.f32.mrb[0].mxu0
    %v3135 = vadd.f32 %v359, %v3134
    %3136 = vdwg.mxu0
    %v3137 = vxor.u32 %v3062, 2147483648
    %v3138 = vxor.u32 %v3064, 2147483648
    %v3139 = vmul.f32 %v3137, 1.442695
    %v3140 = vpow.pop %v3139
    %v3141 = vmul.f32 %v3138, 1.442695
    %v3142 = vpow.pop %v3141
    %v3143 = vadd.f32 %v3140, 1.0
    %v3144 = vadd.f32 %v3142, 1.0
    %v3145 = vrcp.pop %v3143
    %v3146 = vmul.f32 1.0, %v3145
    %v3147 = vrcp.pop %v3144
    %v3148 = vmul.f32 1.0, %v3147
    %v3149 = vmul.f32 %v3146, %v3135
    %v3150 = vadd.f32 %v3133, %v3149
    %v3151 = vtanh.pop %v3150
    %v3152 = vsub.f32 1.0, %v3148
    %v3153 = vmul.f32 %v3152, %v3151
    %v3154 = vmul.f32 %v3148, %v2828
    %v3155 = vadd.f32 %v3153, %v3154
    %v3156 = vld [vmem:[#allocation3 + $0x620] sm:$0xff]
    %v3157 = vld [vmem:[#allocation3 + $0x640] sm:$0xff]
    %v3158 = vld [vmem:[#allocation3 + $0x660] sm:$0xff]
    %v3159 = vld [vmem:[#allocation3 + $0x680] sm:$0xff]
    %v3160 = vld [vmem:[#allocation3 + $0x6a0] sm:$0xff]
    %v3161 = vld [vmem:[#allocation3 + $0x6c0] sm:$0xff]
    %v3162 = vld [vmem:[#allocation3 + $0x6e0] sm:$0xff]
    %v3163 = vld [vmem:[#allocation3 + $0x700] sm:$0xff]
    %v3164 = vld [vmem:[#allocation3 + $0x720] sm:$0xff]
    %v3165 = vld [vmem:[#allocation3 + $0x740] sm:$0xff]
    %v3166 = vld [vmem:[#allocation3 + $0x760] sm:$0xff]
    %v3167 = vld [vmem:[#allocation3 + $0x780] sm:$0xff]
    %v3168 = vld [vmem:[#allocation3 + $0x7a0] sm:$0xff]
    %v3169 = vld [vmem:[#allocation3 + $0x7c0] sm:$0xff]
    %v3170 = vld [vmem:[#allocation3 + $0x7e0] sm:$0xff]
    %v3171 = vld [vmem:[#allocation3 + $0x800] sm:$0xff]
    %v3172 = vld [vmem:[#allocation5 + $0x8] sm:$0x1]
    %v3174 = vlaneseq
    %v3175 = vshrl.u32 %v3174, 7
    %v3176 = vsub.s32 0, %v3175
    %v3177 = vrot.slane %v3172, %v3176
    %3179 = vmatprep.subr.mxu0 0.0
    %3180 = vmatpush1.msra.mxu0 %v3156
    %3181 = vmatprep.subr.mxu0 0.0
    %3182 = vmatpush1.msra.mxu0 %v3157
    %3183 = vmatprep.subr.mxu0 0.0
    %3184 = vmatpush1.msra.mxu0 %v3158
    %3185 = vmatprep.subr.mxu0 0.0
    %3186 = vmatpush1.msra.mxu0 %v3159
    %3187 = vmatprep.subr.mxu0 0.0
    %3188 = vmatpush1.msra.mxu0 %v3160
    %3189 = vmatprep.subr.mxu0 0.0
    %3190 = vmatpush1.msra.mxu0 %v3161
    %3191 = vmatprep.subr.mxu0 0.0
    %3192 = vmatpush1.msra.mxu0 %v3162
    %3193 = vmatprep.subr.mxu0 0.0
    %3194 = vmatpush1.msra.mxu0 %v3163
    %3195 = vmatprep.subr.mxu0 0.0
    %3196 = vmatpush1.msra.mxu0 %v3164
    %3197 = vmatprep.subr.mxu0 0.0
    %3198 = vmatpush1.msra.mxu0 %v3165
    %3199 = vmatprep.subr.mxu0 0.0
    %3200 = vmatpush1.msra.mxu0 %v3166
    %3201 = vmatprep.subr.mxu0 0.0
    %3202 = vmatpush1.msra.mxu0 %v3167
    %3203 = vmatprep.subr.mxu0 0.0
    %3204 = vmatpush1.msra.mxu0 %v3168
    %3205 = vmatprep.subr.mxu0 0.0
    %3206 = vmatpush1.msra.mxu0 %v3169
    %3207 = vmatprep.subr.mxu0 0.0
    %3208 = vmatpush1.msra.mxu0 %v3170
    %3209 = vmatprep.subr.mxu0 0.0
    %3210 = vmatpush1.msra.mxu0 %v3171
    %3211 = vmatprep.subr.mxu0 0.0
    %3212 = vmatpush1.msra.mxu0 0.0
    %3213 = vmatprep.subr.mxu0 0.0
    %3214 = vmatpush1.msra.mxu0 0.0
    %3215 = vmatprep.subr.mxu0 0.0
    %3216 = vmatpush1.msra.mxu0 0.0
    %3217 = vmatprep.subr.mxu0 0.0
    %3218 = vmatpush1.msra.mxu0 0.0
    %3219 = vmatprep.subr.mxu0 0.0
    %3220 = vmatpush1.msra.mxu0 0.0
    %3221 = vmatprep.subr.mxu0 0.0
    %3222 = vmatpush1.msra.mxu0 0.0
    %3223 = vmatprep.subr.mxu0 0.0
    %3224 = vmatpush1.msra.mxu0 0.0
    %3225 = vmatprep.subr.mxu0 0.0
    %3226 = vmatpush1.msra.mxu0 0.0
    %3227 = vmatprep.subr.mxu0 0.0
    %3228 = vmatpush1.msra.mxu0 0.0
    %3229 = vmatprep.subr.mxu0 0.0
    %3230 = vmatpush1.msra.mxu0 0.0
    %3231 = vmatprep.subr.mxu0 0.0
    %3232 = vmatpush1.msra.mxu0 0.0
    %3233 = vmatprep.subr.mxu0 0.0
    %3234 = vmatpush1.msra.mxu0 0.0
    %3235 = vmatprep.subr.mxu0 0.0
    %3236 = vmatpush1.msra.mxu0 0.0
    %3237 = vmatprep.subr.mxu0 0.0
    %3238 = vmatpush1.msra.mxu0 0.0
    %3239 = vmatprep.subr.mxu0 0.0
    %3240 = vmatpush1.msra.mxu0 0.0
    %3241 = vmatprep.subr.mxu0 0.0
    %3242 = vmatpush1.msra.mxu0 0.0
    %3243 = vmatprep.mubr.f32.mxu0 0.0
    %3244 = vmatmul.mubr.f32.gmra.mrb[0].mxu0 %v3155
    %v3245 = vpop.f32.mrb[0].mxu0
    %v3246 = vadd.f32 %v3177, %v3245
    %v3247 = vpop.f32.mrb[0].mxu0
    %3248 = vdwg.mxu0
    %3249 = vst [vmem:[%s3] sm:$0xff] %v3246
    // Predicated region
    $region22: #{gru_backbone.1} parent=1 // pred_check
      _
    $region23: #{gru_backbone.1} parent=1 // pred_check_branch
      %3251 = sbr.rel (0) target = $region25
    $region24: #{gru_backbone.1} parent=1 // pred_region
      _
    $region25: #{gru_backbone.1} parent=1 // pred_fallthru
      _
    // Predicated region
    $region26: #{gru_backbone.1} parent=1 // pred_check
      _
    $region27: #{gru_backbone.1} parent=1 // pred_check_branch
      %3253 = sbr.rel (0) target = $region29
    $region28: #{gru_backbone.1} parent=1 // pred_region
      _
    $region29: #{gru_backbone.1} parent=1 // pred_fallthru
      _
    %3254 = vsyncpa [#allocation4], 1
    %3255 = vsyncpa [#allocation6], 1

</llo_original>
